<compile_context>
chip_gen: v7x
topology: tpu7x:2x2x1
jax: 0.10.0
libtpu: 0.0.40
codegen_flags: <defaults>
</compile_context>

<pallas_src>
import jax
import jax.numpy as jnp
from jax.experimental import pallas as pl
from jax.experimental.pallas import tpu as pltpu


# ----------------------------------------------------------------------------
# Pallas kernel: fused 3-layer MLP  (Linear -> ReLU -> Linear -> ReLU -> Linear)
# ----------------------------------------------------------------------------
def _make_mlp_kernel(lane_dense, tile_m):
    def kernel(pts_ref, feat_ref, w1p_ref, w1f_ref, b1_ref,
               w2_ref, b2_ref, w3_ref, b3_ref, o_ref):
        # Layer 1: split K = (3 + C) into a lane-aligned K=C feature matmul
        # plus a tiny K=3 points matmul (no concatenated activation needed).
        h = jnp.dot(feat_ref[...], w1f_ref[...],
                    preferred_element_type=jnp.float32)
        h = h + jnp.dot(pts_ref[...], w1p_ref[...],
                        preferred_element_type=jnp.float32)
        h = h + b1_ref[...]
        h = jnp.maximum(h, 0.0)                      # f32 elementwise (v5e-safe)

        # Layer 2: bf16 only at the dot inputs, f32 accumulate / bias / ReLU.
        h = jnp.dot(h.astype(jnp.bfloat16), w2_ref[...],
                    preferred_element_type=jnp.float32) + b2_ref[...]
        h = jnp.maximum(h, 0.0)

        if lane_dense:
            # Final layer for Dout == 1, produced directly in a lane-dense
            # (tile_m//128, 128) layout: w3 arrives transposed as (1, Hd);
            # out[r, l] = sum_k h[128*r + l, k] * w3[k].  This is a
            # tile-preserving leading-dim split + VPU multiply + lane reduce,
            # so the store is full unmasked 128-lane vst (no masked 1-lane
            # stores / micro writeback DMAs).
            w3v = w3_ref[...].astype(jnp.float32)                 # (1, Hd)
            h3 = h.reshape(tile_m // 128, 128, h.shape[-1])       # (R,128,Hd)
            o = jnp.sum(h3 * w3v[None, :, :], axis=-1) + b3_ref[0, 0]
            o_ref[...] = o.astype(o_ref.dtype)
        else:
            o = jnp.dot(h.astype(jnp.bfloat16), w3_ref[...],
                        preferred_element_type=jnp.float32) + b3_ref[...]
            o_ref[...] = o.astype(o_ref.dtype)

    return kernel


def mlp_pallas(pts, feat, params, tile_m=1024):
    """pts: [M, 3] f32, feat: [M, C] f32 -> [M, Dout] f32 (fused Pallas MLP)."""
    w1, b1, w2, b2, w3, b3 = params          # w1: [3 + C, Hd] (points rows first)
    M, C = feat.shape
    assert pts.shape == (M, 3)
    Hd = w1.shape[1]
    Dout = w3.shape[1]

    lane_dense = (Dout == 1) and (tile_m % 1024 == 0)

    # Pad rows to a multiple of the row tile.
    Mp = ((M + tile_m - 1) // tile_m) * tile_m
    if Mp != M:
        pad = Mp - M
        pts = jnp.pad(pts, ((0, pad), (0, 0)))
        feat = jnp.pad(feat, ((0, pad), (0, 0)))
    num_tiles = Mp // tile_m

    # bf16 matmul operands (MXU-native); biases stay f32.
    pts_b = pts.astype(jnp.bfloat16)
    feat_b = feat.astype(jnp.bfloat16)
    w1p = w1[:3, :].astype(jnp.bfloat16)     # points part of W1
    w1f = w1[3:, :].astype(jnp.bfloat16)     # feature part of W1
    w2b = w2.astype(jnp.bfloat16)

    if lane_dense:
        w3in = jnp.transpose(w3).astype(jnp.bfloat16)            # (1, Hd)
        w3_spec = pl.BlockSpec((1, Hd), lambda i: (0, 0))
        orows = tile_m // 128
        out_shape = jax.ShapeDtypeStruct((num_tiles * orows, 128), jnp.float32)
        out_spec = pl.BlockSpec((orows, 128), lambda i: (i, 0))
    else:
        w3in = w3.astype(jnp.bfloat16)                           # (Hd, Dout)
        w3_spec = pl.BlockSpec((Hd, Dout), lambda i: (0, 0))
        out_shape = jax.ShapeDtypeStruct((Mp, Dout), jnp.float32)
        out_spec = pl.BlockSpec((tile_m, Dout), lambda i: (i, 0))

    kernel = _make_mlp_kernel(lane_dense, tile_m)

    out = pl.pallas_call(
        kernel,
        out_shape=out_shape,
        grid_spec=pltpu.PrefetchScalarGridSpec(
            num_scalar_prefetch=0,
            grid=(num_tiles,),
            in_specs=[
                pl.BlockSpec((tile_m, 3), lambda i: (i, 0)),   # points
                pl.BlockSpec((tile_m, C), lambda i: (i, 0)),   # sampled features
                pl.BlockSpec((3, Hd), lambda i: (0, 0)),       # W1 (points rows)
                pl.BlockSpec((C, Hd), lambda i: (0, 0)),       # W1 (feature rows)
                pl.BlockSpec((1, Hd), lambda i: (0, 0)),       # b1 (f32)
                pl.BlockSpec((Hd, Hd), lambda i: (0, 0)),      # W2
                pl.BlockSpec((1, Hd), lambda i: (0, 0)),       # b2 (f32)
                w3_spec,                                        # W3 (maybe transposed)
                pl.BlockSpec((1, Dout), lambda i: (0, 0)),     # b3 (f32)
            ],
            out_specs=out_spec,
        ),
        compiler_params=pltpu.CompilerParams(
            dimension_semantics=("parallel",),        # shard M-grid across TCs (v7x)
            vmem_limit_bytes=32 * 1024 * 1024),       # ~4 MiB used; safe on v5e/v6e/v7x
    )(pts_b, feat_b, w1p, w1f, b1, w2b, b2, w3in, b3)

    if lane_dense:
        out = out.reshape(Mp, 1)
    return out[:M]


# ----------------------------------------------------------------------------
# JAX glue: F.grid_sample (5-D input, trilinear, align_corners=True, border)
# ----------------------------------------------------------------------------
def _grid_sample_3d_border_align(features, coords):
    """features: [B, C, D, H, W]; coords: [B, N, 3] with (x->W, y->H, z->D).
    Returns [B, N, C] (channel-last), matching torch.nn.functional.grid_sample
    with mode='bilinear', align_corners=True, padding_mode='border'."""
    B, C, D, H, W = features.shape
    x = coords[..., 0]
    y = coords[..., 1]
    z = coords[..., 2]

    # align_corners=True un-normalization + border clamping of the coordinate
    ix = jnp.clip((x + 1.0) * 0.5 * (W - 1), 0.0, W - 1)
    iy = jnp.clip((y + 1.0) * 0.5 * (H - 1), 0.0, H - 1)
    iz = jnp.clip((z + 1.0) * 0.5 * (D - 1), 0.0, D - 1)

    ix0f = jnp.floor(ix); iy0f = jnp.floor(iy); iz0f = jnp.floor(iz)
    wx1 = ix - ix0f; wx0 = 1.0 - wx1
    wy1 = iy - iy0f; wy0 = 1.0 - wy1
    wz1 = iz - iz0f; wz0 = 1.0 - wz1

    ix0 = jnp.clip(ix0f, 0, W - 1).astype(jnp.int32)
    ix1 = jnp.clip(ix0f + 1, 0, W - 1).astype(jnp.int32)
    iy0 = jnp.clip(iy0f, 0, H - 1).astype(jnp.int32)
    iy1 = jnp.clip(iy0f + 1, 0, H - 1).astype(jnp.int32)
    iz0 = jnp.clip(iz0f, 0, D - 1).astype(jnp.int32)
    iz1 = jnp.clip(iz0f + 1, 0, D - 1).astype(jnp.int32)

    # Channel-last flattened volume -> gathers land directly in [B, N, C]
    # (no trailing [B,C,N] -> [B,N,C] permute of the sampled features).
    feat_flat = jnp.transpose(features, (0, 2, 3, 4, 1)).reshape(B, D * H * W, C)

    def gather(zi, yi, xi):
        idx = (zi * H + yi) * W + xi                            # [B, N]
        return jnp.take_along_axis(feat_flat, idx[..., None], axis=1)  # [B, N, C]

    def w_(a, b, c):
        return (a * b * c)[..., None]                           # [B, N, 1]

    out = (gather(iz0, iy0, ix0) * w_(wz0, wy0, wx0)
           + gather(iz0, iy0, ix1) * w_(wz0, wy0, wx1)
           + gather(iz0, iy1, ix0) * w_(wz0, wy1, wx0)
           + gather(iz0, iy1, ix1) * w_(wz0, wy1, wx1)
           + gather(iz1, iy0, ix0) * w_(wz1, wy0, wx0)
           + gather(iz1, iy0, ix1) * w_(wz1, wy0, wx1)
           + gather(iz1, iy1, ix0) * w_(wz1, wy1, wx0)
           + gather(iz1, iy1, ix1) * w_(wz1, wy1, wx1))
    return out


# ----------------------------------------------------------------------------
# Module wrapper
# ----------------------------------------------------------------------------
class ImplicitFieldPallas:
    """JAX/Pallas port of ImplicitField. Only num_layers=3 (the default) is
    supported by the fused kernel."""

    def __init__(self, input_dim=256, hidden_dim=128, output_dim=1,
                 num_layers=3, key=None, tile_m=1024):
        assert num_layers == 3, "fused kernel implements the default 3-layer MLP"
        self.input_dim = input_dim
        self.grid_size = 32
        self.chunk_size = 8192   # kept for API parity; the kernel runs one grid
        self.tile_m = tile_m
        if key is None:
            key = jax.random.PRNGKey(0)

        def linear_init(k, fan_in, fan_out):
            kw, kb = jax.random.split(k)
            bound = 1.0 / jnp.sqrt(fan_in)
            # stored as [in, out] (transpose of PyTorch's [out, in])
            w = jax.random.uniform(kw, (fan_in, fan_out), jnp.float32, -bound, bound)
            b = jax.random.uniform(kb, (1, fan_out), jnp.float32, -bound, bound)
            return w, b

        k1, k2, k3 = jax.random.split(key, 3)
        w1, b1 = linear_init(k1, input_dim + 3, hidden_dim)   # rows: [points(3); features(C)]
        w2, b2 = linear_init(k2, hidden_dim, hidden_dim)
        w3, b3 = linear_init(k3, hidden_dim, output_dim)
        self.params = (w1, b1, w2, b2, w3, b3)

    def _create_grid_points(self, batch_size):
        lin = jnp.linspace(-1.0, 1.0, self.grid_size)
        xx, yy, zz = jnp.meshgrid(lin, lin, lin, indexing="ij")
        pts = jnp.stack([xx, yy, zz], axis=-1).reshape(-1, 3)
        return jnp.broadcast_to(pts[None], (batch_size,) + pts.shape)

    def _sample_features(self, features, points):
        grid_points = (points + 1.0) / 2.0      # same (questionable) remap as PyTorch
        return _grid_sample_3d_border_align(features, grid_points)   # [B, N, C]

    def __call__(self, features, points=None):
        B = features.shape[0]
        if features.ndim == 4:
            C, H, W = features.shape[1:]
            D = H
            features = jnp.broadcast_to(features[:, :, None, :, :], (B, C, D, H, W))
        if points is None:
            points = self._create_grid_points(B)
        # TODO(synk): the PyTorch requires_grad assertions have no JAX equivalent.

        # One grid_sample + ONE pallas_call over all points (the PyTorch chunk
        # loop exists only to bound memory; the math is identical).
        point_features = self._sample_features(features, points)     # [B, N, C]
        Bn, N, C = point_features.shape
        flat_pts = points.reshape(Bn * N, 3)
        flat_feat = point_features.reshape(Bn * N, C)
        dens = mlp_pallas(flat_pts, flat_feat, self.params, tile_m=self.tile_m)
        densities = dens.reshape(Bn, N, -1)
        return points, densities


# Pure-JAX reference of the MLP (mirrors the kernel's bf16 operand rounding).
def _mlp_ref_bf16(pts, feat, params):
    w1, b1, w2, b2, w3, b3 = params
    f32 = jnp.float32
    bf = lambda a: a.astype(jnp.bfloat16).astype(f32)
    h = bf(feat) @ bf(w1[3:]) + bf(pts) @ bf(w1[:3]) + b1
    h = jnp.maximum(h, 0.0)
    h = bf(h) @ bf(w2) + b2
    h = jnp.maximum(h, 0.0)
    return h @ bf(w3) + b3


if __name__ == "__main__":
    key = jax.random.PRNGKey(0)
    kf, kp, kw = jax.random.split(key, 3)

    # Small shapes: input_dim must equal the feature channel count C.
    B, C, H, W = 2, 4, 16, 16
    N = 512
    hidden_dim, output_dim = 32, 1

    features = jax.random.normal(kf, (B, C, H, W), jnp.float32)
    points = jax.random.uniform(kp, (B, N, 3), jnp.float32, minval=-1.0, maxval=1.0)

    model = ImplicitFieldPallas(input_dim=C, hidden_dim=hidden_dim,
                                output_dim=output_dim, num_layers=3, key=kw)

    pts_out, densities = model(features, points)
    jax.block_until_ready(densities)
    assert pts_out.shape == (B, N, 3)
    assert densities.shape == (B, N, output_dim)

    # Verify the Pallas MLP against a pure-JAX reference on the same inputs.
    feats5d = jnp.broadcast_to(features[:, :, None, :, :], (B, C, H, H, W))
    pf = model._sample_features(feats5d, points)                  # [B, N, C]
    ref = _mlp_ref_bf16(points.reshape(B * N, 3), pf.reshape(B * N, C),
                        model.params).reshape(B, N, output_dim)
    err = jnp.max(jnp.abs(ref - densities))
    assert err < 1e-2, f"max abs error {err}"
    assert bool(jnp.all(jnp.isfinite(densities)))

    print("KERNEL_OK")
</pallas_src>

<mosaic_0001>
module attributes {stable_mosaic.version = 11 : i64} {
  func.func @kernel(%arg0: i32, %arg1: memref<1024x3xbf16, #tpu.memory_space<vmem>>, %arg2: memref<1024x4xbf16, #tpu.memory_space<vmem>>, %arg3: memref<3x32xbf16, #tpu.memory_space<vmem>>, %arg4: memref<4x32xbf16, #tpu.memory_space<vmem>>, %arg5: memref<1x32xf32, #tpu.memory_space<vmem>>, %arg6: memref<32x32xbf16, #tpu.memory_space<vmem>>, %arg7: memref<1x32xf32, #tpu.memory_space<vmem>>, %arg8: memref<1x32xbf16, #tpu.memory_space<vmem>>, %arg9: memref<1x1xf32, #tpu.memory_space<vmem>>, %arg10: memref<8x128xf32, #tpu.memory_space<vmem>>) attributes {dimension_semantics = [#tpu.dimension_semantics<parallel>], iteration_bounds = array<i64: 1>, scalar_prefetch = 0 : i64, scratch_operands = 0 : i64, tpu.core_type = #tpu.core_type<tc>, window_params = [{transform_indices = @transform_0, window_bounds = array<i64: 1024, 3>}, {transform_indices = @transform_1, window_bounds = array<i64: 1024, 4>}, {pipeline_mode = #tpu.pipeline_mode<synchronous>, transform_indices = @transform_2, window_bounds = array<i64: 3, 32>}, {pipeline_mode = #tpu.pipeline_mode<synchronous>, transform_indices = @transform_3, window_bounds = array<i64: 4, 32>}, {pipeline_mode = #tpu.pipeline_mode<synchronous>, transform_indices = @transform_4, window_bounds = array<i64: 1, 32>}, {pipeline_mode = #tpu.pipeline_mode<synchronous>, transform_indices = @transform_5, window_bounds = array<i64: 32, 32>}, {pipeline_mode = #tpu.pipeline_mode<synchronous>, transform_indices = @transform_6, window_bounds = array<i64: 1, 32>}, {pipeline_mode = #tpu.pipeline_mode<synchronous>, transform_indices = @transform_7, window_bounds = array<i64: 1, 32>}, {pipeline_mode = #tpu.pipeline_mode<synchronous>, transform_indices = @transform_8, window_bounds = array<i64: 1, 1>}, {transform_indices = @transform_9, window_bounds = array<i64: 8, 128>}]} {
    %c0 = arith.constant 0 : index
    %c0_0 = arith.constant 0 : index
    %0 = vector.load %arg2[%c0, %c0_0] : memref<1024x4xbf16, #tpu.memory_space<vmem>>, vector<1024x4xbf16>
    %c0_1 = arith.constant 0 : index
    %c0_2 = arith.constant 0 : index
    %1 = vector.load %arg4[%c0_1, %c0_2] : memref<4x32xbf16, #tpu.memory_space<vmem>>, vector<4x32xbf16>
    %cst = arith.constant dense<0.000000e+00> : vector<1024x32xf32>
    %2 = tpu.matmul %0, %1, %cst {dimension_numbers = #tpu.dot_dimension_numbers<[1], [0], [0], [1], [0, 0, 1, 1], [], []>} : vector<1024x4xbf16>, vector<4x32xbf16>, vector<1024x32xf32> -> vector<1024x32xf32>
    %c0_3 = arith.constant 0 : index
    %c0_4 = arith.constant 0 : index
    %3 = vector.load %arg1[%c0_3, %c0_4] : memref<1024x3xbf16, #tpu.memory_space<vmem>>, vector<1024x3xbf16>
    %c0_5 = arith.constant 0 : index
    %c0_6 = arith.constant 0 : index
    %4 = vector.load %arg3[%c0_5, %c0_6] : memref<3x32xbf16, #tpu.memory_space<vmem>>, vector<3x32xbf16>
    %cst_7 = arith.constant dense<0.000000e+00> : vector<1024x32xf32>
    %5 = tpu.matmul %3, %4, %cst_7 {dimension_numbers = #tpu.dot_dimension_numbers<[1], [0], [0], [1], [0, 0, 1, 1], [], []>} : vector<1024x3xbf16>, vector<3x32xbf16>, vector<1024x32xf32> -> vector<1024x32xf32>
    %6 = arith.addf %2, %5 : vector<1024x32xf32>
    %c0_8 = arith.constant 0 : index
    %c0_9 = arith.constant 0 : index
    %7 = vector.load %arg5[%c0_8, %c0_9] : memref<1x32xf32, #tpu.memory_space<vmem>>, vector<1x32xf32>
    %8 = vector.broadcast %7 : vector<1x32xf32> to vector<1024x32xf32>
    %9 = arith.addf %6, %8 : vector<1024x32xf32>
    %cst_10 = arith.constant 0.000000e+00 : f32
    %10 = vector.broadcast %cst_10 : f32 to vector<1024x32xf32>
    %11 = arith.maximumf %9, %10 : vector<1024x32xf32>
    %12 = arith.truncf %11 : vector<1024x32xf32> to vector<1024x32xbf16>
    %c0_11 = arith.constant 0 : index
    %c0_12 = arith.constant 0 : index
    %13 = vector.load %arg6[%c0_11, %c0_12] : memref<32x32xbf16, #tpu.memory_space<vmem>>, vector<32x32xbf16>
    %cst_13 = arith.constant dense<0.000000e+00> : vector<1024x32xf32>
    %14 = tpu.matmul %12, %13, %cst_13 {dimension_numbers = #tpu.dot_dimension_numbers<[1], [0], [0], [1], [0, 0, 1, 1], [], []>} : vector<1024x32xbf16>, vector<32x32xbf16>, vector<1024x32xf32> -> vector<1024x32xf32>
    %c0_14 = arith.constant 0 : index
    %c0_15 = arith.constant 0 : index
    %15 = vector.load %arg7[%c0_14, %c0_15] : memref<1x32xf32, #tpu.memory_space<vmem>>, vector<1x32xf32>
    %16 = vector.broadcast %15 : vector<1x32xf32> to vector<1024x32xf32>
    %17 = arith.addf %14, %16 : vector<1024x32xf32>
    %cst_16 = arith.constant 0.000000e+00 : f32
    %18 = vector.broadcast %cst_16 : f32 to vector<1024x32xf32>
    %19 = arith.maximumf %17, %18 : vector<1024x32xf32>
    %c0_17 = arith.constant 0 : index
    %c0_18 = arith.constant 0 : index
    %20 = vector.load %arg8[%c0_17, %c0_18] : memref<1x32xbf16, #tpu.memory_space<vmem>>, vector<1x32xbf16>
    %21 = arith.extf %20 : vector<1x32xbf16> to vector<1x32xf32>
    %22 = vector.shape_cast %19 : vector<1024x32xf32> to vector<8x128x32xf32>
    %23 = vector.shape_cast %21 : vector<1x32xf32> to vector<1x1x32xf32>
    %24 = vector.broadcast %23 : vector<1x1x32xf32> to vector<8x128x32xf32>
    %25 = arith.mulf %22, %24 : vector<8x128x32xf32>
    %cst_19 = arith.constant dense<0.000000e+00> : vector<8x128xf32>
    %26 = vector.multi_reduction <add>, %25, %cst_19 [2] : vector<8x128x32xf32> to vector<8x128xf32>
    %c0_20 = arith.constant 0 : index
    %c0_21 = arith.constant 0 : index
    %27 = vector.load %arg9[%c0_20, %c0_21] : memref<1x1xf32, #tpu.memory_space<vmem>>, vector<1x1xf32>
    %28 = vector.extract %27[0, 0] : f32 from vector<1x1xf32>
    %29 = vector.broadcast %28 : f32 to vector<8x128xf32>
    %30 = arith.addf %26, %29 : vector<8x128xf32>
    %c0_22 = arith.constant 0 : index
    %c0_23 = arith.constant 0 : index
    %31 = vector.load %arg10[%c0_22, %c0_23] : memref<8x128xf32, #tpu.memory_space<vmem>>, vector<8x128xf32>
    tpu.vector_store %arg10[%c0_22, %c0_23], %30 {strides = array<i32>} : memref<8x128xf32, #tpu.memory_space<vmem>>, vector<8x128xf32>,
    return
  }
  func.func @transform_0(%arg0: i32) -> (i32, i32) {
    %c0_i32 = arith.constant 0 : i32
    %c0_i32_0 = arith.constant 0 : i32
    return %arg0, %c0_i32 : i32, i32
  }
  func.func @transform_1(%arg0: i32) -> (i32, i32) {
    %c0_i32 = arith.constant 0 : i32
    %c0_i32_0 = arith.constant 0 : i32
    return %arg0, %c0_i32 : i32, i32
  }
  func.func @transform_2(%arg0: i32) -> (i32, i32) {
    %c0_i32 = arith.constant 0 : i32
    %c0_i32_0 = arith.constant 0 : i32
    %c0_i32_1 = arith.constant 0 : i32
    return %c0_i32, %c0_i32_0 : i32, i32
  }
  func.func @transform_3(%arg0: i32) -> (i32, i32) {
    %c0_i32 = arith.constant 0 : i32
    %c0_i32_0 = arith.constant 0 : i32
    %c0_i32_1 = arith.constant 0 : i32
    return %c0_i32, %c0_i32_0 : i32, i32
  }
  func.func @transform_4(%arg0: i32) -> (i32, i32) {
    %c0_i32 = arith.constant 0 : i32
    %c0_i32_0 = arith.constant 0 : i32
    %c0_i32_1 = arith.constant 0 : i32
    return %c0_i32, %c0_i32_0 : i32, i32
  }
  func.func @transform_5(%arg0: i32) -> (i32, i32) {
    %c0_i32 = arith.constant 0 : i32
    %c0_i32_0 = arith.constant 0 : i32
    %c0_i32_1 = arith.constant 0 : i32
    return %c0_i32, %c0_i32_0 : i32, i32
  }
  func.func @transform_6(%arg0: i32) -> (i32, i32) {
    %c0_i32 = arith.constant 0 : i32
    %c0_i32_0 = arith.constant 0 : i32
    %c0_i32_1 = arith.constant 0 : i32
    return %c0_i32, %c0_i32_0 : i32, i32
  }
  func.func @transform_7(%arg0: i32) -> (i32, i32) {
    %c0_i32 = arith.constant 0 : i32
    %c0_i32_0 = arith.constant 0 : i32
    %c0_i32_1 = arith.constant 0 : i32
    return %c0_i32, %c0_i32_0 : i32, i32
  }
  func.func @transform_8(%arg0: i32) -> (i32, i32) {
    %c0_i32 = arith.constant 0 : i32
    %c0_i32_0 = arith.constant 0 : i32
    %c0_i32_1 = arith.constant 0 : i32
    return %c0_i32, %c0_i32_0 : i32, i32
  }
  func.func @transform_9(%arg0: i32) -> (i32, i32) {
    %c0_i32 = arith.constant 0 : i32
    %c0_i32_0 = arith.constant 0 : i32
    return %arg0, %c0_i32 : i32, i32
  }
}

</mosaic_0001>

<llo_original>
// kernel: tpu_custom_call.1
$region0: #{tpu_custom_call.1}
  #allocation0 [shape = 'u32[]', space=smem, size = 0x4, offset = 0x4, fixed_abs, tag = 'smem constant byte address 0x4 - core index']
  #allocation1 [shape = 'u32[144,128]{1,0:T(1,128)}', space=vmem, size = 0x12000, scoped, tag = 'internal scratch']
  #allocation2 [shape = 'f32[1,1]{1,0:T(1,128)S(1)}', space=vmem, size = 0x200, scoped, tag = 'scoped memory for tpu_custom_call.1']
  %s0 = inlined_call_operand.vmem [shape: bf16[1024,3], index: 0, kind: input, shape index: {}]
  %s1 = inlined_call_operand.vmem [shape: bf16[1024,4], index: 1, kind: input, shape index: {}]
  %s2 = inlined_call_operand.vmem [shape: bf16[3,32], index: 2, kind: input, shape index: {}]
  %s3 = inlined_call_operand.vmem [shape: bf16[4,32], index: 3, kind: input, shape index: {}]
  %s4 = inlined_call_operand.vmem [shape: f32[1,32], index: 4, kind: input, shape index: {}]
  %s5 = inlined_call_operand.vmem [shape: bf16[32,32], index: 5, kind: input, shape index: {}]
  %s6 = inlined_call_operand.vmem [shape: f32[1,32], index: 6, kind: input, shape index: {}]
  %s7 = inlined_call_operand.vmem [shape: bf16[1,32], index: 7, kind: input, shape index: {}]
  %s8 = inlined_call_operand.<no memory space> [shape: f32[1,1], index: 8, kind: input, shape index: {}]
  %s9 = inlined_call_operand.hbm [shape: f32[8,128], index: 9, kind: output, shape index: {}]
  %s10 = sld [smem:[#allocation0]]
  $region46: #{tpu_custom_call.1} parent=0
    _
  %s12 = ssub.s32 1, %s10
  %s13 = scalar_select 0, %s12, %s10
  %v14 = vstv %s8
  %15 = vst [vmem:[#allocation2] sm:$0x1] %v14
  $region1: #{tpu_custom_call.1} parent=0
    #allocation3 [shape = 'u8[4096]{0}', space=vmem, size = 0x1000, scoped, tag = 'output window, operand 0, single buffered']
    #allocation4 [shape = 's32[1]{0}', space=sflag, size = 0x4, scoped, tag = 'scoped memory for tpu_custom_call.1']
    %16 = vsyncpa [#allocation4], 0
    // Predicated region
    $region2: #{tpu_custom_call.1} parent=1 // pred_check
      _
    $region3: #{tpu_custom_call.1} parent=1 // pred_check_branch
      %18 = sbr.rel (0) target = $region5
    $region4: #{tpu_custom_call.1} parent=1 // pred_region
      _
    $region5: #{tpu_custom_call.1} parent=1 // pred_fallthru
      _
    // Predicated region
    $region6: #{tpu_custom_call.1} parent=1 // pred_check
      _
    $region7: #{tpu_custom_call.1} parent=1 // pred_check_branch
      %20 = sbr.rel (0) target = $region9
    $region8: #{tpu_custom_call.1} parent=1 // pred_region
      _
    $region9: #{tpu_custom_call.1} parent=1 // pred_fallthru
      _
    // Predicated region
    $region10: #{tpu_custom_call.1} parent=1 // pred_check
      _
    $region11: #{tpu_custom_call.1} parent=1 // pred_check_branch
      %22 = sbr.rel (0) target = $region13
    $region12: #{tpu_custom_call.1} parent=1 // pred_region
      _
    $region13: #{tpu_custom_call.1} parent=1 // pred_fallthru
      _
    // Predicated region
    $region14: #{tpu_custom_call.1} parent=1 // pred_check
      _
    $region15: #{tpu_custom_call.1} parent=1 // pred_check_branch
      %24 = sbr.rel (0) target = $region17
    $region16: #{tpu_custom_call.1} parent=1 // pred_region
      _
    $region17: #{tpu_custom_call.1} parent=1 // pred_fallthru
      _
    // Predicated region
    $region18: #{tpu_custom_call.1} parent=1 // pred_check
      _
    $region19: #{tpu_custom_call.1} parent=1 // pred_check_branch
      %26 = sbr.rel (0) target = $region21
    $region20: #{tpu_custom_call.1} parent=1 // pred_region
      _
    $region21: #{tpu_custom_call.1} parent=1 // pred_fallthru
      _
    // Predicated region
    $region22: #{tpu_custom_call.1} parent=1 // pred_check
      _
    $region23: #{tpu_custom_call.1} parent=1 // pred_check_branch
      %28 = sbr.rel (0) target = $region25
    $region24: #{tpu_custom_call.1} parent=1 // pred_region
      _
    $region25: #{tpu_custom_call.1} parent=1 // pred_fallthru
      _
    // Predicated region
    $region26: #{tpu_custom_call.1} parent=1 // pred_check
      _
    $region27: #{tpu_custom_call.1} parent=1 // pred_check_branch
      %30 = sbr.rel (0) target = $region29
    $region28: #{tpu_custom_call.1} parent=1 // pred_region
      _
    $region29: #{tpu_custom_call.1} parent=1 // pred_fallthru
      _
    // Predicated region
    $region30: #{tpu_custom_call.1} parent=1 // pred_check
      _
    $region31: #{tpu_custom_call.1} parent=1 // pred_check_branch
      %32 = sbr.rel (0) target = $region33
    $region32: #{tpu_custom_call.1} parent=1 // pred_region
      _
    $region33: #{tpu_custom_call.1} parent=1 // pred_fallthru
      _
    // Predicated region
    $region34: #{tpu_custom_call.1} parent=1 // pred_check
      _
    $region35: #{tpu_custom_call.1} parent=1 // pred_check_branch
      %34 = sbr.rel (0) target = $region37
    $region36: #{tpu_custom_call.1} parent=1 // pred_region
      _
    $region37: #{tpu_custom_call.1} parent=1 // pred_fallthru
      _
    %v36 = vld [vmem:[%s1] sm:$0xf]
    %v37 = vld [vmem:[%s1 + $0x4] sm:$0xf]
    %v38 = vld [vmem:[%s1 + $0x8] sm:$0xf]
    %v39 = vld [vmem:[%s1 + $0xc] sm:$0xf]
    %v40 = vld [vmem:[%s1 + $0x10] sm:$0xf]
    %v41 = vld [vmem:[%s1 + $0x14] sm:$0xf]
    %v42 = vld [vmem:[%s1 + $0x18] sm:$0xf]
    %v43 = vld [vmem:[%s1 + $0x1c] sm:$0xf]
    %v44 = vld [vmem:[%s1 + $0x20] sm:$0xf]
    %v45 = vld [vmem:[%s1 + $0x24] sm:$0xf]
    %v46 = vld [vmem:[%s1 + $0x28] sm:$0xf]
    %v47 = vld [vmem:[%s1 + $0x2c] sm:$0xf]
    %v48 = vld [vmem:[%s1 + $0x30] sm:$0xf]
    %v49 = vld [vmem:[%s1 + $0x34] sm:$0xf]
    %v50 = vld [vmem:[%s1 + $0x38] sm:$0xf]
    %v51 = vld [vmem:[%s1 + $0x3c] sm:$0xf]
    %v52 = vld [vmem:[%s1 + $0x40] sm:$0xf]
    %v53 = vld [vmem:[%s1 + $0x44] sm:$0xf]
    %v54 = vld [vmem:[%s1 + $0x48] sm:$0xf]
    %v55 = vld [vmem:[%s1 + $0x4c] sm:$0xf]
    %v56 = vld [vmem:[%s1 + $0x50] sm:$0xf]
    %v57 = vld [vmem:[%s1 + $0x54] sm:$0xf]
    %v58 = vld [vmem:[%s1 + $0x58] sm:$0xf]
    %v59 = vld [vmem:[%s1 + $0x5c] sm:$0xf]
    %v60 = vld [vmem:[%s1 + $0x60] sm:$0xf]
    %v61 = vld [vmem:[%s1 + $0x64] sm:$0xf]
    %v62 = vld [vmem:[%s1 + $0x68] sm:$0xf]
    %v63 = vld [vmem:[%s1 + $0x6c] sm:$0xf]
    %v64 = vld [vmem:[%s1 + $0x70] sm:$0xf]
    %v65 = vld [vmem:[%s1 + $0x74] sm:$0xf]
    %v66 = vld [vmem:[%s1 + $0x78] sm:$0xf]
    %v67 = vld [vmem:[%s1 + $0x7c] sm:$0xf]
    %v68 = vld [vmem:[%s1 + $0x80] sm:$0xf]
    %v69 = vld [vmem:[%s1 + $0x84] sm:$0xf]
    %v70 = vld [vmem:[%s1 + $0x88] sm:$0xf]
    %v71 = vld [vmem:[%s1 + $0x8c] sm:$0xf]
    %v72 = vld [vmem:[%s1 + $0x90] sm:$0xf]
    %v73 = vld [vmem:[%s1 + $0x94] sm:$0xf]
    %v74 = vld [vmem:[%s1 + $0x98] sm:$0xf]
    %v75 = vld [vmem:[%s1 + $0x9c] sm:$0xf]
    %v76 = vld [vmem:[%s1 + $0xa0] sm:$0xf]
    %v77 = vld [vmem:[%s1 + $0xa4] sm:$0xf]
    %v78 = vld [vmem:[%s1 + $0xa8] sm:$0xf]
    %v79 = vld [vmem:[%s1 + $0xac] sm:$0xf]
    %v80 = vld [vmem:[%s1 + $0xb0] sm:$0xf]
    %v81 = vld [vmem:[%s1 + $0xb4] sm:$0xf]
    %v82 = vld [vmem:[%s1 + $0xb8] sm:$0xf]
    %v83 = vld [vmem:[%s1 + $0xbc] sm:$0xf]
    %v84 = vld [vmem:[%s1 + $0xc0] sm:$0xf]
    %v85 = vld [vmem:[%s1 + $0xc4] sm:$0xf]
    %v86 = vld [vmem:[%s1 + $0xc8] sm:$0xf]
    %v87 = vld [vmem:[%s1 + $0xcc] sm:$0xf]
    %v88 = vld [vmem:[%s1 + $0xd0] sm:$0xf]
    %v89 = vld [vmem:[%s1 + $0xd4] sm:$0xf]
    %v90 = vld [vmem:[%s1 + $0xd8] sm:$0xf]
    %v91 = vld [vmem:[%s1 + $0xdc] sm:$0xf]
    %v92 = vld [vmem:[%s1 + $0xe0] sm:$0xf]
    %v93 = vld [vmem:[%s1 + $0xe4] sm:$0xf]
    %v94 = vld [vmem:[%s1 + $0xe8] sm:$0xf]
    %v95 = vld [vmem:[%s1 + $0xec] sm:$0xf]
    %v96 = vld [vmem:[%s1 + $0xf0] sm:$0xf]
    %v97 = vld [vmem:[%s1 + $0xf4] sm:$0xf]
    %v98 = vld [vmem:[%s1 + $0xf8] sm:$0xf]
    %v99 = vld [vmem:[%s1 + $0xfc] sm:$0xf]
    %v100 = vld [vmem:[%s1 + $0x100] sm:$0xf]
    %v101 = vld [vmem:[%s1 + $0x104] sm:$0xf]
    %v102 = vld [vmem:[%s1 + $0x108] sm:$0xf]
    %v103 = vld [vmem:[%s1 + $0x10c] sm:$0xf]
    %v104 = vld [vmem:[%s1 + $0x110] sm:$0xf]
    %v105 = vld [vmem:[%s1 + $0x114] sm:$0xf]
    %v106 = vld [vmem:[%s1 + $0x118] sm:$0xf]
    %v107 = vld [vmem:[%s1 + $0x11c] sm:$0xf]
    %v108 = vld [vmem:[%s1 + $0x120] sm:$0xf]
    %v109 = vld [vmem:[%s1 + $0x124] sm:$0xf]
    %v110 = vld [vmem:[%s1 + $0x128] sm:$0xf]
    %v111 = vld [vmem:[%s1 + $0x12c] sm:$0xf]
    %v112 = vld [vmem:[%s1 + $0x130] sm:$0xf]
    %v113 = vld [vmem:[%s1 + $0x134] sm:$0xf]
    %v114 = vld [vmem:[%s1 + $0x138] sm:$0xf]
    %v115 = vld [vmem:[%s1 + $0x13c] sm:$0xf]
    %v116 = vld [vmem:[%s1 + $0x140] sm:$0xf]
    %v117 = vld [vmem:[%s1 + $0x144] sm:$0xf]
    %v118 = vld [vmem:[%s1 + $0x148] sm:$0xf]
    %v119 = vld [vmem:[%s1 + $0x14c] sm:$0xf]
    %v120 = vld [vmem:[%s1 + $0x150] sm:$0xf]
    %v121 = vld [vmem:[%s1 + $0x154] sm:$0xf]
    %v122 = vld [vmem:[%s1 + $0x158] sm:$0xf]
    %v123 = vld [vmem:[%s1 + $0x15c] sm:$0xf]
    %v124 = vld [vmem:[%s1 + $0x160] sm:$0xf]
    %v125 = vld [vmem:[%s1 + $0x164] sm:$0xf]
    %v126 = vld [vmem:[%s1 + $0x168] sm:$0xf]
    %v127 = vld [vmem:[%s1 + $0x16c] sm:$0xf]
    %v128 = vld [vmem:[%s1 + $0x170] sm:$0xf]
    %v129 = vld [vmem:[%s1 + $0x174] sm:$0xf]
    %v130 = vld [vmem:[%s1 + $0x178] sm:$0xf]
    %v131 = vld [vmem:[%s1 + $0x17c] sm:$0xf]
    %v132 = vld [vmem:[%s1 + $0x180] sm:$0xf]
    %v133 = vld [vmem:[%s1 + $0x184] sm:$0xf]
    %v134 = vld [vmem:[%s1 + $0x188] sm:$0xf]
    %v135 = vld [vmem:[%s1 + $0x18c] sm:$0xf]
    %v136 = vld [vmem:[%s1 + $0x190] sm:$0xf]
    %v137 = vld [vmem:[%s1 + $0x194] sm:$0xf]
    %v138 = vld [vmem:[%s1 + $0x198] sm:$0xf]
    %v139 = vld [vmem:[%s1 + $0x19c] sm:$0xf]
    %v140 = vld [vmem:[%s1 + $0x1a0] sm:$0xf]
    %v141 = vld [vmem:[%s1 + $0x1a4] sm:$0xf]
    %v142 = vld [vmem:[%s1 + $0x1a8] sm:$0xf]
    %v143 = vld [vmem:[%s1 + $0x1ac] sm:$0xf]
    %v144 = vld [vmem:[%s1 + $0x1b0] sm:$0xf]
    %v145 = vld [vmem:[%s1 + $0x1b4] sm:$0xf]
    %v146 = vld [vmem:[%s1 + $0x1b8] sm:$0xf]
    %v147 = vld [vmem:[%s1 + $0x1bc] sm:$0xf]
    %v148 = vld [vmem:[%s1 + $0x1c0] sm:$0xf]
    %v149 = vld [vmem:[%s1 + $0x1c4] sm:$0xf]
    %v150 = vld [vmem:[%s1 + $0x1c8] sm:$0xf]
    %v151 = vld [vmem:[%s1 + $0x1cc] sm:$0xf]
    %v152 = vld [vmem:[%s1 + $0x1d0] sm:$0xf]
    %v153 = vld [vmem:[%s1 + $0x1d4] sm:$0xf]
    %v154 = vld [vmem:[%s1 + $0x1d8] sm:$0xf]
    %v155 = vld [vmem:[%s1 + $0x1dc] sm:$0xf]
    %v156 = vld [vmem:[%s1 + $0x1e0] sm:$0xf]
    %v157 = vld [vmem:[%s1 + $0x1e4] sm:$0xf]
    %v158 = vld [vmem:[%s1 + $0x1e8] sm:$0xf]
    %v159 = vld [vmem:[%s1 + $0x1ec] sm:$0xf]
    %v160 = vld [vmem:[%s1 + $0x1f0] sm:$0xf]
    %v161 = vld [vmem:[%s1 + $0x1f4] sm:$0xf]
    %v162 = vld [vmem:[%s1 + $0x1f8] sm:$0xf]
    %v163 = vld [vmem:[%s1 + $0x1fc] sm:$0xf]
    %v164 = vld [vmem:[%s3] sm:$0x3]
    %v165 = vld [vmem:[%s0] sm:$0xf]
    %v166 = vld [vmem:[%s0 + $0x4] sm:$0xf]
    %v167 = vld [vmem:[%s0 + $0x8] sm:$0xf]
    %v168 = vld [vmem:[%s0 + $0xc] sm:$0xf]
    %v169 = vld [vmem:[%s0 + $0x10] sm:$0xf]
    %v170 = vld [vmem:[%s0 + $0x14] sm:$0xf]
    %v171 = vld [vmem:[%s0 + $0x18] sm:$0xf]
    %v172 = vld [vmem:[%s0 + $0x1c] sm:$0xf]
    %v173 = vld [vmem:[%s0 + $0x20] sm:$0xf]
    %v174 = vld [vmem:[%s0 + $0x24] sm:$0xf]
    %v175 = vld [vmem:[%s0 + $0x28] sm:$0xf]
    %v176 = vld [vmem:[%s0 + $0x2c] sm:$0xf]
    %v177 = vld [vmem:[%s0 + $0x30] sm:$0xf]
    %v178 = vld [vmem:[%s0 + $0x34] sm:$0xf]
    %v179 = vld [vmem:[%s0 + $0x38] sm:$0xf]
    %v180 = vld [vmem:[%s0 + $0x3c] sm:$0xf]
    %v181 = vld [vmem:[%s0 + $0x40] sm:$0xf]
    %v182 = vld [vmem:[%s0 + $0x44] sm:$0xf]
    %v183 = vld [vmem:[%s0 + $0x48] sm:$0xf]
    %v184 = vld [vmem:[%s0 + $0x4c] sm:$0xf]
    %v185 = vld [vmem:[%s0 + $0x50] sm:$0xf]
    %v186 = vld [vmem:[%s0 + $0x54] sm:$0xf]
    %v187 = vld [vmem:[%s0 + $0x58] sm:$0xf]
    %v188 = vld [vmem:[%s0 + $0x5c] sm:$0xf]
    %v189 = vld [vmem:[%s0 + $0x60] sm:$0xf]
    %v190 = vld [vmem:[%s0 + $0x64] sm:$0xf]
    %v191 = vld [vmem:[%s0 + $0x68] sm:$0xf]
    %v192 = vld [vmem:[%s0 + $0x6c] sm:$0xf]
    %v193 = vld [vmem:[%s0 + $0x70] sm:$0xf]
    %v194 = vld [vmem:[%s0 + $0x74] sm:$0xf]
    %v195 = vld [vmem:[%s0 + $0x78] sm:$0xf]
    %v196 = vld [vmem:[%s0 + $0x7c] sm:$0xf]
    %v197 = vld [vmem:[%s0 + $0x80] sm:$0xf]
    %v198 = vld [vmem:[%s0 + $0x84] sm:$0xf]
    %v199 = vld [vmem:[%s0 + $0x88] sm:$0xf]
    %v200 = vld [vmem:[%s0 + $0x8c] sm:$0xf]
    %v201 = vld [vmem:[%s0 + $0x90] sm:$0xf]
    %v202 = vld [vmem:[%s0 + $0x94] sm:$0xf]
    %v203 = vld [vmem:[%s0 + $0x98] sm:$0xf]
    %v204 = vld [vmem:[%s0 + $0x9c] sm:$0xf]
    %v205 = vld [vmem:[%s0 + $0xa0] sm:$0xf]
    %v206 = vld [vmem:[%s0 + $0xa4] sm:$0xf]
    %v207 = vld [vmem:[%s0 + $0xa8] sm:$0xf]
    %v208 = vld [vmem:[%s0 + $0xac] sm:$0xf]
    %v209 = vld [vmem:[%s0 + $0xb0] sm:$0xf]
    %v210 = vld [vmem:[%s0 + $0xb4] sm:$0xf]
    %v211 = vld [vmem:[%s0 + $0xb8] sm:$0xf]
    %v212 = vld [vmem:[%s0 + $0xbc] sm:$0xf]
    %v213 = vld [vmem:[%s0 + $0xc0] sm:$0xf]
    %v214 = vld [vmem:[%s0 + $0xc4] sm:$0xf]
    %v215 = vld [vmem:[%s0 + $0xc8] sm:$0xf]
    %v216 = vld [vmem:[%s0 + $0xcc] sm:$0xf]
    %v217 = vld [vmem:[%s0 + $0xd0] sm:$0xf]
    %v218 = vld [vmem:[%s0 + $0xd4] sm:$0xf]
    %v219 = vld [vmem:[%s0 + $0xd8] sm:$0xf]
    %v220 = vld [vmem:[%s0 + $0xdc] sm:$0xf]
    %v221 = vld [vmem:[%s0 + $0xe0] sm:$0xf]
    %v222 = vld [vmem:[%s0 + $0xe4] sm:$0xf]
    %v223 = vld [vmem:[%s0 + $0xe8] sm:$0xf]
    %v224 = vld [vmem:[%s0 + $0xec] sm:$0xf]
    %v225 = vld [vmem:[%s0 + $0xf0] sm:$0xf]
    %v226 = vld [vmem:[%s0 + $0xf4] sm:$0xf]
    %v227 = vld [vmem:[%s0 + $0xf8] sm:$0xf]
    %v228 = vld [vmem:[%s0 + $0xfc] sm:$0xf]
    %v229 = vld [vmem:[%s0 + $0x100] sm:$0xf]
    %v230 = vld [vmem:[%s0 + $0x104] sm:$0xf]
    %v231 = vld [vmem:[%s0 + $0x108] sm:$0xf]
    %v232 = vld [vmem:[%s0 + $0x10c] sm:$0xf]
    %v233 = vld [vmem:[%s0 + $0x110] sm:$0xf]
    %v234 = vld [vmem:[%s0 + $0x114] sm:$0xf]
    %v235 = vld [vmem:[%s0 + $0x118] sm:$0xf]
    %v236 = vld [vmem:[%s0 + $0x11c] sm:$0xf]
    %v237 = vld [vmem:[%s0 + $0x120] sm:$0xf]
    %v238 = vld [vmem:[%s0 + $0x124] sm:$0xf]
    %v239 = vld [vmem:[%s0 + $0x128] sm:$0xf]
    %v240 = vld [vmem:[%s0 + $0x12c] sm:$0xf]
    %v241 = vld [vmem:[%s0 + $0x130] sm:$0xf]
    %v242 = vld [vmem:[%s0 + $0x134] sm:$0xf]
    %v243 = vld [vmem:[%s0 + $0x138] sm:$0xf]
    %v244 = vld [vmem:[%s0 + $0x13c] sm:$0xf]
    %v245 = vld [vmem:[%s0 + $0x140] sm:$0xf]
    %v246 = vld [vmem:[%s0 + $0x144] sm:$0xf]
    %v247 = vld [vmem:[%s0 + $0x148] sm:$0xf]
    %v248 = vld [vmem:[%s0 + $0x14c] sm:$0xf]
    %v249 = vld [vmem:[%s0 + $0x150] sm:$0xf]
    %v250 = vld [vmem:[%s0 + $0x154] sm:$0xf]
    %v251 = vld [vmem:[%s0 + $0x158] sm:$0xf]
    %v252 = vld [vmem:[%s0 + $0x15c] sm:$0xf]
    %v253 = vld [vmem:[%s0 + $0x160] sm:$0xf]
    %v254 = vld [vmem:[%s0 + $0x164] sm:$0xf]
    %v255 = vld [vmem:[%s0 + $0x168] sm:$0xf]
    %v256 = vld [vmem:[%s0 + $0x16c] sm:$0xf]
    %v257 = vld [vmem:[%s0 + $0x170] sm:$0xf]
    %v258 = vld [vmem:[%s0 + $0x174] sm:$0xf]
    %v259 = vld [vmem:[%s0 + $0x178] sm:$0xf]
    %v260 = vld [vmem:[%s0 + $0x17c] sm:$0xf]
    %v261 = vld [vmem:[%s0 + $0x180] sm:$0xf]
    %v262 = vld [vmem:[%s0 + $0x184] sm:$0xf]
    %v263 = vld [vmem:[%s0 + $0x188] sm:$0xf]
    %v264 = vld [vmem:[%s0 + $0x18c] sm:$0xf]
    %v265 = vld [vmem:[%s0 + $0x190] sm:$0xf]
    %v266 = vld [vmem:[%s0 + $0x194] sm:$0xf]
    %v267 = vld [vmem:[%s0 + $0x198] sm:$0xf]
    %v268 = vld [vmem:[%s0 + $0x19c] sm:$0xf]
    %v269 = vld [vmem:[%s0 + $0x1a0] sm:$0xf]
    %v270 = vld [vmem:[%s0 + $0x1a4] sm:$0xf]
    %v271 = vld [vmem:[%s0 + $0x1a8] sm:$0xf]
    %v272 = vld [vmem:[%s0 + $0x1ac] sm:$0xf]
    %v273 = vld [vmem:[%s0 + $0x1b0] sm:$0xf]
    %v274 = vld [vmem:[%s0 + $0x1b4] sm:$0xf]
    %v275 = vld [vmem:[%s0 + $0x1b8] sm:$0xf]
    %v276 = vld [vmem:[%s0 + $0x1bc] sm:$0xf]
    %v277 = vld [vmem:[%s0 + $0x1c0] sm:$0xf]
    %v278 = vld [vmem:[%s0 + $0x1c4] sm:$0xf]
    %v279 = vld [vmem:[%s0 + $0x1c8] sm:$0xf]
    %v280 = vld [vmem:[%s0 + $0x1cc] sm:$0xf]
    %v281 = vld [vmem:[%s0 + $0x1d0] sm:$0xf]
    %v282 = vld [vmem:[%s0 + $0x1d4] sm:$0xf]
    %v283 = vld [vmem:[%s0 + $0x1d8] sm:$0xf]
    %v284 = vld [vmem:[%s0 + $0x1dc] sm:$0xf]
    %v285 = vld [vmem:[%s0 + $0x1e0] sm:$0xf]
    %v286 = vld [vmem:[%s0 + $0x1e4] sm:$0xf]
    %v287 = vld [vmem:[%s0 + $0x1e8] sm:$0xf]
    %v288 = vld [vmem:[%s0 + $0x1ec] sm:$0xf]
    %v289 = vld [vmem:[%s0 + $0x1f0] sm:$0xf]
    %v290 = vld [vmem:[%s0 + $0x1f4] sm:$0xf]
    %v291 = vld [vmem:[%s0 + $0x1f8] sm:$0xf]
    %v292 = vld [vmem:[%s0 + $0x1fc] sm:$0xf]
    %v293 = vld [vmem:[%s2] sm:$0x3]
    %v422 = vunpack.c.l.b16 %v165
    %v423 = vunpack.c.l.b16 %v166
    %v424 = vunpack.c.l.b16 %v167
    %v425 = vunpack.c.l.b16 %v168
    %v426 = vunpack.c.l.b16 %v169
    %v427 = vunpack.c.l.b16 %v170
    %v428 = vunpack.c.l.b16 %v171
    %v429 = vunpack.c.l.b16 %v172
    %v430 = vunpack.c.l.b16 %v173
    %v431 = vunpack.c.l.b16 %v174
    %v432 = vunpack.c.l.b16 %v175
    %v433 = vunpack.c.l.b16 %v176
    %v434 = vunpack.c.l.b16 %v177
    %v435 = vunpack.c.l.b16 %v178
    %v436 = vunpack.c.l.b16 %v179
    %v437 = vunpack.c.l.b16 %v180
    %v438 = vunpack.c.l.b16 %v181
    %v439 = vunpack.c.l.b16 %v182
    %v440 = vunpack.c.l.b16 %v183
    %v441 = vunpack.c.l.b16 %v184
    %v442 = vunpack.c.l.b16 %v185
    %v443 = vunpack.c.l.b16 %v186
    %v444 = vunpack.c.l.b16 %v187
    %v445 = vunpack.c.l.b16 %v188
    %v446 = vunpack.c.l.b16 %v189
    %v447 = vunpack.c.l.b16 %v190
    %v448 = vunpack.c.l.b16 %v191
    %v449 = vunpack.c.l.b16 %v192
    %v450 = vunpack.c.l.b16 %v193
    %v451 = vunpack.c.l.b16 %v194
    %v452 = vunpack.c.l.b16 %v195
    %v453 = vunpack.c.l.b16 %v196
    %v454 = vunpack.c.l.b16 %v197
    %v455 = vunpack.c.l.b16 %v198
    %v456 = vunpack.c.l.b16 %v199
    %v457 = vunpack.c.l.b16 %v200
    %v458 = vunpack.c.l.b16 %v201
    %v459 = vunpack.c.l.b16 %v202
    %v460 = vunpack.c.l.b16 %v203
    %v461 = vunpack.c.l.b16 %v204
    %v462 = vunpack.c.l.b16 %v205
    %v463 = vunpack.c.l.b16 %v206
    %v464 = vunpack.c.l.b16 %v207
    %v465 = vunpack.c.l.b16 %v208
    %v466 = vunpack.c.l.b16 %v209
    %v467 = vunpack.c.l.b16 %v210
    %v468 = vunpack.c.l.b16 %v211
    %v469 = vunpack.c.l.b16 %v212
    %v470 = vunpack.c.l.b16 %v213
    %v471 = vunpack.c.l.b16 %v214
    %v472 = vunpack.c.l.b16 %v215
    %v473 = vunpack.c.l.b16 %v216
    %v474 = vunpack.c.l.b16 %v217
    %v475 = vunpack.c.l.b16 %v218
    %v476 = vunpack.c.l.b16 %v219
    %v477 = vunpack.c.l.b16 %v220
    %v478 = vunpack.c.l.b16 %v221
    %v479 = vunpack.c.l.b16 %v222
    %v480 = vunpack.c.l.b16 %v223
    %v481 = vunpack.c.l.b16 %v224
    %v482 = vunpack.c.l.b16 %v225
    %v483 = vunpack.c.l.b16 %v226
    %v484 = vunpack.c.l.b16 %v227
    %v485 = vunpack.c.l.b16 %v228
    %v486 = vunpack.c.l.b16 %v229
    %v487 = vunpack.c.l.b16 %v230
    %v488 = vunpack.c.l.b16 %v231
    %v489 = vunpack.c.l.b16 %v232
    %v490 = vunpack.c.l.b16 %v233
    %v491 = vunpack.c.l.b16 %v234
    %v492 = vunpack.c.l.b16 %v235
    %v493 = vunpack.c.l.b16 %v236
    %v494 = vunpack.c.l.b16 %v237
    %v495 = vunpack.c.l.b16 %v238
    %v496 = vunpack.c.l.b16 %v239
    %v497 = vunpack.c.l.b16 %v240
    %v498 = vunpack.c.l.b16 %v241
    %v499 = vunpack.c.l.b16 %v242
    %v500 = vunpack.c.l.b16 %v243
    %v501 = vunpack.c.l.b16 %v244
    %v502 = vunpack.c.l.b16 %v245
    %v503 = vunpack.c.l.b16 %v246
    %v504 = vunpack.c.l.b16 %v247
    %v505 = vunpack.c.l.b16 %v248
    %v506 = vunpack.c.l.b16 %v249
    %v507 = vunpack.c.l.b16 %v250
    %v508 = vunpack.c.l.b16 %v251
    %v509 = vunpack.c.l.b16 %v252
    %v510 = vunpack.c.l.b16 %v253
    %v511 = vunpack.c.l.b16 %v254
    %v512 = vunpack.c.l.b16 %v255
    %v513 = vunpack.c.l.b16 %v256
    %v514 = vunpack.c.l.b16 %v257
    %v515 = vunpack.c.l.b16 %v258
    %v516 = vunpack.c.l.b16 %v259
    %v517 = vunpack.c.l.b16 %v260
    %v518 = vunpack.c.l.b16 %v261
    %v519 = vunpack.c.l.b16 %v262
    %v520 = vunpack.c.l.b16 %v263
    %v521 = vunpack.c.l.b16 %v264
    %v522 = vunpack.c.l.b16 %v265
    %v523 = vunpack.c.l.b16 %v266
    %v524 = vunpack.c.l.b16 %v267
    %v525 = vunpack.c.l.b16 %v268
    %v526 = vunpack.c.l.b16 %v269
    %v527 = vunpack.c.l.b16 %v270
    %v528 = vunpack.c.l.b16 %v271
    %v529 = vunpack.c.l.b16 %v272
    %v530 = vunpack.c.l.b16 %v273
    %v531 = vunpack.c.l.b16 %v274
    %v532 = vunpack.c.l.b16 %v275
    %v533 = vunpack.c.l.b16 %v276
    %v534 = vunpack.c.l.b16 %v277
    %v535 = vunpack.c.l.b16 %v278
    %v536 = vunpack.c.l.b16 %v279
    %v537 = vunpack.c.l.b16 %v280
    %v538 = vunpack.c.l.b16 %v281
    %v539 = vunpack.c.l.b16 %v282
    %v540 = vunpack.c.l.b16 %v283
    %v541 = vunpack.c.l.b16 %v284
    %v542 = vunpack.c.l.b16 %v285
    %v543 = vunpack.c.l.b16 %v286
    %v544 = vunpack.c.l.b16 %v287
    %v545 = vunpack.c.l.b16 %v288
    %v546 = vunpack.c.l.b16 %v289
    %v547 = vunpack.c.l.b16 %v290
    %v548 = vunpack.c.l.b16 %v291
    %v549 = vunpack.c.l.b16 %v292
    %v550 = vpack.c.b16 %v423, %v422
    %v551 = vpack.c.b16 %v425, %v424
    %v552 = vpack.c.b16 %v427, %v426
    %v553 = vpack.c.b16 %v429, %v428
    %v554 = vpack.c.b16 %v431, %v430
    %v555 = vpack.c.b16 %v433, %v432
    %v556 = vpack.c.b16 %v435, %v434
    %v557 = vpack.c.b16 %v437, %v436
    %v558 = vpack.c.b16 %v439, %v438
    %v559 = vpack.c.b16 %v441, %v440
    %v560 = vpack.c.b16 %v443, %v442
    %v561 = vpack.c.b16 %v445, %v444
    %v562 = vpack.c.b16 %v447, %v446
    %v563 = vpack.c.b16 %v449, %v448
    %v564 = vpack.c.b16 %v451, %v450
    %v565 = vpack.c.b16 %v453, %v452
    %v566 = vpack.c.b16 %v455, %v454
    %v567 = vpack.c.b16 %v457, %v456
    %v568 = vpack.c.b16 %v459, %v458
    %v569 = vpack.c.b16 %v461, %v460
    %v570 = vpack.c.b16 %v463, %v462
    %v571 = vpack.c.b16 %v465, %v464
    %v572 = vpack.c.b16 %v467, %v466
    %v573 = vpack.c.b16 %v469, %v468
    %v574 = vpack.c.b16 %v471, %v470
    %v575 = vpack.c.b16 %v473, %v472
    %v576 = vpack.c.b16 %v475, %v474
    %v577 = vpack.c.b16 %v477, %v476
    %v578 = vpack.c.b16 %v479, %v478
    %v579 = vpack.c.b16 %v481, %v480
    %v580 = vpack.c.b16 %v483, %v482
    %v581 = vpack.c.b16 %v485, %v484
    %v582 = vpack.c.b16 %v487, %v486
    %v583 = vpack.c.b16 %v489, %v488
    %v584 = vpack.c.b16 %v491, %v490
    %v585 = vpack.c.b16 %v493, %v492
    %v586 = vpack.c.b16 %v495, %v494
    %v587 = vpack.c.b16 %v497, %v496
    %v588 = vpack.c.b16 %v499, %v498
    %v589 = vpack.c.b16 %v501, %v500
    %v590 = vpack.c.b16 %v503, %v502
    %v591 = vpack.c.b16 %v505, %v504
    %v592 = vpack.c.b16 %v507, %v506
    %v593 = vpack.c.b16 %v509, %v508
    %v594 = vpack.c.b16 %v511, %v510
    %v595 = vpack.c.b16 %v513, %v512
    %v596 = vpack.c.b16 %v515, %v514
    %v597 = vpack.c.b16 %v517, %v516
    %v598 = vpack.c.b16 %v519, %v518
    %v599 = vpack.c.b16 %v521, %v520
    %v600 = vpack.c.b16 %v523, %v522
    %v601 = vpack.c.b16 %v525, %v524
    %v602 = vpack.c.b16 %v527, %v526
    %v603 = vpack.c.b16 %v529, %v528
    %v604 = vpack.c.b16 %v531, %v530
    %v605 = vpack.c.b16 %v533, %v532
    %v606 = vpack.c.b16 %v535, %v534
    %v607 = vpack.c.b16 %v537, %v536
    %v608 = vpack.c.b16 %v539, %v538
    %v609 = vpack.c.b16 %v541, %v540
    %v610 = vpack.c.b16 %v543, %v542
    %v611 = vpack.c.b16 %v545, %v544
    %v612 = vpack.c.b16 %v547, %v546
    %v613 = vpack.c.b16 %v549, %v548
    %vm614 = vcmask 23552
    %v616 = vsel %vm614, %v550, 0
    %v619 = vsel %vm614, %v551, 0
    %v622 = vsel %vm614, %v552, 0
    %v625 = vsel %vm614, %v553, 0
    %v628 = vsel %vm614, %v554, 0
    %v631 = vsel %vm614, %v555, 0
    %v634 = vsel %vm614, %v556, 0
    %v637 = vsel %vm614, %v557, 0
    %v640 = vsel %vm614, %v558, 0
    %v643 = vsel %vm614, %v559, 0
    %v646 = vsel %vm614, %v560, 0
    %v649 = vsel %vm614, %v561, 0
    %v652 = vsel %vm614, %v562, 0
    %v655 = vsel %vm614, %v563, 0
    %v658 = vsel %vm614, %v564, 0
    %v661 = vsel %vm614, %v565, 0
    %v664 = vsel %vm614, %v566, 0
    %v667 = vsel %vm614, %v567, 0
    %v670 = vsel %vm614, %v568, 0
    %v673 = vsel %vm614, %v569, 0
    %v676 = vsel %vm614, %v570, 0
    %v679 = vsel %vm614, %v571, 0
    %v682 = vsel %vm614, %v572, 0
    %v685 = vsel %vm614, %v573, 0
    %v688 = vsel %vm614, %v574, 0
    %v691 = vsel %vm614, %v575, 0
    %v694 = vsel %vm614, %v576, 0
    %v697 = vsel %vm614, %v577, 0
    %v700 = vsel %vm614, %v578, 0
    %v703 = vsel %vm614, %v579, 0
    %v706 = vsel %vm614, %v580, 0
    %v709 = vsel %vm614, %v581, 0
    %v712 = vsel %vm614, %v582, 0
    %v715 = vsel %vm614, %v583, 0
    %v718 = vsel %vm614, %v584, 0
    %v721 = vsel %vm614, %v585, 0
    %v724 = vsel %vm614, %v586, 0
    %v727 = vsel %vm614, %v587, 0
    %v730 = vsel %vm614, %v588, 0
    %v733 = vsel %vm614, %v589, 0
    %v736 = vsel %vm614, %v590, 0
    %v739 = vsel %vm614, %v591, 0
    %v742 = vsel %vm614, %v592, 0
    %v745 = vsel %vm614, %v593, 0
    %v748 = vsel %vm614, %v594, 0
    %v751 = vsel %vm614, %v595, 0
    %v754 = vsel %vm614, %v596, 0
    %v757 = vsel %vm614, %v597, 0
    %v760 = vsel %vm614, %v598, 0
    %v763 = vsel %vm614, %v599, 0
    %v766 = vsel %vm614, %v600, 0
    %v769 = vsel %vm614, %v601, 0
    %v772 = vsel %vm614, %v602, 0
    %v775 = vsel %vm614, %v603, 0
    %v778 = vsel %vm614, %v604, 0
    %v781 = vsel %vm614, %v605, 0
    %v784 = vsel %vm614, %v606, 0
    %v787 = vsel %vm614, %v607, 0
    %v790 = vsel %vm614, %v608, 0
    %v793 = vsel %vm614, %v609, 0
    %v796 = vsel %vm614, %v610, 0
    %v799 = vsel %vm614, %v611, 0
    %v802 = vsel %vm614, %v612, 0
    %v805 = vsel %vm614, %v613, 0
    %vm807 = vcmask 1040384
    %vm808 = vcmask 1041408
    %v809 = vsel %vm807, 4294967295, 65535
    %v810 = vsel %vm808, %v809, 0
    %v812 = vand.u32 %v293, %v810
    %814 = vmatprep.subr.bf16.mxu0 0
    %815 = vmatpush1.bf16.msra.mxu0 %v812
    %816 = vmatprep.subr.bf16.mxu0 0
    %817 = vmatpush1.bf16.msra.mxu0 0
    %818 = vmatprep.subr.bf16.mxu0 0
    %819 = vmatpush1.bf16.msra.mxu0 0
    %820 = vmatprep.subr.bf16.mxu0 0
    %821 = vmatpush1.bf16.msra.mxu0 0
    %822 = vmatprep.subr.bf16.mxu0 0
    %823 = vmatpush1.bf16.msra.mxu0 0
    %824 = vmatprep.subr.bf16.mxu0 0
    %825 = vmatpush1.bf16.msra.mxu0 0
    %826 = vmatprep.subr.bf16.mxu0 0
    %827 = vmatpush1.bf16.msra.mxu0 0
    %828 = vmatprep.subr.bf16.mxu0 0
    %829 = vmatpush1.bf16.msra.mxu0 0
    %830 = vmatprep.subr.bf16.mxu0 0
    %831 = vmatpush1.bf16.msra.mxu0 0
    %832 = vmatprep.subr.bf16.mxu0 0
    %833 = vmatpush1.bf16.msra.mxu0 0
    %834 = vmatprep.subr.bf16.mxu0 0
    %835 = vmatpush1.bf16.msra.mxu0 0
    %836 = vmatprep.subr.bf16.mxu0 0
    %837 = vmatpush1.bf16.msra.mxu0 0
    %838 = vmatprep.subr.bf16.mxu0 0
    %839 = vmatpush1.bf16.msra.mxu0 0
    %840 = vmatprep.subr.bf16.mxu0 0
    %841 = vmatpush1.bf16.msra.mxu0 0
    %842 = vmatprep.subr.bf16.mxu0 0
    %843 = vmatpush1.bf16.msra.mxu0 0
    %844 = vmatprep.subr.bf16.mxu0 0
    %845 = vmatpush1.bf16.msra.mxu0 0
    %846 = vmatprep.mubr.bf16.mxu0 0
    %847 = vmatmul.mubr.bf16.gmra.mrb[0].mxu0 %v616
    %v848 = vpop.f32.mrb[0].mxu0
    %v849 = vadd.f32 0.0, %v848
    %v850 = vpop.f32.mrb[0].mxu0
    %v851 = vpop.f32.mrb[0].mxu0
    %v852 = vadd.f32 0.0, %v851
    %v853 = vpop.f32.mrb[0].mxu0
    %854 = vmatprep.mubr.bf16.mxu0 0
    %855 = vmatmul.mubr.bf16.gmra.mrb[0].mxu0 %v619
    %v856 = vpop.f32.mrb[0].mxu0
    %v857 = vadd.f32 0.0, %v856
    %v858 = vpop.f32.mrb[0].mxu0
    %v859 = vpop.f32.mrb[0].mxu0
    %v860 = vadd.f32 0.0, %v859
    %v861 = vpop.f32.mrb[0].mxu0
    %862 = vmatprep.mubr.bf16.mxu0 0
    %863 = vmatmul.mubr.bf16.gmra.mrb[0].mxu0 %v622
    %v864 = vpop.f32.mrb[0].mxu0
    %v865 = vadd.f32 0.0, %v864
    %v866 = vpop.f32.mrb[0].mxu0
    %v867 = vpop.f32.mrb[0].mxu0
    %v868 = vadd.f32 0.0, %v867
    %v869 = vpop.f32.mrb[0].mxu0
    %870 = vmatprep.mubr.bf16.mxu0 0
    %871 = vmatmul.mubr.bf16.gmra.mrb[0].mxu0 %v625
    %v872 = vpop.f32.mrb[0].mxu0
    %v873 = vadd.f32 0.0, %v872
    %v874 = vpop.f32.mrb[0].mxu0
    %v875 = vpop.f32.mrb[0].mxu0
    %v876 = vadd.f32 0.0, %v875
    %v877 = vpop.f32.mrb[0].mxu0
    %878 = vmatprep.mubr.bf16.mxu0 0
    %879 = vmatmul.mubr.bf16.gmra.mrb[0].mxu0 %v628
    %v880 = vpop.f32.mrb[0].mxu0
    %v881 = vadd.f32 0.0, %v880
    %v882 = vpop.f32.mrb[0].mxu0
    %v883 = vpop.f32.mrb[0].mxu0
    %v884 = vadd.f32 0.0, %v883
    %v885 = vpop.f32.mrb[0].mxu0
    %886 = vmatprep.mubr.bf16.mxu0 0
    %887 = vmatmul.mubr.bf16.gmra.mrb[0].mxu0 %v631
    %v888 = vpop.f32.mrb[0].mxu0
    %v889 = vadd.f32 0.0, %v888
    %v890 = vpop.f32.mrb[0].mxu0
    %v891 = vpop.f32.mrb[0].mxu0
    %v892 = vadd.f32 0.0, %v891
    %v893 = vpop.f32.mrb[0].mxu0
    %894 = vmatprep.mubr.bf16.mxu0 0
    %895 = vmatmul.mubr.bf16.gmra.mrb[0].mxu0 %v634
    %v896 = vpop.f32.mrb[0].mxu0
    %v897 = vadd.f32 0.0, %v896
    %v898 = vpop.f32.mrb[0].mxu0
    %v899 = vpop.f32.mrb[0].mxu0
    %v900 = vadd.f32 0.0, %v899
    %v901 = vpop.f32.mrb[0].mxu0
    %902 = vmatprep.mubr.bf16.mxu0 0
    %903 = vmatmul.mubr.bf16.gmra.mrb[0].mxu0 %v637
    %v904 = vpop.f32.mrb[0].mxu0
    %v905 = vadd.f32 0.0, %v904
    %v906 = vpop.f32.mrb[0].mxu0
    %v907 = vpop.f32.mrb[0].mxu0
    %v908 = vadd.f32 0.0, %v907
    %v909 = vpop.f32.mrb[0].mxu0
    %910 = vmatprep.mubr.bf16.mxu0 0
    %911 = vmatmul.mubr.bf16.gmra.mrb[0].mxu0 %v640
    %v912 = vpop.f32.mrb[0].mxu0
    %v913 = vadd.f32 0.0, %v912
    %v914 = vpop.f32.mrb[0].mxu0
    %v915 = vpop.f32.mrb[0].mxu0
    %v916 = vadd.f32 0.0, %v915
    %v917 = vpop.f32.mrb[0].mxu0
    %918 = vmatprep.mubr.bf16.mxu0 0
    %919 = vmatmul.mubr.bf16.gmra.mrb[0].mxu0 %v643
    %v920 = vpop.f32.mrb[0].mxu0
    %v921 = vadd.f32 0.0, %v920
    %v922 = vpop.f32.mrb[0].mxu0
    %v923 = vpop.f32.mrb[0].mxu0
    %v924 = vadd.f32 0.0, %v923
    %v925 = vpop.f32.mrb[0].mxu0
    %926 = vmatprep.mubr.bf16.mxu0 0
    %927 = vmatmul.mubr.bf16.gmra.mrb[0].mxu0 %v646
    %v928 = vpop.f32.mrb[0].mxu0
    %v929 = vadd.f32 0.0, %v928
    %v930 = vpop.f32.mrb[0].mxu0
    %v931 = vpop.f32.mrb[0].mxu0
    %v932 = vadd.f32 0.0, %v931
    %v933 = vpop.f32.mrb[0].mxu0
    %934 = vmatprep.mubr.bf16.mxu0 0
    %935 = vmatmul.mubr.bf16.gmra.mrb[0].mxu0 %v649
    %v936 = vpop.f32.mrb[0].mxu0
    %v937 = vadd.f32 0.0, %v936
    %v938 = vpop.f32.mrb[0].mxu0
    %v939 = vpop.f32.mrb[0].mxu0
    %v940 = vadd.f32 0.0, %v939
    %v941 = vpop.f32.mrb[0].mxu0
    %942 = vmatprep.mubr.bf16.mxu0 0
    %943 = vmatmul.mubr.bf16.gmra.mrb[0].mxu0 %v652
    %v944 = vpop.f32.mrb[0].mxu0
    %v945 = vadd.f32 0.0, %v944
    %v946 = vpop.f32.mrb[0].mxu0
    %v947 = vpop.f32.mrb[0].mxu0
    %v948 = vadd.f32 0.0, %v947
    %v949 = vpop.f32.mrb[0].mxu0
    %950 = vmatprep.mubr.bf16.mxu0 0
    %951 = vmatmul.mubr.bf16.gmra.mrb[0].mxu0 %v655
    %v952 = vpop.f32.mrb[0].mxu0
    %v953 = vadd.f32 0.0, %v952
    %v954 = vpop.f32.mrb[0].mxu0
    %v955 = vpop.f32.mrb[0].mxu0
    %v956 = vadd.f32 0.0, %v955
    %v957 = vpop.f32.mrb[0].mxu0
    %958 = vmatprep.mubr.bf16.mxu0 0
    %959 = vmatmul.mubr.bf16.gmra.mrb[0].mxu0 %v658
    %v960 = vpop.f32.mrb[0].mxu0
    %v961 = vadd.f32 0.0, %v960
    %v962 = vpop.f32.mrb[0].mxu0
    %v963 = vpop.f32.mrb[0].mxu0
    %v964 = vadd.f32 0.0, %v963
    %v965 = vpop.f32.mrb[0].mxu0
    %966 = vmatprep.mubr.bf16.mxu0 0
    %967 = vmatmul.mubr.bf16.gmra.mrb[0].mxu0 %v661
    %v968 = vpop.f32.mrb[0].mxu0
    %v969 = vadd.f32 0.0, %v968
    %v970 = vpop.f32.mrb[0].mxu0
    %v971 = vpop.f32.mrb[0].mxu0
    %v972 = vadd.f32 0.0, %v971
    %v973 = vpop.f32.mrb[0].mxu0
    %974 = vmatprep.mubr.bf16.mxu0 0
    %975 = vmatmul.mubr.bf16.gmra.mrb[0].mxu0 %v664
    %v976 = vpop.f32.mrb[0].mxu0
    %v977 = vadd.f32 0.0, %v976
    %v978 = vpop.f32.mrb[0].mxu0
    %v979 = vpop.f32.mrb[0].mxu0
    %v980 = vadd.f32 0.0, %v979
    %v981 = vpop.f32.mrb[0].mxu0
    %982 = vmatprep.mubr.bf16.mxu0 0
    %983 = vmatmul.mubr.bf16.gmra.mrb[0].mxu0 %v667
    %v984 = vpop.f32.mrb[0].mxu0
    %v985 = vadd.f32 0.0, %v984
    %v986 = vpop.f32.mrb[0].mxu0
    %v987 = vpop.f32.mrb[0].mxu0
    %v988 = vadd.f32 0.0, %v987
    %v989 = vpop.f32.mrb[0].mxu0
    %990 = vmatprep.mubr.bf16.mxu0 0
    %991 = vmatmul.mubr.bf16.gmra.mrb[0].mxu0 %v670
    %v992 = vpop.f32.mrb[0].mxu0
    %v993 = vadd.f32 0.0, %v992
    %v994 = vpop.f32.mrb[0].mxu0
    %v995 = vpop.f32.mrb[0].mxu0
    %v996 = vadd.f32 0.0, %v995
    %v997 = vpop.f32.mrb[0].mxu0
    %998 = vmatprep.mubr.bf16.mxu0 0
    %999 = vmatmul.mubr.bf16.gmra.mrb[0].mxu0 %v673
    %v1000 = vpop.f32.mrb[0].mxu0
    %v1001 = vadd.f32 0.0, %v1000
    %v1002 = vpop.f32.mrb[0].mxu0
    %v1003 = vpop.f32.mrb[0].mxu0
    %v1004 = vadd.f32 0.0, %v1003
    %v1005 = vpop.f32.mrb[0].mxu0
    %1006 = vmatprep.mubr.bf16.mxu0 0
    %1007 = vmatmul.mubr.bf16.gmra.mrb[0].mxu0 %v676
    %v1008 = vpop.f32.mrb[0].mxu0
    %v1009 = vadd.f32 0.0, %v1008
    %v1010 = vpop.f32.mrb[0].mxu0
    %v1011 = vpop.f32.mrb[0].mxu0
    %v1012 = vadd.f32 0.0, %v1011
    %v1013 = vpop.f32.mrb[0].mxu0
    %1014 = vmatprep.mubr.bf16.mxu0 0
    %1015 = vmatmul.mubr.bf16.gmra.mrb[0].mxu0 %v679
    %v1016 = vpop.f32.mrb[0].mxu0
    %v1017 = vadd.f32 0.0, %v1016
    %v1018 = vpop.f32.mrb[0].mxu0
    %v1019 = vpop.f32.mrb[0].mxu0
    %v1020 = vadd.f32 0.0, %v1019
    %v1021 = vpop.f32.mrb[0].mxu0
    %1022 = vmatprep.mubr.bf16.mxu0 0
    %1023 = vmatmul.mubr.bf16.gmra.mrb[0].mxu0 %v682
    %v1024 = vpop.f32.mrb[0].mxu0
    %v1025 = vadd.f32 0.0, %v1024
    %v1026 = vpop.f32.mrb[0].mxu0
    %v1027 = vpop.f32.mrb[0].mxu0
    %v1028 = vadd.f32 0.0, %v1027
    %v1029 = vpop.f32.mrb[0].mxu0
    %1030 = vmatprep.mubr.bf16.mxu0 0
    %1031 = vmatmul.mubr.bf16.gmra.mrb[0].mxu0 %v685
    %v1032 = vpop.f32.mrb[0].mxu0
    %v1033 = vadd.f32 0.0, %v1032
    %v1034 = vpop.f32.mrb[0].mxu0
    %v1035 = vpop.f32.mrb[0].mxu0
    %v1036 = vadd.f32 0.0, %v1035
    %v1037 = vpop.f32.mrb[0].mxu0
    %1038 = vmatprep.mubr.bf16.mxu0 0
    %1039 = vmatmul.mubr.bf16.gmra.mrb[0].mxu0 %v688
    %v1040 = vpop.f32.mrb[0].mxu0
    %v1041 = vadd.f32 0.0, %v1040
    %v1042 = vpop.f32.mrb[0].mxu0
    %v1043 = vpop.f32.mrb[0].mxu0
    %v1044 = vadd.f32 0.0, %v1043
    %v1045 = vpop.f32.mrb[0].mxu0
    %1046 = vmatprep.mubr.bf16.mxu0 0
    %1047 = vmatmul.mubr.bf16.gmra.mrb[0].mxu0 %v691
    %v1048 = vpop.f32.mrb[0].mxu0
    %v1049 = vadd.f32 0.0, %v1048
    %v1050 = vpop.f32.mrb[0].mxu0
    %v1051 = vpop.f32.mrb[0].mxu0
    %v1052 = vadd.f32 0.0, %v1051
    %v1053 = vpop.f32.mrb[0].mxu0
    %1054 = vmatprep.mubr.bf16.mxu0 0
    %1055 = vmatmul.mubr.bf16.gmra.mrb[0].mxu0 %v694
    %v1056 = vpop.f32.mrb[0].mxu0
    %v1057 = vadd.f32 0.0, %v1056
    %v1058 = vpop.f32.mrb[0].mxu0
    %v1059 = vpop.f32.mrb[0].mxu0
    %v1060 = vadd.f32 0.0, %v1059
    %v1061 = vpop.f32.mrb[0].mxu0
    %1062 = vmatprep.mubr.bf16.mxu0 0
    %1063 = vmatmul.mubr.bf16.gmra.mrb[0].mxu0 %v697
    %v1064 = vpop.f32.mrb[0].mxu0
    %v1065 = vadd.f32 0.0, %v1064
    %v1066 = vpop.f32.mrb[0].mxu0
    %v1067 = vpop.f32.mrb[0].mxu0
    %v1068 = vadd.f32 0.0, %v1067
    %v1069 = vpop.f32.mrb[0].mxu0
    %1070 = vmatprep.mubr.bf16.mxu0 0
    %1071 = vmatmul.mubr.bf16.gmra.mrb[0].mxu0 %v700
    %v1072 = vpop.f32.mrb[0].mxu0
    %v1073 = vadd.f32 0.0, %v1072
    %v1074 = vpop.f32.mrb[0].mxu0
    %v1075 = vpop.f32.mrb[0].mxu0
    %v1076 = vadd.f32 0.0, %v1075
    %v1077 = vpop.f32.mrb[0].mxu0
    %1078 = vmatprep.mubr.bf16.mxu0 0
    %1079 = vmatmul.mubr.bf16.gmra.mrb[0].mxu0 %v703
    %v1080 = vpop.f32.mrb[0].mxu0
    %v1081 = vadd.f32 0.0, %v1080
    %v1082 = vpop.f32.mrb[0].mxu0
    %v1083 = vpop.f32.mrb[0].mxu0
    %v1084 = vadd.f32 0.0, %v1083
    %v1085 = vpop.f32.mrb[0].mxu0
    %1086 = vmatprep.mubr.bf16.mxu0 0
    %1087 = vmatmul.mubr.bf16.gmra.mrb[0].mxu0 %v706
    %v1088 = vpop.f32.mrb[0].mxu0
    %v1089 = vadd.f32 0.0, %v1088
    %v1090 = vpop.f32.mrb[0].mxu0
    %v1091 = vpop.f32.mrb[0].mxu0
    %v1092 = vadd.f32 0.0, %v1091
    %v1093 = vpop.f32.mrb[0].mxu0
    %1094 = vmatprep.mubr.bf16.mxu0 0
    %1095 = vmatmul.mubr.bf16.gmra.mrb[0].mxu0 %v709
    %v1096 = vpop.f32.mrb[0].mxu0
    %v1097 = vadd.f32 0.0, %v1096
    %v1098 = vpop.f32.mrb[0].mxu0
    %v1099 = vpop.f32.mrb[0].mxu0
    %v1100 = vadd.f32 0.0, %v1099
    %v1101 = vpop.f32.mrb[0].mxu0
    %1102 = vmatprep.mubr.bf16.mxu0 0
    %1103 = vmatmul.mubr.bf16.gmra.mrb[0].mxu0 %v712
    %v1104 = vpop.f32.mrb[0].mxu0
    %v1105 = vadd.f32 0.0, %v1104
    %v1106 = vpop.f32.mrb[0].mxu0
    %v1107 = vpop.f32.mrb[0].mxu0
    %v1108 = vadd.f32 0.0, %v1107
    %v1109 = vpop.f32.mrb[0].mxu0
    %1110 = vmatprep.mubr.bf16.mxu0 0
    %1111 = vmatmul.mubr.bf16.gmra.mrb[0].mxu0 %v715
    %v1112 = vpop.f32.mrb[0].mxu0
    %v1113 = vadd.f32 0.0, %v1112
    %v1114 = vpop.f32.mrb[0].mxu0
    %v1115 = vpop.f32.mrb[0].mxu0
    %v1116 = vadd.f32 0.0, %v1115
    %v1117 = vpop.f32.mrb[0].mxu0
    %1118 = vmatprep.mubr.bf16.mxu0 0
    %1119 = vmatmul.mubr.bf16.gmra.mrb[0].mxu0 %v718
    %v1120 = vpop.f32.mrb[0].mxu0
    %v1121 = vadd.f32 0.0, %v1120
    %v1122 = vpop.f32.mrb[0].mxu0
    %v1123 = vpop.f32.mrb[0].mxu0
    %v1124 = vadd.f32 0.0, %v1123
    %v1125 = vpop.f32.mrb[0].mxu0
    %1126 = vmatprep.mubr.bf16.mxu0 0
    %1127 = vmatmul.mubr.bf16.gmra.mrb[0].mxu0 %v721
    %v1128 = vpop.f32.mrb[0].mxu0
    %v1129 = vadd.f32 0.0, %v1128
    %v1130 = vpop.f32.mrb[0].mxu0
    %v1131 = vpop.f32.mrb[0].mxu0
    %v1132 = vadd.f32 0.0, %v1131
    %v1133 = vpop.f32.mrb[0].mxu0
    %1134 = vmatprep.mubr.bf16.mxu0 0
    %1135 = vmatmul.mubr.bf16.gmra.mrb[0].mxu0 %v724
    %v1136 = vpop.f32.mrb[0].mxu0
    %v1137 = vadd.f32 0.0, %v1136
    %v1138 = vpop.f32.mrb[0].mxu0
    %v1139 = vpop.f32.mrb[0].mxu0
    %v1140 = vadd.f32 0.0, %v1139
    %v1141 = vpop.f32.mrb[0].mxu0
    %1142 = vmatprep.mubr.bf16.mxu0 0
    %1143 = vmatmul.mubr.bf16.gmra.mrb[0].mxu0 %v727
    %v1144 = vpop.f32.mrb[0].mxu0
    %v1145 = vadd.f32 0.0, %v1144
    %v1146 = vpop.f32.mrb[0].mxu0
    %v1147 = vpop.f32.mrb[0].mxu0
    %v1148 = vadd.f32 0.0, %v1147
    %v1149 = vpop.f32.mrb[0].mxu0
    %1150 = vmatprep.mubr.bf16.mxu0 0
    %1151 = vmatmul.mubr.bf16.gmra.mrb[0].mxu0 %v730
    %v1152 = vpop.f32.mrb[0].mxu0
    %v1153 = vadd.f32 0.0, %v1152
    %v1154 = vpop.f32.mrb[0].mxu0
    %v1155 = vpop.f32.mrb[0].mxu0
    %v1156 = vadd.f32 0.0, %v1155
    %v1157 = vpop.f32.mrb[0].mxu0
    %1158 = vmatprep.mubr.bf16.mxu0 0
    %1159 = vmatmul.mubr.bf16.gmra.mrb[0].mxu0 %v733
    %v1160 = vpop.f32.mrb[0].mxu0
    %v1161 = vadd.f32 0.0, %v1160
    %v1162 = vpop.f32.mrb[0].mxu0
    %v1163 = vpop.f32.mrb[0].mxu0
    %v1164 = vadd.f32 0.0, %v1163
    %v1165 = vpop.f32.mrb[0].mxu0
    %1166 = vmatprep.mubr.bf16.mxu0 0
    %1167 = vmatmul.mubr.bf16.gmra.mrb[0].mxu0 %v736
    %v1168 = vpop.f32.mrb[0].mxu0
    %v1169 = vadd.f32 0.0, %v1168
    %v1170 = vpop.f32.mrb[0].mxu0
    %v1171 = vpop.f32.mrb[0].mxu0
    %v1172 = vadd.f32 0.0, %v1171
    %v1173 = vpop.f32.mrb[0].mxu0
    %1174 = vmatprep.mubr.bf16.mxu0 0
    %1175 = vmatmul.mubr.bf16.gmra.mrb[0].mxu0 %v739
    %v1176 = vpop.f32.mrb[0].mxu0
    %v1177 = vadd.f32 0.0, %v1176
    %v1178 = vpop.f32.mrb[0].mxu0
    %v1179 = vpop.f32.mrb[0].mxu0
    %v1180 = vadd.f32 0.0, %v1179
    %v1181 = vpop.f32.mrb[0].mxu0
    %1182 = vmatprep.mubr.bf16.mxu0 0
    %1183 = vmatmul.mubr.bf16.gmra.mrb[0].mxu0 %v742
    %v1184 = vpop.f32.mrb[0].mxu0
    %v1185 = vadd.f32 0.0, %v1184
    %v1186 = vpop.f32.mrb[0].mxu0
    %v1187 = vpop.f32.mrb[0].mxu0
    %v1188 = vadd.f32 0.0, %v1187
    %v1189 = vpop.f32.mrb[0].mxu0
    %1190 = vmatprep.mubr.bf16.mxu0 0
    %1191 = vmatmul.mubr.bf16.gmra.mrb[0].mxu0 %v745
    %v1192 = vpop.f32.mrb[0].mxu0
    %v1193 = vadd.f32 0.0, %v1192
    %v1194 = vpop.f32.mrb[0].mxu0
    %v1195 = vpop.f32.mrb[0].mxu0
    %v1196 = vadd.f32 0.0, %v1195
    %v1197 = vpop.f32.mrb[0].mxu0
    %1198 = vmatprep.mubr.bf16.mxu0 0
    %1199 = vmatmul.mubr.bf16.gmra.mrb[0].mxu0 %v748
    %v1200 = vpop.f32.mrb[0].mxu0
    %v1201 = vadd.f32 0.0, %v1200
    %v1202 = vpop.f32.mrb[0].mxu0
    %v1203 = vpop.f32.mrb[0].mxu0
    %v1204 = vadd.f32 0.0, %v1203
    %v1205 = vpop.f32.mrb[0].mxu0
    %1206 = vmatprep.mubr.bf16.mxu0 0
    %1207 = vmatmul.mubr.bf16.gmra.mrb[0].mxu0 %v751
    %v1208 = vpop.f32.mrb[0].mxu0
    %v1209 = vadd.f32 0.0, %v1208
    %v1210 = vpop.f32.mrb[0].mxu0
    %v1211 = vpop.f32.mrb[0].mxu0
    %v1212 = vadd.f32 0.0, %v1211
    %v1213 = vpop.f32.mrb[0].mxu0
    %1214 = vmatprep.mubr.bf16.mxu0 0
    %1215 = vmatmul.mubr.bf16.gmra.mrb[0].mxu0 %v754
    %v1216 = vpop.f32.mrb[0].mxu0
    %v1217 = vadd.f32 0.0, %v1216
    %v1218 = vpop.f32.mrb[0].mxu0
    %v1219 = vpop.f32.mrb[0].mxu0
    %v1220 = vadd.f32 0.0, %v1219
    %v1221 = vpop.f32.mrb[0].mxu0
    %1222 = vmatprep.mubr.bf16.mxu0 0
    %1223 = vmatmul.mubr.bf16.gmra.mrb[0].mxu0 %v757
    %v1224 = vpop.f32.mrb[0].mxu0
    %v1225 = vadd.f32 0.0, %v1224
    %v1226 = vpop.f32.mrb[0].mxu0
    %v1227 = vpop.f32.mrb[0].mxu0
    %v1228 = vadd.f32 0.0, %v1227
    %v1229 = vpop.f32.mrb[0].mxu0
    %1230 = vmatprep.mubr.bf16.mxu0 0
    %1231 = vmatmul.mubr.bf16.gmra.mrb[0].mxu0 %v760
    %v1232 = vpop.f32.mrb[0].mxu0
    %v1233 = vadd.f32 0.0, %v1232
    %v1234 = vpop.f32.mrb[0].mxu0
    %v1235 = vpop.f32.mrb[0].mxu0
    %v1236 = vadd.f32 0.0, %v1235
    %v1237 = vpop.f32.mrb[0].mxu0
    %1238 = vmatprep.mubr.bf16.mxu0 0
    %1239 = vmatmul.mubr.bf16.gmra.mrb[0].mxu0 %v763
    %v1240 = vpop.f32.mrb[0].mxu0
    %v1241 = vadd.f32 0.0, %v1240
    %v1242 = vpop.f32.mrb[0].mxu0
    %v1243 = vpop.f32.mrb[0].mxu0
    %v1244 = vadd.f32 0.0, %v1243
    %v1245 = vpop.f32.mrb[0].mxu0
    %1246 = vmatprep.mubr.bf16.mxu0 0
    %1247 = vmatmul.mubr.bf16.gmra.mrb[0].mxu0 %v766
    %v1248 = vpop.f32.mrb[0].mxu0
    %v1249 = vadd.f32 0.0, %v1248
    %v1250 = vpop.f32.mrb[0].mxu0
    %v1251 = vpop.f32.mrb[0].mxu0
    %v1252 = vadd.f32 0.0, %v1251
    %v1253 = vpop.f32.mrb[0].mxu0
    %1254 = vmatprep.mubr.bf16.mxu0 0
    %1255 = vmatmul.mubr.bf16.gmra.mrb[0].mxu0 %v769
    %v1256 = vpop.f32.mrb[0].mxu0
    %v1257 = vadd.f32 0.0, %v1256
    %v1258 = vpop.f32.mrb[0].mxu0
    %v1259 = vpop.f32.mrb[0].mxu0
    %v1260 = vadd.f32 0.0, %v1259
    %v1261 = vpop.f32.mrb[0].mxu0
    %1262 = vmatprep.mubr.bf16.mxu0 0
    %1263 = vmatmul.mubr.bf16.gmra.mrb[0].mxu0 %v772
    %v1264 = vpop.f32.mrb[0].mxu0
    %v1265 = vadd.f32 0.0, %v1264
    %v1266 = vpop.f32.mrb[0].mxu0
    %v1267 = vpop.f32.mrb[0].mxu0
    %v1268 = vadd.f32 0.0, %v1267
    %v1269 = vpop.f32.mrb[0].mxu0
    %1270 = vmatprep.mubr.bf16.mxu0 0
    %1271 = vmatmul.mubr.bf16.gmra.mrb[0].mxu0 %v775
    %v1272 = vpop.f32.mrb[0].mxu0
    %v1273 = vadd.f32 0.0, %v1272
    %v1274 = vpop.f32.mrb[0].mxu0
    %v1275 = vpop.f32.mrb[0].mxu0
    %v1276 = vadd.f32 0.0, %v1275
    %v1277 = vpop.f32.mrb[0].mxu0
    %1278 = vmatprep.mubr.bf16.mxu0 0
    %1279 = vmatmul.mubr.bf16.gmra.mrb[0].mxu0 %v778
    %v1280 = vpop.f32.mrb[0].mxu0
    %v1281 = vadd.f32 0.0, %v1280
    %v1282 = vpop.f32.mrb[0].mxu0
    %v1283 = vpop.f32.mrb[0].mxu0
    %v1284 = vadd.f32 0.0, %v1283
    %v1285 = vpop.f32.mrb[0].mxu0
    %1286 = vmatprep.mubr.bf16.mxu0 0
    %1287 = vmatmul.mubr.bf16.gmra.mrb[0].mxu0 %v781
    %v1288 = vpop.f32.mrb[0].mxu0
    %v1289 = vadd.f32 0.0, %v1288
    %v1290 = vpop.f32.mrb[0].mxu0
    %v1291 = vpop.f32.mrb[0].mxu0
    %v1292 = vadd.f32 0.0, %v1291
    %v1293 = vpop.f32.mrb[0].mxu0
    %1294 = vmatprep.mubr.bf16.mxu0 0
    %1295 = vmatmul.mubr.bf16.gmra.mrb[0].mxu0 %v784
    %v1296 = vpop.f32.mrb[0].mxu0
    %v1297 = vadd.f32 0.0, %v1296
    %v1298 = vpop.f32.mrb[0].mxu0
    %v1299 = vpop.f32.mrb[0].mxu0
    %v1300 = vadd.f32 0.0, %v1299
    %v1301 = vpop.f32.mrb[0].mxu0
    %1302 = vmatprep.mubr.bf16.mxu0 0
    %1303 = vmatmul.mubr.bf16.gmra.mrb[0].mxu0 %v787
    %v1304 = vpop.f32.mrb[0].mxu0
    %v1305 = vadd.f32 0.0, %v1304
    %v1306 = vpop.f32.mrb[0].mxu0
    %v1307 = vpop.f32.mrb[0].mxu0
    %v1308 = vadd.f32 0.0, %v1307
    %v1309 = vpop.f32.mrb[0].mxu0
    %1310 = vmatprep.mubr.bf16.mxu0 0
    %1311 = vmatmul.mubr.bf16.gmra.mrb[0].mxu0 %v790
    %v1312 = vpop.f32.mrb[0].mxu0
    %v1313 = vadd.f32 0.0, %v1312
    %v1314 = vpop.f32.mrb[0].mxu0
    %v1315 = vpop.f32.mrb[0].mxu0
    %v1316 = vadd.f32 0.0, %v1315
    %v1317 = vpop.f32.mrb[0].mxu0
    %1318 = vmatprep.mubr.bf16.mxu0 0
    %1319 = vmatmul.mubr.bf16.gmra.mrb[0].mxu0 %v793
    %v1320 = vpop.f32.mrb[0].mxu0
    %v1321 = vadd.f32 0.0, %v1320
    %v1322 = vpop.f32.mrb[0].mxu0
    %v1323 = vpop.f32.mrb[0].mxu0
    %v1324 = vadd.f32 0.0, %v1323
    %v1325 = vpop.f32.mrb[0].mxu0
    %1326 = vmatprep.mubr.bf16.mxu0 0
    %1327 = vmatmul.mubr.bf16.gmra.mrb[0].mxu0 %v796
    %v1328 = vpop.f32.mrb[0].mxu0
    %v1329 = vadd.f32 0.0, %v1328
    %v1330 = vpop.f32.mrb[0].mxu0
    %v1331 = vpop.f32.mrb[0].mxu0
    %v1332 = vadd.f32 0.0, %v1331
    %v1333 = vpop.f32.mrb[0].mxu0
    %1334 = vmatprep.mubr.bf16.mxu0 0
    %1335 = vmatmul.mubr.bf16.gmra.mrb[0].mxu0 %v799
    %v1336 = vpop.f32.mrb[0].mxu0
    %v1337 = vadd.f32 0.0, %v1336
    %v1338 = vpop.f32.mrb[0].mxu0
    %v1339 = vpop.f32.mrb[0].mxu0
    %v1340 = vadd.f32 0.0, %v1339
    %v1341 = vpop.f32.mrb[0].mxu0
    %1342 = vmatprep.mubr.bf16.mxu0 0
    %1343 = vmatmul.mubr.bf16.gmra.mrb[0].mxu0 %v802
    %v1344 = vpop.f32.mrb[0].mxu0
    %v1345 = vadd.f32 0.0, %v1344
    %v1346 = vpop.f32.mrb[0].mxu0
    %v1347 = vpop.f32.mrb[0].mxu0
    %v1348 = vadd.f32 0.0, %v1347
    %v1349 = vpop.f32.mrb[0].mxu0
    %1350 = vmatprep.mubr.bf16.mxu0 0
    %1351 = vmatmul.mubr.bf16.gmra.mrb[0].mxu0 %v805
    %v1352 = vpop.f32.mrb[0].mxu0
    %v1353 = vadd.f32 0.0, %v1352
    %v1354 = vpop.f32.mrb[0].mxu0
    %v1355 = vpop.f32.mrb[0].mxu0
    %v1356 = vadd.f32 0.0, %v1355
    %v1357 = vpop.f32.mrb[0].mxu0
    %1358 = vdwg.mxu0
    %v1487 = vunpack.c.l.b16 %v36
    %v1488 = vunpack.c.l.b16 %v37
    %v1489 = vunpack.c.l.b16 %v38
    %v1490 = vunpack.c.l.b16 %v39
    %v1491 = vunpack.c.l.b16 %v40
    %v1492 = vunpack.c.l.b16 %v41
    %v1493 = vunpack.c.l.b16 %v42
    %v1494 = vunpack.c.l.b16 %v43
    %v1495 = vunpack.c.l.b16 %v44
    %v1496 = vunpack.c.l.b16 %v45
    %v1497 = vunpack.c.l.b16 %v46
    %v1498 = vunpack.c.l.b16 %v47
    %v1499 = vunpack.c.l.b16 %v48
    %v1500 = vunpack.c.l.b16 %v49
    %v1501 = vunpack.c.l.b16 %v50
    %v1502 = vunpack.c.l.b16 %v51
    %v1503 = vunpack.c.l.b16 %v52
    %v1504 = vunpack.c.l.b16 %v53
    %v1505 = vunpack.c.l.b16 %v54
    %v1506 = vunpack.c.l.b16 %v55
    %v1507 = vunpack.c.l.b16 %v56
    %v1508 = vunpack.c.l.b16 %v57
    %v1509 = vunpack.c.l.b16 %v58
    %v1510 = vunpack.c.l.b16 %v59
    %v1511 = vunpack.c.l.b16 %v60
    %v1512 = vunpack.c.l.b16 %v61
    %v1513 = vunpack.c.l.b16 %v62
    %v1514 = vunpack.c.l.b16 %v63
    %v1515 = vunpack.c.l.b16 %v64
    %v1516 = vunpack.c.l.b16 %v65
    %v1517 = vunpack.c.l.b16 %v66
    %v1518 = vunpack.c.l.b16 %v67
    %v1519 = vunpack.c.l.b16 %v68
    %v1520 = vunpack.c.l.b16 %v69
    %v1521 = vunpack.c.l.b16 %v70
    %v1522 = vunpack.c.l.b16 %v71
    %v1523 = vunpack.c.l.b16 %v72
    %v1524 = vunpack.c.l.b16 %v73
    %v1525 = vunpack.c.l.b16 %v74
    %v1526 = vunpack.c.l.b16 %v75
    %v1527 = vunpack.c.l.b16 %v76
    %v1528 = vunpack.c.l.b16 %v77
    %v1529 = vunpack.c.l.b16 %v78
    %v1530 = vunpack.c.l.b16 %v79
    %v1531 = vunpack.c.l.b16 %v80
    %v1532 = vunpack.c.l.b16 %v81
    %v1533 = vunpack.c.l.b16 %v82
    %v1534 = vunpack.c.l.b16 %v83
    %v1535 = vunpack.c.l.b16 %v84
    %v1536 = vunpack.c.l.b16 %v85
    %v1537 = vunpack.c.l.b16 %v86
    %v1538 = vunpack.c.l.b16 %v87
    %v1539 = vunpack.c.l.b16 %v88
    %v1540 = vunpack.c.l.b16 %v89
    %v1541 = vunpack.c.l.b16 %v90
    %v1542 = vunpack.c.l.b16 %v91
    %v1543 = vunpack.c.l.b16 %v92
    %v1544 = vunpack.c.l.b16 %v93
    %v1545 = vunpack.c.l.b16 %v94
    %v1546 = vunpack.c.l.b16 %v95
    %v1547 = vunpack.c.l.b16 %v96
    %v1548 = vunpack.c.l.b16 %v97
    %v1549 = vunpack.c.l.b16 %v98
    %v1550 = vunpack.c.l.b16 %v99
    %v1551 = vunpack.c.l.b16 %v100
    %v1552 = vunpack.c.l.b16 %v101
    %v1553 = vunpack.c.l.b16 %v102
    %v1554 = vunpack.c.l.b16 %v103
    %v1555 = vunpack.c.l.b16 %v104
    %v1556 = vunpack.c.l.b16 %v105
    %v1557 = vunpack.c.l.b16 %v106
    %v1558 = vunpack.c.l.b16 %v107
    %v1559 = vunpack.c.l.b16 %v108
    %v1560 = vunpack.c.l.b16 %v109
    %v1561 = vunpack.c.l.b16 %v110
    %v1562 = vunpack.c.l.b16 %v111
    %v1563 = vunpack.c.l.b16 %v112
    %v1564 = vunpack.c.l.b16 %v113
    %v1565 = vunpack.c.l.b16 %v114
    %v1566 = vunpack.c.l.b16 %v115
    %v1567 = vunpack.c.l.b16 %v116
    %v1568 = vunpack.c.l.b16 %v117
    %v1569 = vunpack.c.l.b16 %v118
    %v1570 = vunpack.c.l.b16 %v119
    %v1571 = vunpack.c.l.b16 %v120
    %v1572 = vunpack.c.l.b16 %v121
    %v1573 = vunpack.c.l.b16 %v122
    %v1574 = vunpack.c.l.b16 %v123
    %v1575 = vunpack.c.l.b16 %v124
    %v1576 = vunpack.c.l.b16 %v125
    %v1577 = vunpack.c.l.b16 %v126
    %v1578 = vunpack.c.l.b16 %v127
    %v1579 = vunpack.c.l.b16 %v128
    %v1580 = vunpack.c.l.b16 %v129
    %v1581 = vunpack.c.l.b16 %v130
    %v1582 = vunpack.c.l.b16 %v131
    %v1583 = vunpack.c.l.b16 %v132
    %v1584 = vunpack.c.l.b16 %v133
    %v1585 = vunpack.c.l.b16 %v134
    %v1586 = vunpack.c.l.b16 %v135
    %v1587 = vunpack.c.l.b16 %v136
    %v1588 = vunpack.c.l.b16 %v137
    %v1589 = vunpack.c.l.b16 %v138
    %v1590 = vunpack.c.l.b16 %v139
    %v1591 = vunpack.c.l.b16 %v140
    %v1592 = vunpack.c.l.b16 %v141
    %v1593 = vunpack.c.l.b16 %v142
    %v1594 = vunpack.c.l.b16 %v143
    %v1595 = vunpack.c.l.b16 %v144
    %v1596 = vunpack.c.l.b16 %v145
    %v1597 = vunpack.c.l.b16 %v146
    %v1598 = vunpack.c.l.b16 %v147
    %v1599 = vunpack.c.l.b16 %v148
    %v1600 = vunpack.c.l.b16 %v149
    %v1601 = vunpack.c.l.b16 %v150
    %v1602 = vunpack.c.l.b16 %v151
    %v1603 = vunpack.c.l.b16 %v152
    %v1604 = vunpack.c.l.b16 %v153
    %v1605 = vunpack.c.l.b16 %v154
    %v1606 = vunpack.c.l.b16 %v155
    %v1607 = vunpack.c.l.b16 %v156
    %v1608 = vunpack.c.l.b16 %v157
    %v1609 = vunpack.c.l.b16 %v158
    %v1610 = vunpack.c.l.b16 %v159
    %v1611 = vunpack.c.l.b16 %v160
    %v1612 = vunpack.c.l.b16 %v161
    %v1613 = vunpack.c.l.b16 %v162
    %v1614 = vunpack.c.l.b16 %v163
    %v1615 = vpack.c.b16 %v1488, %v1487
    %v1616 = vpack.c.b16 %v1490, %v1489
    %v1617 = vpack.c.b16 %v1492, %v1491
    %v1618 = vpack.c.b16 %v1494, %v1493
    %v1619 = vpack.c.b16 %v1496, %v1495
    %v1620 = vpack.c.b16 %v1498, %v1497
    %v1621 = vpack.c.b16 %v1500, %v1499
    %v1622 = vpack.c.b16 %v1502, %v1501
    %v1623 = vpack.c.b16 %v1504, %v1503
    %v1624 = vpack.c.b16 %v1506, %v1505
    %v1625 = vpack.c.b16 %v1508, %v1507
    %v1626 = vpack.c.b16 %v1510, %v1509
    %v1627 = vpack.c.b16 %v1512, %v1511
    %v1628 = vpack.c.b16 %v1514, %v1513
    %v1629 = vpack.c.b16 %v1516, %v1515
    %v1630 = vpack.c.b16 %v1518, %v1517
    %v1631 = vpack.c.b16 %v1520, %v1519
    %v1632 = vpack.c.b16 %v1522, %v1521
    %v1633 = vpack.c.b16 %v1524, %v1523
    %v1634 = vpack.c.b16 %v1526, %v1525
    %v1635 = vpack.c.b16 %v1528, %v1527
    %v1636 = vpack.c.b16 %v1530, %v1529
    %v1637 = vpack.c.b16 %v1532, %v1531
    %v1638 = vpack.c.b16 %v1534, %v1533
    %v1639 = vpack.c.b16 %v1536, %v1535
    %v1640 = vpack.c.b16 %v1538, %v1537
    %v1641 = vpack.c.b16 %v1540, %v1539
    %v1642 = vpack.c.b16 %v1542, %v1541
    %v1643 = vpack.c.b16 %v1544, %v1543
    %v1644 = vpack.c.b16 %v1546, %v1545
    %v1645 = vpack.c.b16 %v1548, %v1547
    %v1646 = vpack.c.b16 %v1550, %v1549
    %v1647 = vpack.c.b16 %v1552, %v1551
    %v1648 = vpack.c.b16 %v1554, %v1553
    %v1649 = vpack.c.b16 %v1556, %v1555
    %v1650 = vpack.c.b16 %v1558, %v1557
    %v1651 = vpack.c.b16 %v1560, %v1559
    %v1652 = vpack.c.b16 %v1562, %v1561
    %v1653 = vpack.c.b16 %v1564, %v1563
    %v1654 = vpack.c.b16 %v1566, %v1565
    %v1655 = vpack.c.b16 %v1568, %v1567
    %v1656 = vpack.c.b16 %v1570, %v1569
    %v1657 = vpack.c.b16 %v1572, %v1571
    %v1658 = vpack.c.b16 %v1574, %v1573
    %v1659 = vpack.c.b16 %v1576, %v1575
    %v1660 = vpack.c.b16 %v1578, %v1577
    %v1661 = vpack.c.b16 %v1580, %v1579
    %v1662 = vpack.c.b16 %v1582, %v1581
    %v1663 = vpack.c.b16 %v1584, %v1583
    %v1664 = vpack.c.b16 %v1586, %v1585
    %v1665 = vpack.c.b16 %v1588, %v1587
    %v1666 = vpack.c.b16 %v1590, %v1589
    %v1667 = vpack.c.b16 %v1592, %v1591
    %v1668 = vpack.c.b16 %v1594, %v1593
    %v1669 = vpack.c.b16 %v1596, %v1595
    %v1670 = vpack.c.b16 %v1598, %v1597
    %v1671 = vpack.c.b16 %v1600, %v1599
    %v1672 = vpack.c.b16 %v1602, %v1601
    %v1673 = vpack.c.b16 %v1604, %v1603
    %v1674 = vpack.c.b16 %v1606, %v1605
    %v1675 = vpack.c.b16 %v1608, %v1607
    %v1676 = vpack.c.b16 %v1610, %v1609
    %v1677 = vpack.c.b16 %v1612, %v1611
    %v1678 = vpack.c.b16 %v1614, %v1613
    %vm1679 = vcmask 31744
    %v1681 = vsel %vm1679, %v1615, 0
    %v1684 = vsel %vm1679, %v1616, 0
    %v1687 = vsel %vm1679, %v1617, 0
    %v1690 = vsel %vm1679, %v1618, 0
    %v1693 = vsel %vm1679, %v1619, 0
    %v1696 = vsel %vm1679, %v1620, 0
    %v1699 = vsel %vm1679, %v1621, 0
    %v1702 = vsel %vm1679, %v1622, 0
    %v1705 = vsel %vm1679, %v1623, 0
    %v1708 = vsel %vm1679, %v1624, 0
    %v1711 = vsel %vm1679, %v1625, 0
    %v1714 = vsel %vm1679, %v1626, 0
    %v1717 = vsel %vm1679, %v1627, 0
    %v1720 = vsel %vm1679, %v1628, 0
    %v1723 = vsel %vm1679, %v1629, 0
    %v1726 = vsel %vm1679, %v1630, 0
    %v1729 = vsel %vm1679, %v1631, 0
    %v1732 = vsel %vm1679, %v1632, 0
    %v1735 = vsel %vm1679, %v1633, 0
    %v1738 = vsel %vm1679, %v1634, 0
    %v1741 = vsel %vm1679, %v1635, 0
    %v1744 = vsel %vm1679, %v1636, 0
    %v1747 = vsel %vm1679, %v1637, 0
    %v1750 = vsel %vm1679, %v1638, 0
    %v1753 = vsel %vm1679, %v1639, 0
    %v1756 = vsel %vm1679, %v1640, 0
    %v1759 = vsel %vm1679, %v1641, 0
    %v1762 = vsel %vm1679, %v1642, 0
    %v1765 = vsel %vm1679, %v1643, 0
    %v1768 = vsel %vm1679, %v1644, 0
    %v1771 = vsel %vm1679, %v1645, 0
    %v1774 = vsel %vm1679, %v1646, 0
    %v1777 = vsel %vm1679, %v1647, 0
    %v1780 = vsel %vm1679, %v1648, 0
    %v1783 = vsel %vm1679, %v1649, 0
    %v1786 = vsel %vm1679, %v1650, 0
    %v1789 = vsel %vm1679, %v1651, 0
    %v1792 = vsel %vm1679, %v1652, 0
    %v1795 = vsel %vm1679, %v1653, 0
    %v1798 = vsel %vm1679, %v1654, 0
    %v1801 = vsel %vm1679, %v1655, 0
    %v1804 = vsel %vm1679, %v1656, 0
    %v1807 = vsel %vm1679, %v1657, 0
    %v1810 = vsel %vm1679, %v1658, 0
    %v1813 = vsel %vm1679, %v1659, 0
    %v1816 = vsel %vm1679, %v1660, 0
    %v1819 = vsel %vm1679, %v1661, 0
    %v1822 = vsel %vm1679, %v1662, 0
    %v1825 = vsel %vm1679, %v1663, 0
    %v1828 = vsel %vm1679, %v1664, 0
    %v1831 = vsel %vm1679, %v1665, 0
    %v1834 = vsel %vm1679, %v1666, 0
    %v1837 = vsel %vm1679, %v1667, 0
    %v1840 = vsel %vm1679, %v1668, 0
    %v1843 = vsel %vm1679, %v1669, 0
    %v1846 = vsel %vm1679, %v1670, 0
    %v1849 = vsel %vm1679, %v1671, 0
    %v1852 = vsel %vm1679, %v1672, 0
    %v1855 = vsel %vm1679, %v1673, 0
    %v1858 = vsel %vm1679, %v1674, 0
    %v1861 = vsel %vm1679, %v1675, 0
    %v1864 = vsel %vm1679, %v1676, 0
    %v1867 = vsel %vm1679, %v1677, 0
    %v1870 = vsel %vm1679, %v1678, 0
    %v1873 = vsel %vm808, %v164, 0
    %1875 = vmatprep.subr.bf16.mxu0 0
    %1876 = vmatpush1.bf16.msra.mxu0 %v1873
    %1877 = vmatprep.subr.bf16.mxu0 0
    %1878 = vmatpush1.bf16.msra.mxu0 0
    %1879 = vmatprep.subr.bf16.mxu0 0
    %1880 = vmatpush1.bf16.msra.mxu0 0
    %1881 = vmatprep.subr.bf16.mxu0 0
    %1882 = vmatpush1.bf16.msra.mxu0 0
    %1883 = vmatprep.subr.bf16.mxu0 0
    %1884 = vmatpush1.bf16.msra.mxu0 0
    %1885 = vmatprep.subr.bf16.mxu0 0
    %1886 = vmatpush1.bf16.msra.mxu0 0
    %1887 = vmatprep.subr.bf16.mxu0 0
    %1888 = vmatpush1.bf16.msra.mxu0 0
    %1889 = vmatprep.subr.bf16.mxu0 0
    %1890 = vmatpush1.bf16.msra.mxu0 0
    %1891 = vmatprep.subr.bf16.mxu0 0
    %1892 = vmatpush1.bf16.msra.mxu0 0
    %1893 = vmatprep.subr.bf16.mxu0 0
    %1894 = vmatpush1.bf16.msra.mxu0 0
    %1895 = vmatprep.subr.bf16.mxu0 0
    %1896 = vmatpush1.bf16.msra.mxu0 0
    %1897 = vmatprep.subr.bf16.mxu0 0
    %1898 = vmatpush1.bf16.msra.mxu0 0
    %1899 = vmatprep.subr.bf16.mxu0 0
    %1900 = vmatpush1.bf16.msra.mxu0 0
    %1901 = vmatprep.subr.bf16.mxu0 0
    %1902 = vmatpush1.bf16.msra.mxu0 0
    %1903 = vmatprep.subr.bf16.mxu0 0
    %1904 = vmatpush1.bf16.msra.mxu0 0
    %1905 = vmatprep.subr.bf16.mxu0 0
    %1906 = vmatpush1.bf16.msra.mxu0 0
    %1907 = vmatprep.mubr.bf16.mxu0 0
    %1908 = vmatmul.mubr.bf16.gmra.mrb[0].mxu0 %v1681
    %v1909 = vpop.f32.mrb[0].mxu0
    %v1910 = vadd.f32 %v849, %v1909
    %v1911 = vpop.f32.mrb[0].mxu0
    %v1912 = vpop.f32.mrb[0].mxu0
    %v1913 = vadd.f32 %v852, %v1912
    %v1914 = vpop.f32.mrb[0].mxu0
    %1915 = vmatprep.mubr.bf16.mxu0 0
    %1916 = vmatmul.mubr.bf16.gmra.mrb[0].mxu0 %v1684
    %v1917 = vpop.f32.mrb[0].mxu0
    %v1918 = vadd.f32 %v857, %v1917
    %v1919 = vpop.f32.mrb[0].mxu0
    %v1920 = vpop.f32.mrb[0].mxu0
    %v1921 = vadd.f32 %v860, %v1920
    %v1922 = vpop.f32.mrb[0].mxu0
    %1923 = vmatprep.mubr.bf16.mxu0 0
    %1924 = vmatmul.mubr.bf16.gmra.mrb[0].mxu0 %v1687
    %v1925 = vpop.f32.mrb[0].mxu0
    %v1926 = vadd.f32 %v865, %v1925
    %v1927 = vpop.f32.mrb[0].mxu0
    %v1928 = vpop.f32.mrb[0].mxu0
    %v1929 = vadd.f32 %v868, %v1928
    %v1930 = vpop.f32.mrb[0].mxu0
    %1931 = vmatprep.mubr.bf16.mxu0 0
    %1932 = vmatmul.mubr.bf16.gmra.mrb[0].mxu0 %v1690
    %v1933 = vpop.f32.mrb[0].mxu0
    %v1934 = vadd.f32 %v873, %v1933
    %v1935 = vpop.f32.mrb[0].mxu0
    %v1936 = vpop.f32.mrb[0].mxu0
    %v1937 = vadd.f32 %v876, %v1936
    %v1938 = vpop.f32.mrb[0].mxu0
    %1939 = vmatprep.mubr.bf16.mxu0 0
    %1940 = vmatmul.mubr.bf16.gmra.mrb[0].mxu0 %v1693
    %v1941 = vpop.f32.mrb[0].mxu0
    %v1942 = vadd.f32 %v881, %v1941
    %v1943 = vpop.f32.mrb[0].mxu0
    %v1944 = vpop.f32.mrb[0].mxu0
    %v1945 = vadd.f32 %v884, %v1944
    %v1946 = vpop.f32.mrb[0].mxu0
    %1947 = vmatprep.mubr.bf16.mxu0 0
    %1948 = vmatmul.mubr.bf16.gmra.mrb[0].mxu0 %v1696
    %v1949 = vpop.f32.mrb[0].mxu0
    %v1950 = vadd.f32 %v889, %v1949
    %v1951 = vpop.f32.mrb[0].mxu0
    %v1952 = vpop.f32.mrb[0].mxu0
    %v1953 = vadd.f32 %v892, %v1952
    %v1954 = vpop.f32.mrb[0].mxu0
    %1955 = vmatprep.mubr.bf16.mxu0 0
    %1956 = vmatmul.mubr.bf16.gmra.mrb[0].mxu0 %v1699
    %v1957 = vpop.f32.mrb[0].mxu0
    %v1958 = vadd.f32 %v897, %v1957
    %v1959 = vpop.f32.mrb[0].mxu0
    %v1960 = vpop.f32.mrb[0].mxu0
    %v1961 = vadd.f32 %v900, %v1960
    %v1962 = vpop.f32.mrb[0].mxu0
    %1963 = vmatprep.mubr.bf16.mxu0 0
    %1964 = vmatmul.mubr.bf16.gmra.mrb[0].mxu0 %v1702
    %v1965 = vpop.f32.mrb[0].mxu0
    %v1966 = vadd.f32 %v905, %v1965
    %v1967 = vpop.f32.mrb[0].mxu0
    %v1968 = vpop.f32.mrb[0].mxu0
    %v1969 = vadd.f32 %v908, %v1968
    %v1970 = vpop.f32.mrb[0].mxu0
    %1971 = vmatprep.mubr.bf16.mxu0 0
    %1972 = vmatmul.mubr.bf16.gmra.mrb[0].mxu0 %v1705
    %v1973 = vpop.f32.mrb[0].mxu0
    %v1974 = vadd.f32 %v913, %v1973
    %v1975 = vpop.f32.mrb[0].mxu0
    %v1976 = vpop.f32.mrb[0].mxu0
    %v1977 = vadd.f32 %v916, %v1976
    %v1978 = vpop.f32.mrb[0].mxu0
    %1979 = vmatprep.mubr.bf16.mxu0 0
    %1980 = vmatmul.mubr.bf16.gmra.mrb[0].mxu0 %v1708
    %v1981 = vpop.f32.mrb[0].mxu0
    %v1982 = vadd.f32 %v921, %v1981
    %v1983 = vpop.f32.mrb[0].mxu0
    %v1984 = vpop.f32.mrb[0].mxu0
    %v1985 = vadd.f32 %v924, %v1984
    %v1986 = vpop.f32.mrb[0].mxu0
    %1987 = vmatprep.mubr.bf16.mxu0 0
    %1988 = vmatmul.mubr.bf16.gmra.mrb[0].mxu0 %v1711
    %v1989 = vpop.f32.mrb[0].mxu0
    %v1990 = vadd.f32 %v929, %v1989
    %v1991 = vpop.f32.mrb[0].mxu0
    %v1992 = vpop.f32.mrb[0].mxu0
    %v1993 = vadd.f32 %v932, %v1992
    %v1994 = vpop.f32.mrb[0].mxu0
    %1995 = vmatprep.mubr.bf16.mxu0 0
    %1996 = vmatmul.mubr.bf16.gmra.mrb[0].mxu0 %v1714
    %v1997 = vpop.f32.mrb[0].mxu0
    %v1998 = vadd.f32 %v937, %v1997
    %v1999 = vpop.f32.mrb[0].mxu0
    %v2000 = vpop.f32.mrb[0].mxu0
    %v2001 = vadd.f32 %v940, %v2000
    %v2002 = vpop.f32.mrb[0].mxu0
    %2003 = vmatprep.mubr.bf16.mxu0 0
    %2004 = vmatmul.mubr.bf16.gmra.mrb[0].mxu0 %v1717
    %v2005 = vpop.f32.mrb[0].mxu0
    %v2006 = vadd.f32 %v945, %v2005
    %v2007 = vpop.f32.mrb[0].mxu0
    %v2008 = vpop.f32.mrb[0].mxu0
    %v2009 = vadd.f32 %v948, %v2008
    %v2010 = vpop.f32.mrb[0].mxu0
    %2011 = vmatprep.mubr.bf16.mxu0 0
    %2012 = vmatmul.mubr.bf16.gmra.mrb[0].mxu0 %v1720
    %v2013 = vpop.f32.mrb[0].mxu0
    %v2014 = vadd.f32 %v953, %v2013
    %v2015 = vpop.f32.mrb[0].mxu0
    %v2016 = vpop.f32.mrb[0].mxu0
    %v2017 = vadd.f32 %v956, %v2016
    %v2018 = vpop.f32.mrb[0].mxu0
    %2019 = vmatprep.mubr.bf16.mxu0 0
    %2020 = vmatmul.mubr.bf16.gmra.mrb[0].mxu0 %v1723
    %v2021 = vpop.f32.mrb[0].mxu0
    %v2022 = vadd.f32 %v961, %v2021
    %v2023 = vpop.f32.mrb[0].mxu0
    %v2024 = vpop.f32.mrb[0].mxu0
    %v2025 = vadd.f32 %v964, %v2024
    %v2026 = vpop.f32.mrb[0].mxu0
    %2027 = vmatprep.mubr.bf16.mxu0 0
    %2028 = vmatmul.mubr.bf16.gmra.mrb[0].mxu0 %v1726
    %v2029 = vpop.f32.mrb[0].mxu0
    %v2030 = vadd.f32 %v969, %v2029
    %v2031 = vpop.f32.mrb[0].mxu0
    %v2032 = vpop.f32.mrb[0].mxu0
    %v2033 = vadd.f32 %v972, %v2032
    %v2034 = vpop.f32.mrb[0].mxu0
    %2035 = vmatprep.mubr.bf16.mxu0 0
    %2036 = vmatmul.mubr.bf16.gmra.mrb[0].mxu0 %v1729
    %v2037 = vpop.f32.mrb[0].mxu0
    %v2038 = vadd.f32 %v977, %v2037
    %v2039 = vpop.f32.mrb[0].mxu0
    %v2040 = vpop.f32.mrb[0].mxu0
    %v2041 = vadd.f32 %v980, %v2040
    %v2042 = vpop.f32.mrb[0].mxu0
    %2043 = vmatprep.mubr.bf16.mxu0 0
    %2044 = vmatmul.mubr.bf16.gmra.mrb[0].mxu0 %v1732
    %v2045 = vpop.f32.mrb[0].mxu0
    %v2046 = vadd.f32 %v985, %v2045
    %v2047 = vpop.f32.mrb[0].mxu0
    %v2048 = vpop.f32.mrb[0].mxu0
    %v2049 = vadd.f32 %v988, %v2048
    %v2050 = vpop.f32.mrb[0].mxu0
    %2051 = vmatprep.mubr.bf16.mxu0 0
    %2052 = vmatmul.mubr.bf16.gmra.mrb[0].mxu0 %v1735
    %v2053 = vpop.f32.mrb[0].mxu0
    %v2054 = vadd.f32 %v993, %v2053
    %v2055 = vpop.f32.mrb[0].mxu0
    %v2056 = vpop.f32.mrb[0].mxu0
    %v2057 = vadd.f32 %v996, %v2056
    %v2058 = vpop.f32.mrb[0].mxu0
    %2059 = vmatprep.mubr.bf16.mxu0 0
    %2060 = vmatmul.mubr.bf16.gmra.mrb[0].mxu0 %v1738
    %v2061 = vpop.f32.mrb[0].mxu0
    %v2062 = vadd.f32 %v1001, %v2061
    %v2063 = vpop.f32.mrb[0].mxu0
    %v2064 = vpop.f32.mrb[0].mxu0
    %v2065 = vadd.f32 %v1004, %v2064
    %v2066 = vpop.f32.mrb[0].mxu0
    %2067 = vmatprep.mubr.bf16.mxu0 0
    %2068 = vmatmul.mubr.bf16.gmra.mrb[0].mxu0 %v1741
    %v2069 = vpop.f32.mrb[0].mxu0
    %v2070 = vadd.f32 %v1009, %v2069
    %v2071 = vpop.f32.mrb[0].mxu0
    %v2072 = vpop.f32.mrb[0].mxu0
    %v2073 = vadd.f32 %v1012, %v2072
    %v2074 = vpop.f32.mrb[0].mxu0
    %2075 = vmatprep.mubr.bf16.mxu0 0
    %2076 = vmatmul.mubr.bf16.gmra.mrb[0].mxu0 %v1744
    %v2077 = vpop.f32.mrb[0].mxu0
    %v2078 = vadd.f32 %v1017, %v2077
    %v2079 = vpop.f32.mrb[0].mxu0
    %v2080 = vpop.f32.mrb[0].mxu0
    %v2081 = vadd.f32 %v1020, %v2080
    %v2082 = vpop.f32.mrb[0].mxu0
    %2083 = vmatprep.mubr.bf16.mxu0 0
    %2084 = vmatmul.mubr.bf16.gmra.mrb[0].mxu0 %v1747
    %v2085 = vpop.f32.mrb[0].mxu0
    %v2086 = vadd.f32 %v1025, %v2085
    %v2087 = vpop.f32.mrb[0].mxu0
    %v2088 = vpop.f32.mrb[0].mxu0
    %v2089 = vadd.f32 %v1028, %v2088
    %v2090 = vpop.f32.mrb[0].mxu0
    %2091 = vmatprep.mubr.bf16.mxu0 0
    %2092 = vmatmul.mubr.bf16.gmra.mrb[0].mxu0 %v1750
    %v2093 = vpop.f32.mrb[0].mxu0
    %v2094 = vadd.f32 %v1033, %v2093
    %v2095 = vpop.f32.mrb[0].mxu0
    %v2096 = vpop.f32.mrb[0].mxu0
    %v2097 = vadd.f32 %v1036, %v2096
    %v2098 = vpop.f32.mrb[0].mxu0
    %2099 = vmatprep.mubr.bf16.mxu0 0
    %2100 = vmatmul.mubr.bf16.gmra.mrb[0].mxu0 %v1753
    %v2101 = vpop.f32.mrb[0].mxu0
    %v2102 = vadd.f32 %v1041, %v2101
    %v2103 = vpop.f32.mrb[0].mxu0
    %v2104 = vpop.f32.mrb[0].mxu0
    %v2105 = vadd.f32 %v1044, %v2104
    %v2106 = vpop.f32.mrb[0].mxu0
    %2107 = vmatprep.mubr.bf16.mxu0 0
    %2108 = vmatmul.mubr.bf16.gmra.mrb[0].mxu0 %v1756
    %v2109 = vpop.f32.mrb[0].mxu0
    %v2110 = vadd.f32 %v1049, %v2109
    %v2111 = vpop.f32.mrb[0].mxu0
    %v2112 = vpop.f32.mrb[0].mxu0
    %v2113 = vadd.f32 %v1052, %v2112
    %v2114 = vpop.f32.mrb[0].mxu0
    %2115 = vmatprep.mubr.bf16.mxu0 0
    %2116 = vmatmul.mubr.bf16.gmra.mrb[0].mxu0 %v1759
    %v2117 = vpop.f32.mrb[0].mxu0
    %v2118 = vadd.f32 %v1057, %v2117
    %v2119 = vpop.f32.mrb[0].mxu0
    %v2120 = vpop.f32.mrb[0].mxu0
    %v2121 = vadd.f32 %v1060, %v2120
    %v2122 = vpop.f32.mrb[0].mxu0
    %2123 = vmatprep.mubr.bf16.mxu0 0
    %2124 = vmatmul.mubr.bf16.gmra.mrb[0].mxu0 %v1762
    %v2125 = vpop.f32.mrb[0].mxu0
    %v2126 = vadd.f32 %v1065, %v2125
    %v2127 = vpop.f32.mrb[0].mxu0
    %v2128 = vpop.f32.mrb[0].mxu0
    %v2129 = vadd.f32 %v1068, %v2128
    %v2130 = vpop.f32.mrb[0].mxu0
    %2131 = vmatprep.mubr.bf16.mxu0 0
    %2132 = vmatmul.mubr.bf16.gmra.mrb[0].mxu0 %v1765
    %v2133 = vpop.f32.mrb[0].mxu0
    %v2134 = vadd.f32 %v1073, %v2133
    %v2135 = vpop.f32.mrb[0].mxu0
    %v2136 = vpop.f32.mrb[0].mxu0
    %v2137 = vadd.f32 %v1076, %v2136
    %v2138 = vpop.f32.mrb[0].mxu0
    %2139 = vmatprep.mubr.bf16.mxu0 0
    %2140 = vmatmul.mubr.bf16.gmra.mrb[0].mxu0 %v1768
    %v2141 = vpop.f32.mrb[0].mxu0
    %v2142 = vadd.f32 %v1081, %v2141
    %v2143 = vpop.f32.mrb[0].mxu0
    %v2144 = vpop.f32.mrb[0].mxu0
    %v2145 = vadd.f32 %v1084, %v2144
    %v2146 = vpop.f32.mrb[0].mxu0
    %2147 = vmatprep.mubr.bf16.mxu0 0
    %2148 = vmatmul.mubr.bf16.gmra.mrb[0].mxu0 %v1771
    %v2149 = vpop.f32.mrb[0].mxu0
    %v2150 = vadd.f32 %v1089, %v2149
    %v2151 = vpop.f32.mrb[0].mxu0
    %v2152 = vpop.f32.mrb[0].mxu0
    %v2153 = vadd.f32 %v1092, %v2152
    %v2154 = vpop.f32.mrb[0].mxu0
    %2155 = vmatprep.mubr.bf16.mxu0 0
    %2156 = vmatmul.mubr.bf16.gmra.mrb[0].mxu0 %v1774
    %v2157 = vpop.f32.mrb[0].mxu0
    %v2158 = vadd.f32 %v1097, %v2157
    %v2159 = vpop.f32.mrb[0].mxu0
    %v2160 = vpop.f32.mrb[0].mxu0
    %v2161 = vadd.f32 %v1100, %v2160
    %v2162 = vpop.f32.mrb[0].mxu0
    %2163 = vmatprep.mubr.bf16.mxu0 0
    %2164 = vmatmul.mubr.bf16.gmra.mrb[0].mxu0 %v1777
    %v2165 = vpop.f32.mrb[0].mxu0
    %v2166 = vadd.f32 %v1105, %v2165
    %v2167 = vpop.f32.mrb[0].mxu0
    %v2168 = vpop.f32.mrb[0].mxu0
    %v2169 = vadd.f32 %v1108, %v2168
    %v2170 = vpop.f32.mrb[0].mxu0
    %2171 = vmatprep.mubr.bf16.mxu0 0
    %2172 = vmatmul.mubr.bf16.gmra.mrb[0].mxu0 %v1780
    %v2173 = vpop.f32.mrb[0].mxu0
    %v2174 = vadd.f32 %v1113, %v2173
    %v2175 = vpop.f32.mrb[0].mxu0
    %v2176 = vpop.f32.mrb[0].mxu0
    %v2177 = vadd.f32 %v1116, %v2176
    %v2178 = vpop.f32.mrb[0].mxu0
    %2179 = vmatprep.mubr.bf16.mxu0 0
    %2180 = vmatmul.mubr.bf16.gmra.mrb[0].mxu0 %v1783
    %v2181 = vpop.f32.mrb[0].mxu0
    %v2182 = vadd.f32 %v1121, %v2181
    %v2183 = vpop.f32.mrb[0].mxu0
    %v2184 = vpop.f32.mrb[0].mxu0
    %v2185 = vadd.f32 %v1124, %v2184
    %v2186 = vpop.f32.mrb[0].mxu0
    %2187 = vmatprep.mubr.bf16.mxu0 0
    %2188 = vmatmul.mubr.bf16.gmra.mrb[0].mxu0 %v1786
    %v2189 = vpop.f32.mrb[0].mxu0
    %v2190 = vadd.f32 %v1129, %v2189
    %v2191 = vpop.f32.mrb[0].mxu0
    %v2192 = vpop.f32.mrb[0].mxu0
    %v2193 = vadd.f32 %v1132, %v2192
    %v2194 = vpop.f32.mrb[0].mxu0
    %2195 = vmatprep.mubr.bf16.mxu0 0
    %2196 = vmatmul.mubr.bf16.gmra.mrb[0].mxu0 %v1789
    %v2197 = vpop.f32.mrb[0].mxu0
    %v2198 = vadd.f32 %v1137, %v2197
    %v2199 = vpop.f32.mrb[0].mxu0
    %v2200 = vpop.f32.mrb[0].mxu0
    %v2201 = vadd.f32 %v1140, %v2200
    %v2202 = vpop.f32.mrb[0].mxu0
    %2203 = vmatprep.mubr.bf16.mxu0 0
    %2204 = vmatmul.mubr.bf16.gmra.mrb[0].mxu0 %v1792
    %v2205 = vpop.f32.mrb[0].mxu0
    %v2206 = vadd.f32 %v1145, %v2205
    %v2207 = vpop.f32.mrb[0].mxu0
    %v2208 = vpop.f32.mrb[0].mxu0
    %v2209 = vadd.f32 %v1148, %v2208
    %v2210 = vpop.f32.mrb[0].mxu0
    %2211 = vmatprep.mubr.bf16.mxu0 0
    %2212 = vmatmul.mubr.bf16.gmra.mrb[0].mxu0 %v1795
    %v2213 = vpop.f32.mrb[0].mxu0
    %v2214 = vadd.f32 %v1153, %v2213
    %v2215 = vpop.f32.mrb[0].mxu0
    %v2216 = vpop.f32.mrb[0].mxu0
    %v2217 = vadd.f32 %v1156, %v2216
    %v2218 = vpop.f32.mrb[0].mxu0
    %2219 = vmatprep.mubr.bf16.mxu0 0
    %2220 = vmatmul.mubr.bf16.gmra.mrb[0].mxu0 %v1798
    %v2221 = vpop.f32.mrb[0].mxu0
    %v2222 = vadd.f32 %v1161, %v2221
    %v2223 = vpop.f32.mrb[0].mxu0
    %v2224 = vpop.f32.mrb[0].mxu0
    %v2225 = vadd.f32 %v1164, %v2224
    %v2226 = vpop.f32.mrb[0].mxu0
    %2227 = vmatprep.mubr.bf16.mxu0 0
    %2228 = vmatmul.mubr.bf16.gmra.mrb[0].mxu0 %v1801
    %v2229 = vpop.f32.mrb[0].mxu0
    %v2230 = vadd.f32 %v1169, %v2229
    %v2231 = vpop.f32.mrb[0].mxu0
    %v2232 = vpop.f32.mrb[0].mxu0
    %v2233 = vadd.f32 %v1172, %v2232
    %v2234 = vpop.f32.mrb[0].mxu0
    %2235 = vmatprep.mubr.bf16.mxu0 0
    %2236 = vmatmul.mubr.bf16.gmra.mrb[0].mxu0 %v1804
    %v2237 = vpop.f32.mrb[0].mxu0
    %v2238 = vadd.f32 %v1177, %v2237
    %v2239 = vpop.f32.mrb[0].mxu0
    %v2240 = vpop.f32.mrb[0].mxu0
    %v2241 = vadd.f32 %v1180, %v2240
    %v2242 = vpop.f32.mrb[0].mxu0
    %2243 = vmatprep.mubr.bf16.mxu0 0
    %2244 = vmatmul.mubr.bf16.gmra.mrb[0].mxu0 %v1807
    %v2245 = vpop.f32.mrb[0].mxu0
    %v2246 = vadd.f32 %v1185, %v2245
    %v2247 = vpop.f32.mrb[0].mxu0
    %v2248 = vpop.f32.mrb[0].mxu0
    %v2249 = vadd.f32 %v1188, %v2248
    %v2250 = vpop.f32.mrb[0].mxu0
    %2251 = vmatprep.mubr.bf16.mxu0 0
    %2252 = vmatmul.mubr.bf16.gmra.mrb[0].mxu0 %v1810
    %v2253 = vpop.f32.mrb[0].mxu0
    %v2254 = vadd.f32 %v1193, %v2253
    %v2255 = vpop.f32.mrb[0].mxu0
    %v2256 = vpop.f32.mrb[0].mxu0
    %v2257 = vadd.f32 %v1196, %v2256
    %v2258 = vpop.f32.mrb[0].mxu0
    %2259 = vmatprep.mubr.bf16.mxu0 0
    %2260 = vmatmul.mubr.bf16.gmra.mrb[0].mxu0 %v1813
    %v2261 = vpop.f32.mrb[0].mxu0
    %v2262 = vadd.f32 %v1201, %v2261
    %v2263 = vpop.f32.mrb[0].mxu0
    %v2264 = vpop.f32.mrb[0].mxu0
    %v2265 = vadd.f32 %v1204, %v2264
    %v2266 = vpop.f32.mrb[0].mxu0
    %2267 = vmatprep.mubr.bf16.mxu0 0
    %2268 = vmatmul.mubr.bf16.gmra.mrb[0].mxu0 %v1816
    %v2269 = vpop.f32.mrb[0].mxu0
    %v2270 = vadd.f32 %v1209, %v2269
    %v2271 = vpop.f32.mrb[0].mxu0
    %v2272 = vpop.f32.mrb[0].mxu0
    %v2273 = vadd.f32 %v1212, %v2272
    %v2274 = vpop.f32.mrb[0].mxu0
    %2275 = vmatprep.mubr.bf16.mxu0 0
    %2276 = vmatmul.mubr.bf16.gmra.mrb[0].mxu0 %v1819
    %v2277 = vpop.f32.mrb[0].mxu0
    %v2278 = vadd.f32 %v1217, %v2277
    %v2279 = vpop.f32.mrb[0].mxu0
    %v2280 = vpop.f32.mrb[0].mxu0
    %v2281 = vadd.f32 %v1220, %v2280
    %v2282 = vpop.f32.mrb[0].mxu0
    %2283 = vmatprep.mubr.bf16.mxu0 0
    %2284 = vmatmul.mubr.bf16.gmra.mrb[0].mxu0 %v1822
    %v2285 = vpop.f32.mrb[0].mxu0
    %v2286 = vadd.f32 %v1225, %v2285
    %v2287 = vpop.f32.mrb[0].mxu0
    %v2288 = vpop.f32.mrb[0].mxu0
    %v2289 = vadd.f32 %v1228, %v2288
    %v2290 = vpop.f32.mrb[0].mxu0
    %2291 = vmatprep.mubr.bf16.mxu0 0
    %2292 = vmatmul.mubr.bf16.gmra.mrb[0].mxu0 %v1825
    %v2293 = vpop.f32.mrb[0].mxu0
    %v2294 = vadd.f32 %v1233, %v2293
    %v2295 = vpop.f32.mrb[0].mxu0
    %v2296 = vpop.f32.mrb[0].mxu0
    %v2297 = vadd.f32 %v1236, %v2296
    %v2298 = vpop.f32.mrb[0].mxu0
    %2299 = vmatprep.mubr.bf16.mxu0 0
    %2300 = vmatmul.mubr.bf16.gmra.mrb[0].mxu0 %v1828
    %v2301 = vpop.f32.mrb[0].mxu0
    %v2302 = vadd.f32 %v1241, %v2301
    %v2303 = vpop.f32.mrb[0].mxu0
    %v2304 = vpop.f32.mrb[0].mxu0
    %v2305 = vadd.f32 %v1244, %v2304
    %v2306 = vpop.f32.mrb[0].mxu0
    %2307 = vmatprep.mubr.bf16.mxu0 0
    %2308 = vmatmul.mubr.bf16.gmra.mrb[0].mxu0 %v1831
    %v2309 = vpop.f32.mrb[0].mxu0
    %v2310 = vadd.f32 %v1249, %v2309
    %v2311 = vpop.f32.mrb[0].mxu0
    %v2312 = vpop.f32.mrb[0].mxu0
    %v2313 = vadd.f32 %v1252, %v2312
    %v2314 = vpop.f32.mrb[0].mxu0
    %2315 = vmatprep.mubr.bf16.mxu0 0
    %2316 = vmatmul.mubr.bf16.gmra.mrb[0].mxu0 %v1834
    %v2317 = vpop.f32.mrb[0].mxu0
    %v2318 = vadd.f32 %v1257, %v2317
    %v2319 = vpop.f32.mrb[0].mxu0
    %v2320 = vpop.f32.mrb[0].mxu0
    %v2321 = vadd.f32 %v1260, %v2320
    %v2322 = vpop.f32.mrb[0].mxu0
    %2323 = vmatprep.mubr.bf16.mxu0 0
    %2324 = vmatmul.mubr.bf16.gmra.mrb[0].mxu0 %v1837
    %v2325 = vpop.f32.mrb[0].mxu0
    %v2326 = vadd.f32 %v1265, %v2325
    %v2327 = vpop.f32.mrb[0].mxu0
    %v2328 = vpop.f32.mrb[0].mxu0
    %v2329 = vadd.f32 %v1268, %v2328
    %v2330 = vpop.f32.mrb[0].mxu0
    %2331 = vmatprep.mubr.bf16.mxu0 0
    %2332 = vmatmul.mubr.bf16.gmra.mrb[0].mxu0 %v1840
    %v2333 = vpop.f32.mrb[0].mxu0
    %v2334 = vadd.f32 %v1273, %v2333
    %v2335 = vpop.f32.mrb[0].mxu0
    %v2336 = vpop.f32.mrb[0].mxu0
    %v2337 = vadd.f32 %v1276, %v2336
    %v2338 = vpop.f32.mrb[0].mxu0
    %2339 = vmatprep.mubr.bf16.mxu0 0
    %2340 = vmatmul.mubr.bf16.gmra.mrb[0].mxu0 %v1843
    %v2341 = vpop.f32.mrb[0].mxu0
    %v2342 = vadd.f32 %v1281, %v2341
    %v2343 = vpop.f32.mrb[0].mxu0
    %v2344 = vpop.f32.mrb[0].mxu0
    %v2345 = vadd.f32 %v1284, %v2344
    %v2346 = vpop.f32.mrb[0].mxu0
    %2347 = vmatprep.mubr.bf16.mxu0 0
    %2348 = vmatmul.mubr.bf16.gmra.mrb[0].mxu0 %v1846
    %v2349 = vpop.f32.mrb[0].mxu0
    %v2350 = vadd.f32 %v1289, %v2349
    %v2351 = vpop.f32.mrb[0].mxu0
    %v2352 = vpop.f32.mrb[0].mxu0
    %v2353 = vadd.f32 %v1292, %v2352
    %v2354 = vpop.f32.mrb[0].mxu0
    %2355 = vmatprep.mubr.bf16.mxu0 0
    %2356 = vmatmul.mubr.bf16.gmra.mrb[0].mxu0 %v1849
    %v2357 = vpop.f32.mrb[0].mxu0
    %v2358 = vadd.f32 %v1297, %v2357
    %v2359 = vpop.f32.mrb[0].mxu0
    %v2360 = vpop.f32.mrb[0].mxu0
    %v2361 = vadd.f32 %v1300, %v2360
    %v2362 = vpop.f32.mrb[0].mxu0
    %2363 = vmatprep.mubr.bf16.mxu0 0
    %2364 = vmatmul.mubr.bf16.gmra.mrb[0].mxu0 %v1852
    %v2365 = vpop.f32.mrb[0].mxu0
    %v2366 = vadd.f32 %v1305, %v2365
    %v2367 = vpop.f32.mrb[0].mxu0
    %v2368 = vpop.f32.mrb[0].mxu0
    %v2369 = vadd.f32 %v1308, %v2368
    %v2370 = vpop.f32.mrb[0].mxu0
    %2371 = vmatprep.mubr.bf16.mxu0 0
    %2372 = vmatmul.mubr.bf16.gmra.mrb[0].mxu0 %v1855
    %v2373 = vpop.f32.mrb[0].mxu0
    %v2374 = vadd.f32 %v1313, %v2373
    %v2375 = vpop.f32.mrb[0].mxu0
    %v2376 = vpop.f32.mrb[0].mxu0
    %v2377 = vadd.f32 %v1316, %v2376
    %v2378 = vpop.f32.mrb[0].mxu0
    %2379 = vmatprep.mubr.bf16.mxu0 0
    %2380 = vmatmul.mubr.bf16.gmra.mrb[0].mxu0 %v1858
    %v2381 = vpop.f32.mrb[0].mxu0
    %v2382 = vadd.f32 %v1321, %v2381
    %v2383 = vpop.f32.mrb[0].mxu0
    %v2384 = vpop.f32.mrb[0].mxu0
    %v2385 = vadd.f32 %v1324, %v2384
    %v2386 = vpop.f32.mrb[0].mxu0
    %2387 = vmatprep.mubr.bf16.mxu0 0
    %2388 = vmatmul.mubr.bf16.gmra.mrb[0].mxu0 %v1861
    %v2389 = vpop.f32.mrb[0].mxu0
    %v2390 = vadd.f32 %v1329, %v2389
    %v2391 = vpop.f32.mrb[0].mxu0
    %v2392 = vpop.f32.mrb[0].mxu0
    %v2393 = vadd.f32 %v1332, %v2392
    %v2394 = vpop.f32.mrb[0].mxu0
    %2395 = vmatprep.mubr.bf16.mxu0 0
    %2396 = vmatmul.mubr.bf16.gmra.mrb[0].mxu0 %v1864
    %v2397 = vpop.f32.mrb[0].mxu0
    %v2398 = vadd.f32 %v1337, %v2397
    %v2399 = vpop.f32.mrb[0].mxu0
    %v2400 = vpop.f32.mrb[0].mxu0
    %v2401 = vadd.f32 %v1340, %v2400
    %v2402 = vpop.f32.mrb[0].mxu0
    %2403 = vmatprep.mubr.bf16.mxu0 0
    %2404 = vmatmul.mubr.bf16.gmra.mrb[0].mxu0 %v1867
    %v2405 = vpop.f32.mrb[0].mxu0
    %v2406 = vadd.f32 %v1345, %v2405
    %v2407 = vpop.f32.mrb[0].mxu0
    %v2408 = vpop.f32.mrb[0].mxu0
    %v2409 = vadd.f32 %v1348, %v2408
    %v2410 = vpop.f32.mrb[0].mxu0
    %2411 = vmatprep.mubr.bf16.mxu0 0
    %2412 = vmatmul.mubr.bf16.gmra.mrb[0].mxu0 %v1870
    %v2413 = vpop.f32.mrb[0].mxu0
    %v2414 = vadd.f32 %v1353, %v2413
    %v2415 = vpop.f32.mrb[0].mxu0
    %v2416 = vpop.f32.mrb[0].mxu0
    %v2417 = vadd.f32 %v1356, %v2416
    %v2418 = vpop.f32.mrb[0].mxu0
    %2419 = vdwg.mxu0
    %v2420 = vld [vmem:[%s4] sm:$0x1]
    %v2422 = vlaneseq
    %v2423 = vshrl.u32 %v2422, 7
    %v2424 = vsub.s32 0, %v2423
    %v2425 = vrot.slane %v2420, %v2424
    %v2427 = vadd.f32 %v1910, %v2425
    %v2428 = vadd.f32 %v1913, %v2425
    %v2429 = vadd.f32 %v1918, %v2425
    %v2430 = vadd.f32 %v1921, %v2425
    %v2431 = vadd.f32 %v1926, %v2425
    %v2432 = vadd.f32 %v1929, %v2425
    %v2433 = vadd.f32 %v1934, %v2425
    %v2434 = vadd.f32 %v1937, %v2425
    %v2435 = vadd.f32 %v1942, %v2425
    %v2436 = vadd.f32 %v1945, %v2425
    %v2437 = vadd.f32 %v1950, %v2425
    %v2438 = vadd.f32 %v1953, %v2425
    %v2439 = vadd.f32 %v1958, %v2425
    %v2440 = vadd.f32 %v1961, %v2425
    %v2441 = vadd.f32 %v1966, %v2425
    %v2442 = vadd.f32 %v1969, %v2425
    %v2443 = vadd.f32 %v1974, %v2425
    %v2444 = vadd.f32 %v1977, %v2425
    %v2445 = vadd.f32 %v1982, %v2425
    %v2446 = vadd.f32 %v1985, %v2425
    %v2447 = vadd.f32 %v1990, %v2425
    %v2448 = vadd.f32 %v1993, %v2425
    %v2449 = vadd.f32 %v1998, %v2425
    %v2450 = vadd.f32 %v2001, %v2425
    %v2451 = vadd.f32 %v2006, %v2425
    %v2452 = vadd.f32 %v2009, %v2425
    %v2453 = vadd.f32 %v2014, %v2425
    %v2454 = vadd.f32 %v2017, %v2425
    %v2455 = vadd.f32 %v2022, %v2425
    %v2456 = vadd.f32 %v2025, %v2425
    %v2457 = vadd.f32 %v2030, %v2425
    %v2458 = vadd.f32 %v2033, %v2425
    %v2459 = vadd.f32 %v2038, %v2425
    %v2460 = vadd.f32 %v2041, %v2425
    %v2461 = vadd.f32 %v2046, %v2425
    %v2462 = vadd.f32 %v2049, %v2425
    %v2463 = vadd.f32 %v2054, %v2425
    %v2464 = vadd.f32 %v2057, %v2425
    %v2465 = vadd.f32 %v2062, %v2425
    %v2466 = vadd.f32 %v2065, %v2425
    %v2467 = vadd.f32 %v2070, %v2425
    %v2468 = vadd.f32 %v2073, %v2425
    %v2469 = vadd.f32 %v2078, %v2425
    %v2470 = vadd.f32 %v2081, %v2425
    %v2471 = vadd.f32 %v2086, %v2425
    %v2472 = vadd.f32 %v2089, %v2425
    %v2473 = vadd.f32 %v2094, %v2425
    %v2474 = vadd.f32 %v2097, %v2425
    %v2475 = vadd.f32 %v2102, %v2425
    %v2476 = vadd.f32 %v2105, %v2425
    %v2477 = vadd.f32 %v2110, %v2425
    %v2478 = vadd.f32 %v2113, %v2425
    %v2479 = vadd.f32 %v2118, %v2425
    %v2480 = vadd.f32 %v2121, %v2425
    %v2481 = vadd.f32 %v2126, %v2425
    %v2482 = vadd.f32 %v2129, %v2425
    %v2483 = vadd.f32 %v2134, %v2425
    %v2484 = vadd.f32 %v2137, %v2425
    %v2485 = vadd.f32 %v2142, %v2425
    %v2486 = vadd.f32 %v2145, %v2425
    %v2487 = vadd.f32 %v2150, %v2425
    %v2488 = vadd.f32 %v2153, %v2425
    %v2489 = vadd.f32 %v2158, %v2425
    %v2490 = vadd.f32 %v2161, %v2425
    %v2491 = vadd.f32 %v2166, %v2425
    %v2492 = vadd.f32 %v2169, %v2425
    %v2493 = vadd.f32 %v2174, %v2425
    %v2494 = vadd.f32 %v2177, %v2425
    %v2495 = vadd.f32 %v2182, %v2425
    %v2496 = vadd.f32 %v2185, %v2425
    %v2497 = vadd.f32 %v2190, %v2425
    %v2498 = vadd.f32 %v2193, %v2425
    %v2499 = vadd.f32 %v2198, %v2425
    %v2500 = vadd.f32 %v2201, %v2425
    %v2501 = vadd.f32 %v2206, %v2425
    %v2502 = vadd.f32 %v2209, %v2425
    %v2503 = vadd.f32 %v2214, %v2425
    %v2504 = vadd.f32 %v2217, %v2425
    %v2505 = vadd.f32 %v2222, %v2425
    %v2506 = vadd.f32 %v2225, %v2425
    %v2507 = vadd.f32 %v2230, %v2425
    %v2508 = vadd.f32 %v2233, %v2425
    %v2509 = vadd.f32 %v2238, %v2425
    %v2510 = vadd.f32 %v2241, %v2425
    %v2511 = vadd.f32 %v2246, %v2425
    %v2512 = vadd.f32 %v2249, %v2425
    %v2513 = vadd.f32 %v2254, %v2425
    %v2514 = vadd.f32 %v2257, %v2425
    %v2515 = vadd.f32 %v2262, %v2425
    %v2516 = vadd.f32 %v2265, %v2425
    %v2517 = vadd.f32 %v2270, %v2425
    %v2518 = vadd.f32 %v2273, %v2425
    %v2519 = vadd.f32 %v2278, %v2425
    %v2520 = vadd.f32 %v2281, %v2425
    %v2521 = vadd.f32 %v2286, %v2425
    %v2522 = vadd.f32 %v2289, %v2425
    %v2523 = vadd.f32 %v2294, %v2425
    %v2524 = vadd.f32 %v2297, %v2425
    %v2525 = vadd.f32 %v2302, %v2425
    %v2526 = vadd.f32 %v2305, %v2425
    %v2527 = vadd.f32 %v2310, %v2425
    %v2528 = vadd.f32 %v2313, %v2425
    %v2529 = vadd.f32 %v2318, %v2425
    %v2530 = vadd.f32 %v2321, %v2425
    %v2531 = vadd.f32 %v2326, %v2425
    %v2532 = vadd.f32 %v2329, %v2425
    %v2533 = vadd.f32 %v2334, %v2425
    %v2534 = vadd.f32 %v2337, %v2425
    %v2535 = vadd.f32 %v2342, %v2425
    %v2536 = vadd.f32 %v2345, %v2425
    %v2537 = vadd.f32 %v2350, %v2425
    %v2538 = vadd.f32 %v2353, %v2425
    %v2539 = vadd.f32 %v2358, %v2425
    %v2540 = vadd.f32 %v2361, %v2425
    %v2541 = vadd.f32 %v2366, %v2425
    %v2542 = vadd.f32 %v2369, %v2425
    %v2543 = vadd.f32 %v2374, %v2425
    %v2544 = vadd.f32 %v2377, %v2425
    %v2545 = vadd.f32 %v2382, %v2425
    %v2546 = vadd.f32 %v2385, %v2425
    %v2547 = vadd.f32 %v2390, %v2425
    %v2548 = vadd.f32 %v2393, %v2425
    %v2549 = vadd.f32 %v2398, %v2425
    %v2550 = vadd.f32 %v2401, %v2425
    %v2551 = vadd.f32 %v2406, %v2425
    %v2552 = vadd.f32 %v2409, %v2425
    %v2553 = vadd.f32 %v2414, %v2425
    %v2554 = vadd.f32 %v2417, %v2425
    %v2555 = vmax.f32 %v2427, 0.0
    %v2556 = vmax.f32 %v2428, 0.0
    %v2557 = vmax.f32 %v2429, 0.0
    %v2558 = vmax.f32 %v2430, 0.0
    %v2559 = vmax.f32 %v2431, 0.0
    %v2560 = vmax.f32 %v2432, 0.0
    %v2561 = vmax.f32 %v2433, 0.0
    %v2562 = vmax.f32 %v2434, 0.0
    %v2563 = vmax.f32 %v2435, 0.0
    %v2564 = vmax.f32 %v2436, 0.0
    %v2565 = vmax.f32 %v2437, 0.0
    %v2566 = vmax.f32 %v2438, 0.0
    %v2567 = vmax.f32 %v2439, 0.0
    %v2568 = vmax.f32 %v2440, 0.0
    %v2569 = vmax.f32 %v2441, 0.0
    %v2570 = vmax.f32 %v2442, 0.0
    %v2571 = vmax.f32 %v2443, 0.0
    %v2572 = vmax.f32 %v2444, 0.0
    %v2573 = vmax.f32 %v2445, 0.0
    %v2574 = vmax.f32 %v2446, 0.0
    %v2575 = vmax.f32 %v2447, 0.0
    %v2576 = vmax.f32 %v2448, 0.0
    %v2577 = vmax.f32 %v2449, 0.0
    %v2578 = vmax.f32 %v2450, 0.0
    %v2579 = vmax.f32 %v2451, 0.0
    %v2580 = vmax.f32 %v2452, 0.0
    %v2581 = vmax.f32 %v2453, 0.0
    %v2582 = vmax.f32 %v2454, 0.0
    %v2583 = vmax.f32 %v2455, 0.0
    %v2584 = vmax.f32 %v2456, 0.0
    %v2585 = vmax.f32 %v2457, 0.0
    %v2586 = vmax.f32 %v2458, 0.0
    %v2587 = vmax.f32 %v2459, 0.0
    %v2588 = vmax.f32 %v2460, 0.0
    %v2589 = vmax.f32 %v2461, 0.0
    %v2590 = vmax.f32 %v2462, 0.0
    %v2591 = vmax.f32 %v2463, 0.0
    %v2592 = vmax.f32 %v2464, 0.0
    %v2593 = vmax.f32 %v2465, 0.0
    %v2594 = vmax.f32 %v2466, 0.0
    %v2595 = vmax.f32 %v2467, 0.0
    %v2596 = vmax.f32 %v2468, 0.0
    %v2597 = vmax.f32 %v2469, 0.0
    %v2598 = vmax.f32 %v2470, 0.0
    %v2599 = vmax.f32 %v2471, 0.0
    %v2600 = vmax.f32 %v2472, 0.0
    %v2601 = vmax.f32 %v2473, 0.0
    %v2602 = vmax.f32 %v2474, 0.0
    %v2603 = vmax.f32 %v2475, 0.0
    %v2604 = vmax.f32 %v2476, 0.0
    %v2605 = vmax.f32 %v2477, 0.0
    %v2606 = vmax.f32 %v2478, 0.0
    %v2607 = vmax.f32 %v2479, 0.0
    %v2608 = vmax.f32 %v2480, 0.0
    %v2609 = vmax.f32 %v2481, 0.0
    %v2610 = vmax.f32 %v2482, 0.0
    %v2611 = vmax.f32 %v2483, 0.0
    %v2612 = vmax.f32 %v2484, 0.0
    %v2613 = vmax.f32 %v2485, 0.0
    %v2614 = vmax.f32 %v2486, 0.0
    %v2615 = vmax.f32 %v2487, 0.0
    %v2616 = vmax.f32 %v2488, 0.0
    %v2617 = vmax.f32 %v2489, 0.0
    %v2618 = vmax.f32 %v2490, 0.0
    %v2619 = vmax.f32 %v2491, 0.0
    %v2620 = vmax.f32 %v2492, 0.0
    %v2621 = vmax.f32 %v2493, 0.0
    %v2622 = vmax.f32 %v2494, 0.0
    %v2623 = vmax.f32 %v2495, 0.0
    %v2624 = vmax.f32 %v2496, 0.0
    %v2625 = vmax.f32 %v2497, 0.0
    %v2626 = vmax.f32 %v2498, 0.0
    %v2627 = vmax.f32 %v2499, 0.0
    %v2628 = vmax.f32 %v2500, 0.0
    %v2629 = vmax.f32 %v2501, 0.0
    %v2630 = vmax.f32 %v2502, 0.0
    %v2631 = vmax.f32 %v2503, 0.0
    %v2632 = vmax.f32 %v2504, 0.0
    %v2633 = vmax.f32 %v2505, 0.0
    %v2634 = vmax.f32 %v2506, 0.0
    %v2635 = vmax.f32 %v2507, 0.0
    %v2636 = vmax.f32 %v2508, 0.0
    %v2637 = vmax.f32 %v2509, 0.0
    %v2638 = vmax.f32 %v2510, 0.0
    %v2639 = vmax.f32 %v2511, 0.0
    %v2640 = vmax.f32 %v2512, 0.0
    %v2641 = vmax.f32 %v2513, 0.0
    %v2642 = vmax.f32 %v2514, 0.0
    %v2643 = vmax.f32 %v2515, 0.0
    %v2644 = vmax.f32 %v2516, 0.0
    %v2645 = vmax.f32 %v2517, 0.0
    %v2646 = vmax.f32 %v2518, 0.0
    %v2647 = vmax.f32 %v2519, 0.0
    %v2648 = vmax.f32 %v2520, 0.0
    %v2649 = vmax.f32 %v2521, 0.0
    %v2650 = vmax.f32 %v2522, 0.0
    %v2651 = vmax.f32 %v2523, 0.0
    %v2652 = vmax.f32 %v2524, 0.0
    %v2653 = vmax.f32 %v2525, 0.0
    %v2654 = vmax.f32 %v2526, 0.0
    %v2655 = vmax.f32 %v2527, 0.0
    %v2656 = vmax.f32 %v2528, 0.0
    %v2657 = vmax.f32 %v2529, 0.0
    %v2658 = vmax.f32 %v2530, 0.0
    %v2659 = vmax.f32 %v2531, 0.0
    %v2660 = vmax.f32 %v2532, 0.0
    %v2661 = vmax.f32 %v2533, 0.0
    %v2662 = vmax.f32 %v2534, 0.0
    %v2663 = vmax.f32 %v2535, 0.0
    %v2664 = vmax.f32 %v2536, 0.0
    %v2665 = vmax.f32 %v2537, 0.0
    %v2666 = vmax.f32 %v2538, 0.0
    %v2667 = vmax.f32 %v2539, 0.0
    %v2668 = vmax.f32 %v2540, 0.0
    %v2669 = vmax.f32 %v2541, 0.0
    %v2670 = vmax.f32 %v2542, 0.0
    %v2671 = vmax.f32 %v2543, 0.0
    %v2672 = vmax.f32 %v2544, 0.0
    %v2673 = vmax.f32 %v2545, 0.0
    %v2674 = vmax.f32 %v2546, 0.0
    %v2675 = vmax.f32 %v2547, 0.0
    %v2676 = vmax.f32 %v2548, 0.0
    %v2677 = vmax.f32 %v2549, 0.0
    %v2678 = vmax.f32 %v2550, 0.0
    %v2679 = vmax.f32 %v2551, 0.0
    %v2680 = vmax.f32 %v2552, 0.0
    %v2681 = vmax.f32 %v2553, 0.0
    %v2682 = vmax.f32 %v2554, 0.0
    %v2683 = vpack.c.bf16 %v2556, %v2555
    %v2684 = vpack.c.bf16 %v2558, %v2557
    %v2685 = vpack.c.bf16 %v2560, %v2559
    %v2686 = vpack.c.bf16 %v2562, %v2561
    %v2687 = vpack.c.bf16 %v2564, %v2563
    %v2688 = vpack.c.bf16 %v2566, %v2565
    %v2689 = vpack.c.bf16 %v2568, %v2567
    %v2690 = vpack.c.bf16 %v2570, %v2569
    %v2691 = vpack.c.bf16 %v2572, %v2571
    %v2692 = vpack.c.bf16 %v2574, %v2573
    %v2693 = vpack.c.bf16 %v2576, %v2575
    %v2694 = vpack.c.bf16 %v2578, %v2577
    %v2695 = vpack.c.bf16 %v2580, %v2579
    %v2696 = vpack.c.bf16 %v2582, %v2581
    %v2697 = vpack.c.bf16 %v2584, %v2583
    %v2698 = vpack.c.bf16 %v2586, %v2585
    %v2699 = vpack.c.bf16 %v2588, %v2587
    %v2700 = vpack.c.bf16 %v2590, %v2589
    %v2701 = vpack.c.bf16 %v2592, %v2591
    %v2702 = vpack.c.bf16 %v2594, %v2593
    %v2703 = vpack.c.bf16 %v2596, %v2595
    %v2704 = vpack.c.bf16 %v2598, %v2597
    %v2705 = vpack.c.bf16 %v2600, %v2599
    %v2706 = vpack.c.bf16 %v2602, %v2601
    %v2707 = vpack.c.bf16 %v2604, %v2603
    %v2708 = vpack.c.bf16 %v2606, %v2605
    %v2709 = vpack.c.bf16 %v2608, %v2607
    %v2710 = vpack.c.bf16 %v2610, %v2609
    %v2711 = vpack.c.bf16 %v2612, %v2611
    %v2712 = vpack.c.bf16 %v2614, %v2613
    %v2713 = vpack.c.bf16 %v2616, %v2615
    %v2714 = vpack.c.bf16 %v2618, %v2617
    %v2715 = vpack.c.bf16 %v2620, %v2619
    %v2716 = vpack.c.bf16 %v2622, %v2621
    %v2717 = vpack.c.bf16 %v2624, %v2623
    %v2718 = vpack.c.bf16 %v2626, %v2625
    %v2719 = vpack.c.bf16 %v2628, %v2627
    %v2720 = vpack.c.bf16 %v2630, %v2629
    %v2721 = vpack.c.bf16 %v2632, %v2631
    %v2722 = vpack.c.bf16 %v2634, %v2633
    %v2723 = vpack.c.bf16 %v2636, %v2635
    %v2724 = vpack.c.bf16 %v2638, %v2637
    %v2725 = vpack.c.bf16 %v2640, %v2639
    %v2726 = vpack.c.bf16 %v2642, %v2641
    %v2727 = vpack.c.bf16 %v2644, %v2643
    %v2728 = vpack.c.bf16 %v2646, %v2645
    %v2729 = vpack.c.bf16 %v2648, %v2647
    %v2730 = vpack.c.bf16 %v2650, %v2649
    %v2731 = vpack.c.bf16 %v2652, %v2651
    %v2732 = vpack.c.bf16 %v2654, %v2653
    %v2733 = vpack.c.bf16 %v2656, %v2655
    %v2734 = vpack.c.bf16 %v2658, %v2657
    %v2735 = vpack.c.bf16 %v2660, %v2659
    %v2736 = vpack.c.bf16 %v2662, %v2661
    %v2737 = vpack.c.bf16 %v2664, %v2663
    %v2738 = vpack.c.bf16 %v2666, %v2665
    %v2739 = vpack.c.bf16 %v2668, %v2667
    %v2740 = vpack.c.bf16 %v2670, %v2669
    %v2741 = vpack.c.bf16 %v2672, %v2671
    %v2742 = vpack.c.bf16 %v2674, %v2673
    %v2743 = vpack.c.bf16 %v2676, %v2675
    %v2744 = vpack.c.bf16 %v2678, %v2677
    %v2745 = vpack.c.bf16 %v2680, %v2679
    %v2746 = vpack.c.bf16 %v2682, %v2681
    %v2747 = vld [vmem:[%s5] sm:$0xf]
    %v2748 = vld [vmem:[%s5 + $0x4] sm:$0xf]
    %v2749 = vld [vmem:[%s5 + $0x8] sm:$0xf]
    %v2750 = vld [vmem:[%s5 + $0xc] sm:$0xf]
    %v2751 = vld [vmem:[%s6] sm:$0x1]
    %v2753 = vlaneseq
    %v2754 = vshrl.u32 %v2753, 7
    %v2755 = vsub.s32 0, %v2754
    %v2756 = vrot.slane %v2751, %v2755
    %v2762 = vunpack.c.l.b16 %v2747
    %v2763 = vunpack.c.l.b16 %v2748
    %v2764 = vunpack.c.l.b16 %v2749
    %v2765 = vunpack.c.l.b16 %v2750
    %v2766 = vpack.c.b16 %v2763, %v2762
    %v2767 = vpack.c.b16 %v2765, %v2764
    %vm2770 = vcmask 261120
    %v2772 = vsel %vm2770, %v2683, 0
    %v2775 = vsel %vm2770, %v2684, 0
    %v2778 = vsel %vm2770, %v2685, 0
    %v2781 = vsel %vm2770, %v2686, 0
    %v2784 = vsel %vm2770, %v2687, 0
    %v2787 = vsel %vm2770, %v2688, 0
    %v2790 = vsel %vm2770, %v2689, 0
    %v2793 = vsel %vm2770, %v2690, 0
    %v2796 = vsel %vm2770, %v2691, 0
    %v2799 = vsel %vm2770, %v2692, 0
    %v2802 = vsel %vm2770, %v2693, 0
    %v2805 = vsel %vm2770, %v2694, 0
    %v2808 = vsel %vm2770, %v2695, 0
    %v2811 = vsel %vm2770, %v2696, 0
    %v2814 = vsel %vm2770, %v2697, 0
    %v2817 = vsel %vm2770, %v2698, 0
    %v2820 = vsel %vm2770, %v2699, 0
    %v2823 = vsel %vm2770, %v2700, 0
    %v2826 = vsel %vm2770, %v2701, 0
    %v2829 = vsel %vm2770, %v2702, 0
    %v2832 = vsel %vm2770, %v2703, 0
    %v2835 = vsel %vm2770, %v2704, 0
    %v2838 = vsel %vm2770, %v2705, 0
    %v2841 = vsel %vm2770, %v2706, 0
    %v2844 = vsel %vm2770, %v2707, 0
    %v2847 = vsel %vm2770, %v2708, 0
    %v2850 = vsel %vm2770, %v2709, 0
    %v2853 = vsel %vm2770, %v2710, 0
    %v2856 = vsel %vm2770, %v2711, 0
    %v2859 = vsel %vm2770, %v2712, 0
    %v2862 = vsel %vm2770, %v2713, 0
    %v2865 = vsel %vm2770, %v2714, 0
    %v2868 = vsel %vm2770, %v2715, 0
    %v2871 = vsel %vm2770, %v2716, 0
    %v2874 = vsel %vm2770, %v2717, 0
    %v2877 = vsel %vm2770, %v2718, 0
    %v2880 = vsel %vm2770, %v2719, 0
    %v2883 = vsel %vm2770, %v2720, 0
    %v2886 = vsel %vm2770, %v2721, 0
    %v2889 = vsel %vm2770, %v2722, 0
    %v2892 = vsel %vm2770, %v2723, 0
    %v2895 = vsel %vm2770, %v2724, 0
    %v2898 = vsel %vm2770, %v2725, 0
    %v2901 = vsel %vm2770, %v2726, 0
    %v2904 = vsel %vm2770, %v2727, 0
    %v2907 = vsel %vm2770, %v2728, 0
    %v2910 = vsel %vm2770, %v2729, 0
    %v2913 = vsel %vm2770, %v2730, 0
    %v2916 = vsel %vm2770, %v2731, 0
    %v2919 = vsel %vm2770, %v2732, 0
    %v2922 = vsel %vm2770, %v2733, 0
    %v2925 = vsel %vm2770, %v2734, 0
    %v2928 = vsel %vm2770, %v2735, 0
    %v2931 = vsel %vm2770, %v2736, 0
    %v2934 = vsel %vm2770, %v2737, 0
    %v2937 = vsel %vm2770, %v2738, 0
    %v2940 = vsel %vm2770, %v2739, 0
    %v2943 = vsel %vm2770, %v2740, 0
    %v2946 = vsel %vm2770, %v2741, 0
    %v2949 = vsel %vm2770, %v2742, 0
    %v2952 = vsel %vm2770, %v2743, 0
    %v2955 = vsel %vm2770, %v2744, 0
    %v2958 = vsel %vm2770, %v2745, 0
    %v2961 = vsel %vm2770, %v2746, 0
    %2963 = vmatprep.subr.bf16.mxu0 0
    %2964 = vmatpush1.bf16.msra.mxu0 %v2766
    %2965 = vmatprep.subr.bf16.mxu0 0
    %2966 = vmatpush1.bf16.msra.mxu0 %v2767
    %2967 = vmatprep.subr.bf16.mxu0 0
    %2968 = vmatpush1.bf16.msra.mxu0 0
    %2969 = vmatprep.subr.bf16.mxu0 0
    %2970 = vmatpush1.bf16.msra.mxu0 0
    %2971 = vmatprep.subr.bf16.mxu0 0
    %2972 = vmatpush1.bf16.msra.mxu0 0
    %2973 = vmatprep.subr.bf16.mxu0 0
    %2974 = vmatpush1.bf16.msra.mxu0 0
    %2975 = vmatprep.subr.bf16.mxu0 0
    %2976 = vmatpush1.bf16.msra.mxu0 0
    %2977 = vmatprep.subr.bf16.mxu0 0
    %2978 = vmatpush1.bf16.msra.mxu0 0
    %2979 = vmatprep.subr.bf16.mxu0 0
    %2980 = vmatpush1.bf16.msra.mxu0 0
    %2981 = vmatprep.subr.bf16.mxu0 0
    %2982 = vmatpush1.bf16.msra.mxu0 0
    %2983 = vmatprep.subr.bf16.mxu0 0
    %2984 = vmatpush1.bf16.msra.mxu0 0
    %2985 = vmatprep.subr.bf16.mxu0 0
    %2986 = vmatpush1.bf16.msra.mxu0 0
    %2987 = vmatprep.subr.bf16.mxu0 0
    %2988 = vmatpush1.bf16.msra.mxu0 0
    %2989 = vmatprep.subr.bf16.mxu0 0
    %2990 = vmatpush1.bf16.msra.mxu0 0
    %2991 = vmatprep.subr.bf16.mxu0 0
    %2992 = vmatpush1.bf16.msra.mxu0 0
    %2993 = vmatprep.subr.bf16.mxu0 0
    %2994 = vmatpush1.bf16.msra.mxu0 0
    %2995 = vmatprep.mubr.bf16.mxu0 0
    %2996 = vmatmul.mubr.bf16.gmra.mrb[0].mxu0 %v2772
    %v2997 = vpop.f32.mrb[0].mxu0
    %v2998 = vadd.f32 %v2756, %v2997
    %v2999 = vpop.f32.mrb[0].mxu0
    %v3000 = vpop.f32.mrb[0].mxu0
    %v3001 = vadd.f32 %v2756, %v3000
    %v3002 = vpop.f32.mrb[0].mxu0
    %3003 = vmatprep.mubr.bf16.mxu0 0
    %3004 = vmatmul.mubr.bf16.gmra.mrb[0].mxu0 %v2775
    %v3005 = vpop.f32.mrb[0].mxu0
    %v3006 = vadd.f32 %v2756, %v3005
    %v3007 = vpop.f32.mrb[0].mxu0
    %v3008 = vpop.f32.mrb[0].mxu0
    %v3009 = vadd.f32 %v2756, %v3008
    %v3010 = vpop.f32.mrb[0].mxu0
    %3011 = vmatprep.mubr.bf16.mxu0 0
    %3012 = vmatmul.mubr.bf16.gmra.mrb[0].mxu0 %v2778
    %v3013 = vpop.f32.mrb[0].mxu0
    %v3014 = vadd.f32 %v2756, %v3013
    %v3015 = vpop.f32.mrb[0].mxu0
    %v3016 = vpop.f32.mrb[0].mxu0
    %v3017 = vadd.f32 %v2756, %v3016
    %v3018 = vpop.f32.mrb[0].mxu0
    %3019 = vmatprep.mubr.bf16.mxu0 0
    %3020 = vmatmul.mubr.bf16.gmra.mrb[0].mxu0 %v2781
    %v3021 = vpop.f32.mrb[0].mxu0
    %v3022 = vadd.f32 %v2756, %v3021
    %v3023 = vpop.f32.mrb[0].mxu0
    %v3024 = vpop.f32.mrb[0].mxu0
    %v3025 = vadd.f32 %v2756, %v3024
    %v3026 = vpop.f32.mrb[0].mxu0
    %3027 = vmatprep.mubr.bf16.mxu0 0
    %3028 = vmatmul.mubr.bf16.gmra.mrb[0].mxu0 %v2784
    %v3029 = vpop.f32.mrb[0].mxu0
    %v3030 = vadd.f32 %v2756, %v3029
    %v3031 = vpop.f32.mrb[0].mxu0
    %v3032 = vpop.f32.mrb[0].mxu0
    %v3033 = vadd.f32 %v2756, %v3032
    %v3034 = vpop.f32.mrb[0].mxu0
    %3035 = vmatprep.mubr.bf16.mxu0 0
    %3036 = vmatmul.mubr.bf16.gmra.mrb[0].mxu0 %v2787
    %v3037 = vpop.f32.mrb[0].mxu0
    %v3038 = vadd.f32 %v2756, %v3037
    %v3039 = vpop.f32.mrb[0].mxu0
    %v3040 = vpop.f32.mrb[0].mxu0
    %v3041 = vadd.f32 %v2756, %v3040
    %v3042 = vpop.f32.mrb[0].mxu0
    %3043 = vmatprep.mubr.bf16.mxu0 0
    %3044 = vmatmul.mubr.bf16.gmra.mrb[0].mxu0 %v2790
    %v3045 = vpop.f32.mrb[0].mxu0
    %v3046 = vadd.f32 %v2756, %v3045
    %v3047 = vpop.f32.mrb[0].mxu0
    %v3048 = vpop.f32.mrb[0].mxu0
    %v3049 = vadd.f32 %v2756, %v3048
    %v3050 = vpop.f32.mrb[0].mxu0
    %3051 = vmatprep.mubr.bf16.mxu0 0
    %3052 = vmatmul.mubr.bf16.gmra.mrb[0].mxu0 %v2793
    %v3053 = vpop.f32.mrb[0].mxu0
    %v3054 = vadd.f32 %v2756, %v3053
    %v3055 = vpop.f32.mrb[0].mxu0
    %v3056 = vpop.f32.mrb[0].mxu0
    %v3057 = vadd.f32 %v2756, %v3056
    %v3058 = vpop.f32.mrb[0].mxu0
    %3059 = vmatprep.mubr.bf16.mxu0 0
    %3060 = vmatmul.mubr.bf16.gmra.mrb[0].mxu0 %v2796
    %v3061 = vpop.f32.mrb[0].mxu0
    %v3062 = vadd.f32 %v2756, %v3061
    %v3063 = vpop.f32.mrb[0].mxu0
    %v3064 = vpop.f32.mrb[0].mxu0
    %v3065 = vadd.f32 %v2756, %v3064
    %v3066 = vpop.f32.mrb[0].mxu0
    %3067 = vmatprep.mubr.bf16.mxu0 0
    %3068 = vmatmul.mubr.bf16.gmra.mrb[0].mxu0 %v2799
    %v3069 = vpop.f32.mrb[0].mxu0
    %v3070 = vadd.f32 %v2756, %v3069
    %v3071 = vpop.f32.mrb[0].mxu0
    %v3072 = vpop.f32.mrb[0].mxu0
    %v3073 = vadd.f32 %v2756, %v3072
    %v3074 = vpop.f32.mrb[0].mxu0
    %3075 = vmatprep.mubr.bf16.mxu0 0
    %3076 = vmatmul.mubr.bf16.gmra.mrb[0].mxu0 %v2802
    %v3077 = vpop.f32.mrb[0].mxu0
    %v3078 = vadd.f32 %v2756, %v3077
    %v3079 = vpop.f32.mrb[0].mxu0
    %v3080 = vpop.f32.mrb[0].mxu0
    %v3081 = vadd.f32 %v2756, %v3080
    %v3082 = vpop.f32.mrb[0].mxu0
    %3083 = vmatprep.mubr.bf16.mxu0 0
    %3084 = vmatmul.mubr.bf16.gmra.mrb[0].mxu0 %v2805
    %v3085 = vpop.f32.mrb[0].mxu0
    %v3086 = vadd.f32 %v2756, %v3085
    %v3087 = vpop.f32.mrb[0].mxu0
    %v3088 = vpop.f32.mrb[0].mxu0
    %v3089 = vadd.f32 %v2756, %v3088
    %v3090 = vpop.f32.mrb[0].mxu0
    %3091 = vmatprep.mubr.bf16.mxu0 0
    %3092 = vmatmul.mubr.bf16.gmra.mrb[0].mxu0 %v2808
    %v3093 = vpop.f32.mrb[0].mxu0
    %v3094 = vadd.f32 %v2756, %v3093
    %v3095 = vpop.f32.mrb[0].mxu0
    %v3096 = vpop.f32.mrb[0].mxu0
    %v3097 = vadd.f32 %v2756, %v3096
    %v3098 = vpop.f32.mrb[0].mxu0
    %3099 = vmatprep.mubr.bf16.mxu0 0
    %3100 = vmatmul.mubr.bf16.gmra.mrb[0].mxu0 %v2811
    %v3101 = vpop.f32.mrb[0].mxu0
    %v3102 = vadd.f32 %v2756, %v3101
    %v3103 = vpop.f32.mrb[0].mxu0
    %v3104 = vpop.f32.mrb[0].mxu0
    %v3105 = vadd.f32 %v2756, %v3104
    %v3106 = vpop.f32.mrb[0].mxu0
    %3107 = vmatprep.mubr.bf16.mxu0 0
    %3108 = vmatmul.mubr.bf16.gmra.mrb[0].mxu0 %v2814
    %v3109 = vpop.f32.mrb[0].mxu0
    %v3110 = vadd.f32 %v2756, %v3109
    %v3111 = vpop.f32.mrb[0].mxu0
    %v3112 = vpop.f32.mrb[0].mxu0
    %v3113 = vadd.f32 %v2756, %v3112
    %v3114 = vpop.f32.mrb[0].mxu0
    %3115 = vmatprep.mubr.bf16.mxu0 0
    %3116 = vmatmul.mubr.bf16.gmra.mrb[0].mxu0 %v2817
    %v3117 = vpop.f32.mrb[0].mxu0
    %v3118 = vadd.f32 %v2756, %v3117
    %v3119 = vpop.f32.mrb[0].mxu0
    %v3120 = vpop.f32.mrb[0].mxu0
    %v3121 = vadd.f32 %v2756, %v3120
    %v3122 = vpop.f32.mrb[0].mxu0
    %3123 = vmatprep.mubr.bf16.mxu0 0
    %3124 = vmatmul.mubr.bf16.gmra.mrb[0].mxu0 %v2820
    %v3125 = vpop.f32.mrb[0].mxu0
    %v3126 = vadd.f32 %v2756, %v3125
    %v3127 = vpop.f32.mrb[0].mxu0
    %v3128 = vpop.f32.mrb[0].mxu0
    %v3129 = vadd.f32 %v2756, %v3128
    %v3130 = vpop.f32.mrb[0].mxu0
    %3131 = vmatprep.mubr.bf16.mxu0 0
    %3132 = vmatmul.mubr.bf16.gmra.mrb[0].mxu0 %v2823
    %v3133 = vpop.f32.mrb[0].mxu0
    %v3134 = vadd.f32 %v2756, %v3133
    %v3135 = vpop.f32.mrb[0].mxu0
    %v3136 = vpop.f32.mrb[0].mxu0
    %v3137 = vadd.f32 %v2756, %v3136
    %v3138 = vpop.f32.mrb[0].mxu0
    %3139 = vmatprep.mubr.bf16.mxu0 0
    %3140 = vmatmul.mubr.bf16.gmra.mrb[0].mxu0 %v2826
    %v3141 = vpop.f32.mrb[0].mxu0
    %v3142 = vadd.f32 %v2756, %v3141
    %v3143 = vpop.f32.mrb[0].mxu0
    %v3144 = vpop.f32.mrb[0].mxu0
    %v3145 = vadd.f32 %v2756, %v3144
    %v3146 = vpop.f32.mrb[0].mxu0
    %3147 = vmatprep.mubr.bf16.mxu0 0
    %3148 = vmatmul.mubr.bf16.gmra.mrb[0].mxu0 %v2829
    %v3149 = vpop.f32.mrb[0].mxu0
    %v3150 = vadd.f32 %v2756, %v3149
    %v3151 = vpop.f32.mrb[0].mxu0
    %v3152 = vpop.f32.mrb[0].mxu0
    %v3153 = vadd.f32 %v2756, %v3152
    %v3154 = vpop.f32.mrb[0].mxu0
    %3155 = vmatprep.mubr.bf16.mxu0 0
    %3156 = vmatmul.mubr.bf16.gmra.mrb[0].mxu0 %v2832
    %v3157 = vpop.f32.mrb[0].mxu0
    %v3158 = vadd.f32 %v2756, %v3157
    %v3159 = vpop.f32.mrb[0].mxu0
    %v3160 = vpop.f32.mrb[0].mxu0
    %v3161 = vadd.f32 %v2756, %v3160
    %v3162 = vpop.f32.mrb[0].mxu0
    %3163 = vmatprep.mubr.bf16.mxu0 0
    %3164 = vmatmul.mubr.bf16.gmra.mrb[0].mxu0 %v2835
    %v3165 = vpop.f32.mrb[0].mxu0
    %v3166 = vadd.f32 %v2756, %v3165
    %v3167 = vpop.f32.mrb[0].mxu0
    %v3168 = vpop.f32.mrb[0].mxu0
    %v3169 = vadd.f32 %v2756, %v3168
    %v3170 = vpop.f32.mrb[0].mxu0
    %3171 = vmatprep.mubr.bf16.mxu0 0
    %3172 = vmatmul.mubr.bf16.gmra.mrb[0].mxu0 %v2838
    %v3173 = vpop.f32.mrb[0].mxu0
    %v3174 = vadd.f32 %v2756, %v3173
    %v3175 = vpop.f32.mrb[0].mxu0
    %v3176 = vpop.f32.mrb[0].mxu0
    %v3177 = vadd.f32 %v2756, %v3176
    %v3178 = vpop.f32.mrb[0].mxu0
    %3179 = vmatprep.mubr.bf16.mxu0 0
    %3180 = vmatmul.mubr.bf16.gmra.mrb[0].mxu0 %v2841
    %v3181 = vpop.f32.mrb[0].mxu0
    %v3182 = vadd.f32 %v2756, %v3181
    %v3183 = vpop.f32.mrb[0].mxu0
    %v3184 = vpop.f32.mrb[0].mxu0
    %v3185 = vadd.f32 %v2756, %v3184
    %v3186 = vpop.f32.mrb[0].mxu0
    %3187 = vmatprep.mubr.bf16.mxu0 0
    %3188 = vmatmul.mubr.bf16.gmra.mrb[0].mxu0 %v2844
    %v3189 = vpop.f32.mrb[0].mxu0
    %v3190 = vadd.f32 %v2756, %v3189
    %v3191 = vpop.f32.mrb[0].mxu0
    %v3192 = vpop.f32.mrb[0].mxu0
    %v3193 = vadd.f32 %v2756, %v3192
    %v3194 = vpop.f32.mrb[0].mxu0
    %3195 = vmatprep.mubr.bf16.mxu0 0
    %3196 = vmatmul.mubr.bf16.gmra.mrb[0].mxu0 %v2847
    %v3197 = vpop.f32.mrb[0].mxu0
    %v3198 = vadd.f32 %v2756, %v3197
    %v3199 = vpop.f32.mrb[0].mxu0
    %v3200 = vpop.f32.mrb[0].mxu0
    %v3201 = vadd.f32 %v2756, %v3200
    %v3202 = vpop.f32.mrb[0].mxu0
    %3203 = vmatprep.mubr.bf16.mxu0 0
    %3204 = vmatmul.mubr.bf16.gmra.mrb[0].mxu0 %v2850
    %v3205 = vpop.f32.mrb[0].mxu0
    %v3206 = vadd.f32 %v2756, %v3205
    %v3207 = vpop.f32.mrb[0].mxu0
    %v3208 = vpop.f32.mrb[0].mxu0
    %v3209 = vadd.f32 %v2756, %v3208
    %v3210 = vpop.f32.mrb[0].mxu0
    %3211 = vmatprep.mubr.bf16.mxu0 0
    %3212 = vmatmul.mubr.bf16.gmra.mrb[0].mxu0 %v2853
    %v3213 = vpop.f32.mrb[0].mxu0
    %v3214 = vadd.f32 %v2756, %v3213
    %v3215 = vpop.f32.mrb[0].mxu0
    %v3216 = vpop.f32.mrb[0].mxu0
    %v3217 = vadd.f32 %v2756, %v3216
    %v3218 = vpop.f32.mrb[0].mxu0
    %3219 = vmatprep.mubr.bf16.mxu0 0
    %3220 = vmatmul.mubr.bf16.gmra.mrb[0].mxu0 %v2856
    %v3221 = vpop.f32.mrb[0].mxu0
    %v3222 = vadd.f32 %v2756, %v3221
    %v3223 = vpop.f32.mrb[0].mxu0
    %v3224 = vpop.f32.mrb[0].mxu0
    %v3225 = vadd.f32 %v2756, %v3224
    %v3226 = vpop.f32.mrb[0].mxu0
    %3227 = vmatprep.mubr.bf16.mxu0 0
    %3228 = vmatmul.mubr.bf16.gmra.mrb[0].mxu0 %v2859
    %v3229 = vpop.f32.mrb[0].mxu0
    %v3230 = vadd.f32 %v2756, %v3229
    %v3231 = vpop.f32.mrb[0].mxu0
    %v3232 = vpop.f32.mrb[0].mxu0
    %v3233 = vadd.f32 %v2756, %v3232
    %v3234 = vpop.f32.mrb[0].mxu0
    %3235 = vmatprep.mubr.bf16.mxu0 0
    %3236 = vmatmul.mubr.bf16.gmra.mrb[0].mxu0 %v2862
    %v3237 = vpop.f32.mrb[0].mxu0
    %v3238 = vadd.f32 %v2756, %v3237
    %v3239 = vpop.f32.mrb[0].mxu0
    %v3240 = vpop.f32.mrb[0].mxu0
    %v3241 = vadd.f32 %v2756, %v3240
    %v3242 = vpop.f32.mrb[0].mxu0
    %3243 = vmatprep.mubr.bf16.mxu0 0
    %3244 = vmatmul.mubr.bf16.gmra.mrb[0].mxu0 %v2865
    %v3245 = vpop.f32.mrb[0].mxu0
    %v3246 = vadd.f32 %v2756, %v3245
    %v3247 = vpop.f32.mrb[0].mxu0
    %v3248 = vpop.f32.mrb[0].mxu0
    %v3249 = vadd.f32 %v2756, %v3248
    %v3250 = vpop.f32.mrb[0].mxu0
    %3251 = vmatprep.mubr.bf16.mxu0 0
    %3252 = vmatmul.mubr.bf16.gmra.mrb[0].mxu0 %v2868
    %v3253 = vpop.f32.mrb[0].mxu0
    %v3254 = vadd.f32 %v2756, %v3253
    %v3255 = vpop.f32.mrb[0].mxu0
    %v3256 = vpop.f32.mrb[0].mxu0
    %v3257 = vadd.f32 %v2756, %v3256
    %v3258 = vpop.f32.mrb[0].mxu0
    %3259 = vmatprep.mubr.bf16.mxu0 0
    %3260 = vmatmul.mubr.bf16.gmra.mrb[0].mxu0 %v2871
    %v3261 = vpop.f32.mrb[0].mxu0
    %v3262 = vadd.f32 %v2756, %v3261
    %v3263 = vpop.f32.mrb[0].mxu0
    %v3264 = vpop.f32.mrb[0].mxu0
    %v3265 = vadd.f32 %v2756, %v3264
    %v3266 = vpop.f32.mrb[0].mxu0
    %3267 = vmatprep.mubr.bf16.mxu0 0
    %3268 = vmatmul.mubr.bf16.gmra.mrb[0].mxu0 %v2874
    %v3269 = vpop.f32.mrb[0].mxu0
    %v3270 = vadd.f32 %v2756, %v3269
    %v3271 = vpop.f32.mrb[0].mxu0
    %v3272 = vpop.f32.mrb[0].mxu0
    %v3273 = vadd.f32 %v2756, %v3272
    %v3274 = vpop.f32.mrb[0].mxu0
    %3275 = vmatprep.mubr.bf16.mxu0 0
    %3276 = vmatmul.mubr.bf16.gmra.mrb[0].mxu0 %v2877
    %v3277 = vpop.f32.mrb[0].mxu0
    %v3278 = vadd.f32 %v2756, %v3277
    %v3279 = vpop.f32.mrb[0].mxu0
    %v3280 = vpop.f32.mrb[0].mxu0
    %v3281 = vadd.f32 %v2756, %v3280
    %v3282 = vpop.f32.mrb[0].mxu0
    %3283 = vmatprep.mubr.bf16.mxu0 0
    %3284 = vmatmul.mubr.bf16.gmra.mrb[0].mxu0 %v2880
    %v3285 = vpop.f32.mrb[0].mxu0
    %v3286 = vadd.f32 %v2756, %v3285
    %v3287 = vpop.f32.mrb[0].mxu0
    %v3288 = vpop.f32.mrb[0].mxu0
    %v3289 = vadd.f32 %v2756, %v3288
    %v3290 = vpop.f32.mrb[0].mxu0
    %3291 = vmatprep.mubr.bf16.mxu0 0
    %3292 = vmatmul.mubr.bf16.gmra.mrb[0].mxu0 %v2883
    %v3293 = vpop.f32.mrb[0].mxu0
    %v3294 = vadd.f32 %v2756, %v3293
    %v3295 = vpop.f32.mrb[0].mxu0
    %v3296 = vpop.f32.mrb[0].mxu0
    %v3297 = vadd.f32 %v2756, %v3296
    %v3298 = vpop.f32.mrb[0].mxu0
    %3299 = vmatprep.mubr.bf16.mxu0 0
    %3300 = vmatmul.mubr.bf16.gmra.mrb[0].mxu0 %v2886
    %v3301 = vpop.f32.mrb[0].mxu0
    %v3302 = vadd.f32 %v2756, %v3301
    %v3303 = vpop.f32.mrb[0].mxu0
    %v3304 = vpop.f32.mrb[0].mxu0
    %v3305 = vadd.f32 %v2756, %v3304
    %v3306 = vpop.f32.mrb[0].mxu0
    %3307 = vmatprep.mubr.bf16.mxu0 0
    %3308 = vmatmul.mubr.bf16.gmra.mrb[0].mxu0 %v2889
    %v3309 = vpop.f32.mrb[0].mxu0
    %v3310 = vadd.f32 %v2756, %v3309
    %v3311 = vpop.f32.mrb[0].mxu0
    %v3312 = vpop.f32.mrb[0].mxu0
    %v3313 = vadd.f32 %v2756, %v3312
    %v3314 = vpop.f32.mrb[0].mxu0
    %3315 = vmatprep.mubr.bf16.mxu0 0
    %3316 = vmatmul.mubr.bf16.gmra.mrb[0].mxu0 %v2892
    %v3317 = vpop.f32.mrb[0].mxu0
    %v3318 = vadd.f32 %v2756, %v3317
    %v3319 = vpop.f32.mrb[0].mxu0
    %v3320 = vpop.f32.mrb[0].mxu0
    %v3321 = vadd.f32 %v2756, %v3320
    %v3322 = vpop.f32.mrb[0].mxu0
    %3323 = vmatprep.mubr.bf16.mxu0 0
    %3324 = vmatmul.mubr.bf16.gmra.mrb[0].mxu0 %v2895
    %v3325 = vpop.f32.mrb[0].mxu0
    %v3326 = vadd.f32 %v2756, %v3325
    %v3327 = vpop.f32.mrb[0].mxu0
    %v3328 = vpop.f32.mrb[0].mxu0
    %v3329 = vadd.f32 %v2756, %v3328
    %v3330 = vpop.f32.mrb[0].mxu0
    %3331 = vmatprep.mubr.bf16.mxu0 0
    %3332 = vmatmul.mubr.bf16.gmra.mrb[0].mxu0 %v2898
    %v3333 = vpop.f32.mrb[0].mxu0
    %v3334 = vadd.f32 %v2756, %v3333
    %v3335 = vpop.f32.mrb[0].mxu0
    %v3336 = vpop.f32.mrb[0].mxu0
    %v3337 = vadd.f32 %v2756, %v3336
    %v3338 = vpop.f32.mrb[0].mxu0
    %3339 = vmatprep.mubr.bf16.mxu0 0
    %3340 = vmatmul.mubr.bf16.gmra.mrb[0].mxu0 %v2901
    %v3341 = vpop.f32.mrb[0].mxu0
    %v3342 = vadd.f32 %v2756, %v3341
    %v3343 = vpop.f32.mrb[0].mxu0
    %v3344 = vpop.f32.mrb[0].mxu0
    %v3345 = vadd.f32 %v2756, %v3344
    %v3346 = vpop.f32.mrb[0].mxu0
    %3347 = vmatprep.mubr.bf16.mxu0 0
    %3348 = vmatmul.mubr.bf16.gmra.mrb[0].mxu0 %v2904
    %v3349 = vpop.f32.mrb[0].mxu0
    %v3350 = vadd.f32 %v2756, %v3349
    %v3351 = vpop.f32.mrb[0].mxu0
    %v3352 = vpop.f32.mrb[0].mxu0
    %v3353 = vadd.f32 %v2756, %v3352
    %v3354 = vpop.f32.mrb[0].mxu0
    %3355 = vmatprep.mubr.bf16.mxu0 0
    %3356 = vmatmul.mubr.bf16.gmra.mrb[0].mxu0 %v2907
    %v3357 = vpop.f32.mrb[0].mxu0
    %v3358 = vadd.f32 %v2756, %v3357
    %v3359 = vpop.f32.mrb[0].mxu0
    %v3360 = vpop.f32.mrb[0].mxu0
    %v3361 = vadd.f32 %v2756, %v3360
    %v3362 = vpop.f32.mrb[0].mxu0
    %3363 = vmatprep.mubr.bf16.mxu0 0
    %3364 = vmatmul.mubr.bf16.gmra.mrb[0].mxu0 %v2910
    %v3365 = vpop.f32.mrb[0].mxu0
    %v3366 = vadd.f32 %v2756, %v3365
    %v3367 = vpop.f32.mrb[0].mxu0
    %v3368 = vpop.f32.mrb[0].mxu0
    %v3369 = vadd.f32 %v2756, %v3368
    %v3370 = vpop.f32.mrb[0].mxu0
    %3371 = vmatprep.mubr.bf16.mxu0 0
    %3372 = vmatmul.mubr.bf16.gmra.mrb[0].mxu0 %v2913
    %v3373 = vpop.f32.mrb[0].mxu0
    %v3374 = vadd.f32 %v2756, %v3373
    %v3375 = vpop.f32.mrb[0].mxu0
    %v3376 = vpop.f32.mrb[0].mxu0
    %v3377 = vadd.f32 %v2756, %v3376
    %v3378 = vpop.f32.mrb[0].mxu0
    %3379 = vmatprep.mubr.bf16.mxu0 0
    %3380 = vmatmul.mubr.bf16.gmra.mrb[0].mxu0 %v2916
    %v3381 = vpop.f32.mrb[0].mxu0
    %v3382 = vadd.f32 %v2756, %v3381
    %v3383 = vpop.f32.mrb[0].mxu0
    %v3384 = vpop.f32.mrb[0].mxu0
    %v3385 = vadd.f32 %v2756, %v3384
    %v3386 = vpop.f32.mrb[0].mxu0
    %3387 = vmatprep.mubr.bf16.mxu0 0
    %3388 = vmatmul.mubr.bf16.gmra.mrb[0].mxu0 %v2919
    %v3389 = vpop.f32.mrb[0].mxu0
    %v3390 = vadd.f32 %v2756, %v3389
    %v3391 = vpop.f32.mrb[0].mxu0
    %v3392 = vpop.f32.mrb[0].mxu0
    %v3393 = vadd.f32 %v2756, %v3392
    %v3394 = vpop.f32.mrb[0].mxu0
    %3395 = vmatprep.mubr.bf16.mxu0 0
    %3396 = vmatmul.mubr.bf16.gmra.mrb[0].mxu0 %v2922
    %v3397 = vpop.f32.mrb[0].mxu0
    %v3398 = vadd.f32 %v2756, %v3397
    %v3399 = vpop.f32.mrb[0].mxu0
    %v3400 = vpop.f32.mrb[0].mxu0
    %v3401 = vadd.f32 %v2756, %v3400
    %v3402 = vpop.f32.mrb[0].mxu0
    %3403 = vmatprep.mubr.bf16.mxu0 0
    %3404 = vmatmul.mubr.bf16.gmra.mrb[0].mxu0 %v2925
    %v3405 = vpop.f32.mrb[0].mxu0
    %v3406 = vadd.f32 %v2756, %v3405
    %v3407 = vpop.f32.mrb[0].mxu0
    %v3408 = vpop.f32.mrb[0].mxu0
    %v3409 = vadd.f32 %v2756, %v3408
    %v3410 = vpop.f32.mrb[0].mxu0
    %3411 = vmatprep.mubr.bf16.mxu0 0
    %3412 = vmatmul.mubr.bf16.gmra.mrb[0].mxu0 %v2928
    %v3413 = vpop.f32.mrb[0].mxu0
    %v3414 = vadd.f32 %v2756, %v3413
    %v3415 = vpop.f32.mrb[0].mxu0
    %v3416 = vpop.f32.mrb[0].mxu0
    %v3417 = vadd.f32 %v2756, %v3416
    %v3418 = vpop.f32.mrb[0].mxu0
    %3419 = vmatprep.mubr.bf16.mxu0 0
    %3420 = vmatmul.mubr.bf16.gmra.mrb[0].mxu0 %v2931
    %v3421 = vpop.f32.mrb[0].mxu0
    %v3422 = vadd.f32 %v2756, %v3421
    %v3423 = vpop.f32.mrb[0].mxu0
    %v3424 = vpop.f32.mrb[0].mxu0
    %v3425 = vadd.f32 %v2756, %v3424
    %v3426 = vpop.f32.mrb[0].mxu0
    %3427 = vmatprep.mubr.bf16.mxu0 0
    %3428 = vmatmul.mubr.bf16.gmra.mrb[0].mxu0 %v2934
    %v3429 = vpop.f32.mrb[0].mxu0
    %v3430 = vadd.f32 %v2756, %v3429
    %v3431 = vpop.f32.mrb[0].mxu0
    %v3432 = vpop.f32.mrb[0].mxu0
    %v3433 = vadd.f32 %v2756, %v3432
    %v3434 = vpop.f32.mrb[0].mxu0
    %3435 = vmatprep.mubr.bf16.mxu0 0
    %3436 = vmatmul.mubr.bf16.gmra.mrb[0].mxu0 %v2937
    %v3437 = vpop.f32.mrb[0].mxu0
    %v3438 = vadd.f32 %v2756, %v3437
    %v3439 = vpop.f32.mrb[0].mxu0
    %v3440 = vpop.f32.mrb[0].mxu0
    %v3441 = vadd.f32 %v2756, %v3440
    %v3442 = vpop.f32.mrb[0].mxu0
    %3443 = vmatprep.mubr.bf16.mxu0 0
    %3444 = vmatmul.mubr.bf16.gmra.mrb[0].mxu0 %v2940
    %v3445 = vpop.f32.mrb[0].mxu0
    %v3446 = vadd.f32 %v2756, %v3445
    %v3447 = vpop.f32.mrb[0].mxu0
    %v3448 = vpop.f32.mrb[0].mxu0
    %v3449 = vadd.f32 %v2756, %v3448
    %v3450 = vpop.f32.mrb[0].mxu0
    %3451 = vmatprep.mubr.bf16.mxu0 0
    %3452 = vmatmul.mubr.bf16.gmra.mrb[0].mxu0 %v2943
    %v3453 = vpop.f32.mrb[0].mxu0
    %v3454 = vadd.f32 %v2756, %v3453
    %v3455 = vpop.f32.mrb[0].mxu0
    %v3456 = vpop.f32.mrb[0].mxu0
    %v3457 = vadd.f32 %v2756, %v3456
    %v3458 = vpop.f32.mrb[0].mxu0
    %3459 = vmatprep.mubr.bf16.mxu0 0
    %3460 = vmatmul.mubr.bf16.gmra.mrb[0].mxu0 %v2946
    %v3461 = vpop.f32.mrb[0].mxu0
    %v3462 = vadd.f32 %v2756, %v3461
    %v3463 = vpop.f32.mrb[0].mxu0
    %v3464 = vpop.f32.mrb[0].mxu0
    %v3465 = vadd.f32 %v2756, %v3464
    %v3466 = vpop.f32.mrb[0].mxu0
    %3467 = vmatprep.mubr.bf16.mxu0 0
    %3468 = vmatmul.mubr.bf16.gmra.mrb[0].mxu0 %v2949
    %v3469 = vpop.f32.mrb[0].mxu0
    %v3470 = vadd.f32 %v2756, %v3469
    %v3471 = vpop.f32.mrb[0].mxu0
    %v3472 = vpop.f32.mrb[0].mxu0
    %v3473 = vadd.f32 %v2756, %v3472
    %v3474 = vpop.f32.mrb[0].mxu0
    %3475 = vmatprep.mubr.bf16.mxu0 0
    %3476 = vmatmul.mubr.bf16.gmra.mrb[0].mxu0 %v2952
    %v3477 = vpop.f32.mrb[0].mxu0
    %v3478 = vadd.f32 %v2756, %v3477
    %v3479 = vpop.f32.mrb[0].mxu0
    %v3480 = vpop.f32.mrb[0].mxu0
    %v3481 = vadd.f32 %v2756, %v3480
    %v3482 = vpop.f32.mrb[0].mxu0
    %3483 = vmatprep.mubr.bf16.mxu0 0
    %3484 = vmatmul.mubr.bf16.gmra.mrb[0].mxu0 %v2955
    %v3485 = vpop.f32.mrb[0].mxu0
    %v3486 = vadd.f32 %v2756, %v3485
    %v3487 = vpop.f32.mrb[0].mxu0
    %v3488 = vpop.f32.mrb[0].mxu0
    %v3489 = vadd.f32 %v2756, %v3488
    %v3490 = vpop.f32.mrb[0].mxu0
    %3491 = vmatprep.mubr.bf16.mxu0 0
    %3492 = vmatmul.mubr.bf16.gmra.mrb[0].mxu0 %v2958
    %v3493 = vpop.f32.mrb[0].mxu0
    %v3494 = vadd.f32 %v2756, %v3493
    %v3495 = vpop.f32.mrb[0].mxu0
    %v3496 = vpop.f32.mrb[0].mxu0
    %v3497 = vadd.f32 %v2756, %v3496
    %v3498 = vpop.f32.mrb[0].mxu0
    %3499 = vmatprep.mubr.bf16.mxu0 0
    %3500 = vmatmul.mubr.bf16.gmra.mrb[0].mxu0 %v2961
    %v3501 = vpop.f32.mrb[0].mxu0
    %v3502 = vadd.f32 %v2756, %v3501
    %v3503 = vpop.f32.mrb[0].mxu0
    %v3504 = vpop.f32.mrb[0].mxu0
    %v3505 = vadd.f32 %v2756, %v3504
    %v3506 = vpop.f32.mrb[0].mxu0
    %3507 = vdwg.mxu0
    %v3508 = vmax.f32 %v2998, 0.0
    %v3509 = vmax.f32 %v3001, 0.0
    %v3510 = vmax.f32 %v3006, 0.0
    %v3511 = vmax.f32 %v3009, 0.0
    %v3512 = vmax.f32 %v3014, 0.0
    %v3513 = vmax.f32 %v3017, 0.0
    %v3514 = vmax.f32 %v3022, 0.0
    %v3515 = vmax.f32 %v3025, 0.0
    %v3516 = vmax.f32 %v3030, 0.0
    %v3517 = vmax.f32 %v3033, 0.0
    %v3518 = vmax.f32 %v3038, 0.0
    %v3519 = vmax.f32 %v3041, 0.0
    %v3520 = vmax.f32 %v3046, 0.0
    %v3521 = vmax.f32 %v3049, 0.0
    %v3522 = vmax.f32 %v3054, 0.0
    %v3523 = vmax.f32 %v3057, 0.0
    %v3524 = vmax.f32 %v3062, 0.0
    %v3525 = vmax.f32 %v3065, 0.0
    %v3526 = vmax.f32 %v3070, 0.0
    %v3527 = vmax.f32 %v3073, 0.0
    %v3528 = vmax.f32 %v3078, 0.0
    %v3529 = vmax.f32 %v3081, 0.0
    %v3530 = vmax.f32 %v3086, 0.0
    %v3531 = vmax.f32 %v3089, 0.0
    %v3532 = vmax.f32 %v3094, 0.0
    %v3533 = vmax.f32 %v3097, 0.0
    %v3534 = vmax.f32 %v3102, 0.0
    %v3535 = vmax.f32 %v3105, 0.0
    %v3536 = vmax.f32 %v3110, 0.0
    %v3537 = vmax.f32 %v3113, 0.0
    %v3538 = vmax.f32 %v3118, 0.0
    %v3539 = vmax.f32 %v3121, 0.0
    %v3540 = vmax.f32 %v3126, 0.0
    %v3541 = vmax.f32 %v3129, 0.0
    %v3542 = vmax.f32 %v3134, 0.0
    %v3543 = vmax.f32 %v3137, 0.0
    %v3544 = vmax.f32 %v3142, 0.0
    %v3545 = vmax.f32 %v3145, 0.0
    %v3546 = vmax.f32 %v3150, 0.0
    %v3547 = vmax.f32 %v3153, 0.0
    %v3548 = vmax.f32 %v3158, 0.0
    %v3549 = vmax.f32 %v3161, 0.0
    %v3550 = vmax.f32 %v3166, 0.0
    %v3551 = vmax.f32 %v3169, 0.0
    %v3552 = vmax.f32 %v3174, 0.0
    %v3553 = vmax.f32 %v3177, 0.0
    %v3554 = vmax.f32 %v3182, 0.0
    %v3555 = vmax.f32 %v3185, 0.0
    %v3556 = vmax.f32 %v3190, 0.0
    %v3557 = vmax.f32 %v3193, 0.0
    %v3558 = vmax.f32 %v3198, 0.0
    %v3559 = vmax.f32 %v3201, 0.0
    %v3560 = vmax.f32 %v3206, 0.0
    %v3561 = vmax.f32 %v3209, 0.0
    %v3562 = vmax.f32 %v3214, 0.0
    %v3563 = vmax.f32 %v3217, 0.0
    %v3564 = vmax.f32 %v3222, 0.0
    %v3565 = vmax.f32 %v3225, 0.0
    %v3566 = vmax.f32 %v3230, 0.0
    %v3567 = vmax.f32 %v3233, 0.0
    %v3568 = vmax.f32 %v3238, 0.0
    %v3569 = vmax.f32 %v3241, 0.0
    %v3570 = vmax.f32 %v3246, 0.0
    %v3571 = vmax.f32 %v3249, 0.0
    %v3572 = vmax.f32 %v3254, 0.0
    %v3573 = vmax.f32 %v3257, 0.0
    %v3574 = vmax.f32 %v3262, 0.0
    %v3575 = vmax.f32 %v3265, 0.0
    %v3576 = vmax.f32 %v3270, 0.0
    %v3577 = vmax.f32 %v3273, 0.0
    %v3578 = vmax.f32 %v3278, 0.0
    %v3579 = vmax.f32 %v3281, 0.0
    %v3580 = vmax.f32 %v3286, 0.0
    %v3581 = vmax.f32 %v3289, 0.0
    %v3582 = vmax.f32 %v3294, 0.0
    %v3583 = vmax.f32 %v3297, 0.0
    %v3584 = vmax.f32 %v3302, 0.0
    %v3585 = vmax.f32 %v3305, 0.0
    %v3586 = vmax.f32 %v3310, 0.0
    %v3587 = vmax.f32 %v3313, 0.0
    %v3588 = vmax.f32 %v3318, 0.0
    %v3589 = vmax.f32 %v3321, 0.0
    %v3590 = vmax.f32 %v3326, 0.0
    %v3591 = vmax.f32 %v3329, 0.0
    %v3592 = vmax.f32 %v3334, 0.0
    %v3593 = vmax.f32 %v3337, 0.0
    %v3594 = vmax.f32 %v3342, 0.0
    %v3595 = vmax.f32 %v3345, 0.0
    %v3596 = vmax.f32 %v3350, 0.0
    %v3597 = vmax.f32 %v3353, 0.0
    %v3598 = vmax.f32 %v3358, 0.0
    %v3599 = vmax.f32 %v3361, 0.0
    %v3600 = vmax.f32 %v3366, 0.0
    %v3601 = vmax.f32 %v3369, 0.0
    %v3602 = vmax.f32 %v3374, 0.0
    %v3603 = vmax.f32 %v3377, 0.0
    %v3604 = vmax.f32 %v3382, 0.0
    %v3605 = vmax.f32 %v3385, 0.0
    %v3606 = vmax.f32 %v3390, 0.0
    %v3607 = vmax.f32 %v3393, 0.0
    %v3608 = vmax.f32 %v3398, 0.0
    %v3609 = vmax.f32 %v3401, 0.0
    %v3610 = vmax.f32 %v3406, 0.0
    %v3611 = vmax.f32 %v3409, 0.0
    %v3612 = vmax.f32 %v3414, 0.0
    %v3613 = vmax.f32 %v3417, 0.0
    %v3614 = vmax.f32 %v3422, 0.0
    %v3615 = vmax.f32 %v3425, 0.0
    %v3616 = vmax.f32 %v3430, 0.0
    %v3617 = vmax.f32 %v3433, 0.0
    %v3618 = vmax.f32 %v3438, 0.0
    %v3619 = vmax.f32 %v3441, 0.0
    %v3620 = vmax.f32 %v3446, 0.0
    %v3621 = vmax.f32 %v3449, 0.0
    %v3622 = vmax.f32 %v3454, 0.0
    %v3623 = vmax.f32 %v3457, 0.0
    %v3624 = vmax.f32 %v3462, 0.0
    %v3625 = vmax.f32 %v3465, 0.0
    %v3626 = vmax.f32 %v3470, 0.0
    %v3627 = vmax.f32 %v3473, 0.0
    %v3628 = vmax.f32 %v3478, 0.0
    %v3629 = vmax.f32 %v3481, 0.0
    %v3630 = vmax.f32 %v3486, 0.0
    %v3631 = vmax.f32 %v3489, 0.0
    %v3632 = vmax.f32 %v3494, 0.0
    %v3633 = vmax.f32 %v3497, 0.0
    %v3634 = vmax.f32 %v3502, 0.0
    %v3635 = vmax.f32 %v3505, 0.0
    %v3636 = vld [vmem:[%s7] sm:$0x1]
    %v3637 = vunpack.c.l.bf16 %v3636
    %v3638 = vlaneseq
    %v3639 = vshrl.u32 %v3638, 7
    %v3640 = vsub.s32 0, %v3639
    %v3641 = vrot.slane %v3637, %v3640
    %v3642 = vmul.f32 %v3508, %v3641
    %v3643 = vmul.f32 %v3509, %v3641
    %v3644 = vmul.f32 %v3510, %v3641
    %v3645 = vmul.f32 %v3511, %v3641
    %v3646 = vmul.f32 %v3512, %v3641
    %v3647 = vmul.f32 %v3513, %v3641
    %v3648 = vmul.f32 %v3514, %v3641
    %v3649 = vmul.f32 %v3515, %v3641
    %v3650 = vmul.f32 %v3516, %v3641
    %v3651 = vmul.f32 %v3517, %v3641
    %v3652 = vmul.f32 %v3518, %v3641
    %v3653 = vmul.f32 %v3519, %v3641
    %v3654 = vmul.f32 %v3520, %v3641
    %v3655 = vmul.f32 %v3521, %v3641
    %v3656 = vmul.f32 %v3522, %v3641
    %v3657 = vmul.f32 %v3523, %v3641
    %v3658 = vmul.f32 %v3524, %v3641
    %v3659 = vmul.f32 %v3525, %v3641
    %v3660 = vmul.f32 %v3526, %v3641
    %v3661 = vmul.f32 %v3527, %v3641
    %v3662 = vmul.f32 %v3528, %v3641
    %v3663 = vmul.f32 %v3529, %v3641
    %v3664 = vmul.f32 %v3530, %v3641
    %v3665 = vmul.f32 %v3531, %v3641
    %v3666 = vmul.f32 %v3532, %v3641
    %v3667 = vmul.f32 %v3533, %v3641
    %v3668 = vmul.f32 %v3534, %v3641
    %v3669 = vmul.f32 %v3535, %v3641
    %v3670 = vmul.f32 %v3536, %v3641
    %v3671 = vmul.f32 %v3537, %v3641
    %v3672 = vmul.f32 %v3538, %v3641
    %v3673 = vmul.f32 %v3539, %v3641
    %v3674 = vmul.f32 %v3540, %v3641
    %v3675 = vmul.f32 %v3541, %v3641
    %v3676 = vmul.f32 %v3542, %v3641
    %v3677 = vmul.f32 %v3543, %v3641
    %v3678 = vmul.f32 %v3544, %v3641
    %v3679 = vmul.f32 %v3545, %v3641
    %v3680 = vmul.f32 %v3546, %v3641
    %v3681 = vmul.f32 %v3547, %v3641
    %v3682 = vmul.f32 %v3548, %v3641
    %v3683 = vmul.f32 %v3549, %v3641
    %v3684 = vmul.f32 %v3550, %v3641
    %v3685 = vmul.f32 %v3551, %v3641
    %v3686 = vmul.f32 %v3552, %v3641
    %v3687 = vmul.f32 %v3553, %v3641
    %v3688 = vmul.f32 %v3554, %v3641
    %v3689 = vmul.f32 %v3555, %v3641
    %v3690 = vmul.f32 %v3556, %v3641
    %v3691 = vmul.f32 %v3557, %v3641
    %v3692 = vmul.f32 %v3558, %v3641
    %v3693 = vmul.f32 %v3559, %v3641
    %v3694 = vmul.f32 %v3560, %v3641
    %v3695 = vmul.f32 %v3561, %v3641
    %v3696 = vmul.f32 %v3562, %v3641
    %v3697 = vmul.f32 %v3563, %v3641
    %v3698 = vmul.f32 %v3564, %v3641
    %v3699 = vmul.f32 %v3565, %v3641
    %v3700 = vmul.f32 %v3566, %v3641
    %v3701 = vmul.f32 %v3567, %v3641
    %v3702 = vmul.f32 %v3568, %v3641
    %v3703 = vmul.f32 %v3569, %v3641
    %v3704 = vmul.f32 %v3570, %v3641
    %v3705 = vmul.f32 %v3571, %v3641
    %v3706 = vmul.f32 %v3572, %v3641
    %v3707 = vmul.f32 %v3573, %v3641
    %v3708 = vmul.f32 %v3574, %v3641
    %v3709 = vmul.f32 %v3575, %v3641
    %v3710 = vmul.f32 %v3576, %v3641
    %v3711 = vmul.f32 %v3577, %v3641
    %v3712 = vmul.f32 %v3578, %v3641
    %v3713 = vmul.f32 %v3579, %v3641
    %v3714 = vmul.f32 %v3580, %v3641
    %v3715 = vmul.f32 %v3581, %v3641
    %v3716 = vmul.f32 %v3582, %v3641
    %v3717 = vmul.f32 %v3583, %v3641
    %v3718 = vmul.f32 %v3584, %v3641
    %v3719 = vmul.f32 %v3585, %v3641
    %v3720 = vmul.f32 %v3586, %v3641
    %v3721 = vmul.f32 %v3587, %v3641
    %v3722 = vmul.f32 %v3588, %v3641
    %v3723 = vmul.f32 %v3589, %v3641
    %v3724 = vmul.f32 %v3590, %v3641
    %v3725 = vmul.f32 %v3591, %v3641
    %v3726 = vmul.f32 %v3592, %v3641
    %v3727 = vmul.f32 %v3593, %v3641
    %v3728 = vmul.f32 %v3594, %v3641
    %v3729 = vmul.f32 %v3595, %v3641
    %v3730 = vmul.f32 %v3596, %v3641
    %v3731 = vmul.f32 %v3597, %v3641
    %v3732 = vmul.f32 %v3598, %v3641
    %v3733 = vmul.f32 %v3599, %v3641
    %v3734 = vmul.f32 %v3600, %v3641
    %v3735 = vmul.f32 %v3601, %v3641
    %v3736 = vmul.f32 %v3602, %v3641
    %v3737 = vmul.f32 %v3603, %v3641
    %v3738 = vmul.f32 %v3604, %v3641
    %v3739 = vmul.f32 %v3605, %v3641
    %v3740 = vmul.f32 %v3606, %v3641
    %v3741 = vmul.f32 %v3607, %v3641
    %v3742 = vmul.f32 %v3608, %v3641
    %v3743 = vmul.f32 %v3609, %v3641
    %v3744 = vmul.f32 %v3610, %v3641
    %v3745 = vmul.f32 %v3611, %v3641
    %v3746 = vmul.f32 %v3612, %v3641
    %v3747 = vmul.f32 %v3613, %v3641
    %v3748 = vmul.f32 %v3614, %v3641
    %v3749 = vmul.f32 %v3615, %v3641
    %v3750 = vmul.f32 %v3616, %v3641
    %v3751 = vmul.f32 %v3617, %v3641
    %v3752 = vmul.f32 %v3618, %v3641
    %v3753 = vmul.f32 %v3619, %v3641
    %v3754 = vmul.f32 %v3620, %v3641
    %v3755 = vmul.f32 %v3621, %v3641
    %v3756 = vmul.f32 %v3622, %v3641
    %v3757 = vmul.f32 %v3623, %v3641
    %v3758 = vmul.f32 %v3624, %v3641
    %v3759 = vmul.f32 %v3625, %v3641
    %v3760 = vmul.f32 %v3626, %v3641
    %v3761 = vmul.f32 %v3627, %v3641
    %v3762 = vmul.f32 %v3628, %v3641
    %v3763 = vmul.f32 %v3629, %v3641
    %v3764 = vmul.f32 %v3630, %v3641
    %v3765 = vmul.f32 %v3631, %v3641
    %v3766 = vmul.f32 %v3632, %v3641
    %v3767 = vmul.f32 %v3633, %v3641
    %v3768 = vmul.f32 %v3634, %v3641
    %v3769 = vmul.f32 %v3635, %v3641
    %v3770 = vsel %vm2770, %v3642, 0.0
    %3771 = vadd.xlane.f32.xlu0 %v3770
    %v3772 = vpop.xlane.xlu0 %3771
    %v3773 = vsel %vm2770, %v3643, 0.0
    %3774 = vadd.xlane.f32.xlu0 %v3773
    %v3775 = vpop.xlane.xlu0 %3774
    %v3776 = vsel %vm2770, %v3644, 0.0
    %3777 = vadd.xlane.f32.xlu0 %v3776
    %v3778 = vpop.xlane.xlu0 %3777
    %v3779 = vsel %vm2770, %v3645, 0.0
    %3780 = vadd.xlane.f32.xlu0 %v3779
    %v3781 = vpop.xlane.xlu0 %3780
    %v3782 = vsel %vm2770, %v3646, 0.0
    %3783 = vadd.xlane.f32.xlu0 %v3782
    %v3784 = vpop.xlane.xlu0 %3783
    %v3785 = vsel %vm2770, %v3647, 0.0
    %3786 = vadd.xlane.f32.xlu0 %v3785
    %v3787 = vpop.xlane.xlu0 %3786
    %v3788 = vsel %vm2770, %v3648, 0.0
    %3789 = vadd.xlane.f32.xlu0 %v3788
    %v3790 = vpop.xlane.xlu0 %3789
    %v3791 = vsel %vm2770, %v3649, 0.0
    %3792 = vadd.xlane.f32.xlu0 %v3791
    %v3793 = vpop.xlane.xlu0 %3792
    %v3794 = vsel %vm2770, %v3650, 0.0
    %3795 = vadd.xlane.f32.xlu0 %v3794
    %v3796 = vpop.xlane.xlu0 %3795
    %v3797 = vsel %vm2770, %v3651, 0.0
    %3798 = vadd.xlane.f32.xlu0 %v3797
    %v3799 = vpop.xlane.xlu0 %3798
    %v3800 = vsel %vm2770, %v3652, 0.0
    %3801 = vadd.xlane.f32.xlu0 %v3800
    %v3802 = vpop.xlane.xlu0 %3801
    %v3803 = vsel %vm2770, %v3653, 0.0
    %3804 = vadd.xlane.f32.xlu0 %v3803
    %v3805 = vpop.xlane.xlu0 %3804
    %v3806 = vsel %vm2770, %v3654, 0.0
    %3807 = vadd.xlane.f32.xlu0 %v3806
    %v3808 = vpop.xlane.xlu0 %3807
    %v3809 = vsel %vm2770, %v3655, 0.0
    %3810 = vadd.xlane.f32.xlu0 %v3809
    %v3811 = vpop.xlane.xlu0 %3810
    %v3812 = vsel %vm2770, %v3656, 0.0
    %3813 = vadd.xlane.f32.xlu0 %v3812
    %v3814 = vpop.xlane.xlu0 %3813
    %v3815 = vsel %vm2770, %v3657, 0.0
    %3816 = vadd.xlane.f32.xlu0 %v3815
    %v3817 = vpop.xlane.xlu0 %3816
    %v3818 = vsel %vm2770, %v3658, 0.0
    %3819 = vadd.xlane.f32.xlu0 %v3818
    %v3820 = vpop.xlane.xlu0 %3819
    %v3821 = vsel %vm2770, %v3659, 0.0
    %3822 = vadd.xlane.f32.xlu0 %v3821
    %v3823 = vpop.xlane.xlu0 %3822
    %v3824 = vsel %vm2770, %v3660, 0.0
    %3825 = vadd.xlane.f32.xlu0 %v3824
    %v3826 = vpop.xlane.xlu0 %3825
    %v3827 = vsel %vm2770, %v3661, 0.0
    %3828 = vadd.xlane.f32.xlu0 %v3827
    %v3829 = vpop.xlane.xlu0 %3828
    %v3830 = vsel %vm2770, %v3662, 0.0
    %3831 = vadd.xlane.f32.xlu0 %v3830
    %v3832 = vpop.xlane.xlu0 %3831
    %v3833 = vsel %vm2770, %v3663, 0.0
    %3834 = vadd.xlane.f32.xlu0 %v3833
    %v3835 = vpop.xlane.xlu0 %3834
    %v3836 = vsel %vm2770, %v3664, 0.0
    %3837 = vadd.xlane.f32.xlu0 %v3836
    %v3838 = vpop.xlane.xlu0 %3837
    %v3839 = vsel %vm2770, %v3665, 0.0
    %3840 = vadd.xlane.f32.xlu0 %v3839
    %v3841 = vpop.xlane.xlu0 %3840
    %v3842 = vsel %vm2770, %v3666, 0.0
    %3843 = vadd.xlane.f32.xlu0 %v3842
    %v3844 = vpop.xlane.xlu0 %3843
    %v3845 = vsel %vm2770, %v3667, 0.0
    %3846 = vadd.xlane.f32.xlu0 %v3845
    %v3847 = vpop.xlane.xlu0 %3846
    %v3848 = vsel %vm2770, %v3668, 0.0
    %3849 = vadd.xlane.f32.xlu0 %v3848
    %v3850 = vpop.xlane.xlu0 %3849
    %v3851 = vsel %vm2770, %v3669, 0.0
    %3852 = vadd.xlane.f32.xlu0 %v3851
    %v3853 = vpop.xlane.xlu0 %3852
    %v3854 = vsel %vm2770, %v3670, 0.0
    %3855 = vadd.xlane.f32.xlu0 %v3854
    %v3856 = vpop.xlane.xlu0 %3855
    %v3857 = vsel %vm2770, %v3671, 0.0
    %3858 = vadd.xlane.f32.xlu0 %v3857
    %v3859 = vpop.xlane.xlu0 %3858
    %v3860 = vsel %vm2770, %v3672, 0.0
    %3861 = vadd.xlane.f32.xlu0 %v3860
    %v3862 = vpop.xlane.xlu0 %3861
    %v3863 = vsel %vm2770, %v3673, 0.0
    %3864 = vadd.xlane.f32.xlu0 %v3863
    %v3865 = vpop.xlane.xlu0 %3864
    %v3866 = vsel %vm2770, %v3674, 0.0
    %3867 = vadd.xlane.f32.xlu0 %v3866
    %v3868 = vpop.xlane.xlu0 %3867
    %v3869 = vsel %vm2770, %v3675, 0.0
    %3870 = vadd.xlane.f32.xlu0 %v3869
    %v3871 = vpop.xlane.xlu0 %3870
    %v3872 = vsel %vm2770, %v3676, 0.0
    %3873 = vadd.xlane.f32.xlu0 %v3872
    %v3874 = vpop.xlane.xlu0 %3873
    %v3875 = vsel %vm2770, %v3677, 0.0
    %3876 = vadd.xlane.f32.xlu0 %v3875
    %v3877 = vpop.xlane.xlu0 %3876
    %v3878 = vsel %vm2770, %v3678, 0.0
    %3879 = vadd.xlane.f32.xlu0 %v3878
    %v3880 = vpop.xlane.xlu0 %3879
    %v3881 = vsel %vm2770, %v3679, 0.0
    %3882 = vadd.xlane.f32.xlu0 %v3881
    %v3883 = vpop.xlane.xlu0 %3882
    %v3884 = vsel %vm2770, %v3680, 0.0
    %3885 = vadd.xlane.f32.xlu0 %v3884
    %v3886 = vpop.xlane.xlu0 %3885
    %v3887 = vsel %vm2770, %v3681, 0.0
    %3888 = vadd.xlane.f32.xlu0 %v3887
    %v3889 = vpop.xlane.xlu0 %3888
    %v3890 = vsel %vm2770, %v3682, 0.0
    %3891 = vadd.xlane.f32.xlu0 %v3890
    %v3892 = vpop.xlane.xlu0 %3891
    %v3893 = vsel %vm2770, %v3683, 0.0
    %3894 = vadd.xlane.f32.xlu0 %v3893
    %v3895 = vpop.xlane.xlu0 %3894
    %v3896 = vsel %vm2770, %v3684, 0.0
    %3897 = vadd.xlane.f32.xlu0 %v3896
    %v3898 = vpop.xlane.xlu0 %3897
    %v3899 = vsel %vm2770, %v3685, 0.0
    %3900 = vadd.xlane.f32.xlu0 %v3899
    %v3901 = vpop.xlane.xlu0 %3900
    %v3902 = vsel %vm2770, %v3686, 0.0
    %3903 = vadd.xlane.f32.xlu0 %v3902
    %v3904 = vpop.xlane.xlu0 %3903
    %v3905 = vsel %vm2770, %v3687, 0.0
    %3906 = vadd.xlane.f32.xlu0 %v3905
    %v3907 = vpop.xlane.xlu0 %3906
    %v3908 = vsel %vm2770, %v3688, 0.0
    %3909 = vadd.xlane.f32.xlu0 %v3908
    %v3910 = vpop.xlane.xlu0 %3909
    %v3911 = vsel %vm2770, %v3689, 0.0
    %3912 = vadd.xlane.f32.xlu0 %v3911
    %v3913 = vpop.xlane.xlu0 %3912
    %v3914 = vsel %vm2770, %v3690, 0.0
    %3915 = vadd.xlane.f32.xlu0 %v3914
    %v3916 = vpop.xlane.xlu0 %3915
    %v3917 = vsel %vm2770, %v3691, 0.0
    %3918 = vadd.xlane.f32.xlu0 %v3917
    %v3919 = vpop.xlane.xlu0 %3918
    %v3920 = vsel %vm2770, %v3692, 0.0
    %3921 = vadd.xlane.f32.xlu0 %v3920
    %v3922 = vpop.xlane.xlu0 %3921
    %v3923 = vsel %vm2770, %v3693, 0.0
    %3924 = vadd.xlane.f32.xlu0 %v3923
    %v3925 = vpop.xlane.xlu0 %3924
    %v3926 = vsel %vm2770, %v3694, 0.0
    %3927 = vadd.xlane.f32.xlu0 %v3926
    %v3928 = vpop.xlane.xlu0 %3927
    %v3929 = vsel %vm2770, %v3695, 0.0
    %3930 = vadd.xlane.f32.xlu0 %v3929
    %v3931 = vpop.xlane.xlu0 %3930
    %v3932 = vsel %vm2770, %v3696, 0.0
    %3933 = vadd.xlane.f32.xlu0 %v3932
    %v3934 = vpop.xlane.xlu0 %3933
    %v3935 = vsel %vm2770, %v3697, 0.0
    %3936 = vadd.xlane.f32.xlu0 %v3935
    %v3937 = vpop.xlane.xlu0 %3936
    %v3938 = vsel %vm2770, %v3698, 0.0
    %3939 = vadd.xlane.f32.xlu0 %v3938
    %v3940 = vpop.xlane.xlu0 %3939
    %v3941 = vsel %vm2770, %v3699, 0.0
    %3942 = vadd.xlane.f32.xlu0 %v3941
    %v3943 = vpop.xlane.xlu0 %3942
    %v3944 = vsel %vm2770, %v3700, 0.0
    %3945 = vadd.xlane.f32.xlu0 %v3944
    %v3946 = vpop.xlane.xlu0 %3945
    %v3947 = vsel %vm2770, %v3701, 0.0
    %3948 = vadd.xlane.f32.xlu0 %v3947
    %v3949 = vpop.xlane.xlu0 %3948
    %v3950 = vsel %vm2770, %v3702, 0.0
    %3951 = vadd.xlane.f32.xlu0 %v3950
    %v3952 = vpop.xlane.xlu0 %3951
    %v3953 = vsel %vm2770, %v3703, 0.0
    %3954 = vadd.xlane.f32.xlu0 %v3953
    %v3955 = vpop.xlane.xlu0 %3954
    %v3956 = vsel %vm2770, %v3704, 0.0
    %3957 = vadd.xlane.f32.xlu0 %v3956
    %v3958 = vpop.xlane.xlu0 %3957
    %v3959 = vsel %vm2770, %v3705, 0.0
    %3960 = vadd.xlane.f32.xlu0 %v3959
    %v3961 = vpop.xlane.xlu0 %3960
    %v3962 = vsel %vm2770, %v3706, 0.0
    %3963 = vadd.xlane.f32.xlu0 %v3962
    %v3964 = vpop.xlane.xlu0 %3963
    %v3965 = vsel %vm2770, %v3707, 0.0
    %3966 = vadd.xlane.f32.xlu0 %v3965
    %v3967 = vpop.xlane.xlu0 %3966
    %v3968 = vsel %vm2770, %v3708, 0.0
    %3969 = vadd.xlane.f32.xlu0 %v3968
    %v3970 = vpop.xlane.xlu0 %3969
    %v3971 = vsel %vm2770, %v3709, 0.0
    %3972 = vadd.xlane.f32.xlu0 %v3971
    %v3973 = vpop.xlane.xlu0 %3972
    %v3974 = vsel %vm2770, %v3710, 0.0
    %3975 = vadd.xlane.f32.xlu0 %v3974
    %v3976 = vpop.xlane.xlu0 %3975
    %v3977 = vsel %vm2770, %v3711, 0.0
    %3978 = vadd.xlane.f32.xlu0 %v3977
    %v3979 = vpop.xlane.xlu0 %3978
    %v3980 = vsel %vm2770, %v3712, 0.0
    %3981 = vadd.xlane.f32.xlu0 %v3980
    %v3982 = vpop.xlane.xlu0 %3981
    %v3983 = vsel %vm2770, %v3713, 0.0
    %3984 = vadd.xlane.f32.xlu0 %v3983
    %v3985 = vpop.xlane.xlu0 %3984
    %v3986 = vsel %vm2770, %v3714, 0.0
    %3987 = vadd.xlane.f32.xlu0 %v3986
    %v3988 = vpop.xlane.xlu0 %3987
    %v3989 = vsel %vm2770, %v3715, 0.0
    %3990 = vadd.xlane.f32.xlu0 %v3989
    %v3991 = vpop.xlane.xlu0 %3990
    %v3992 = vsel %vm2770, %v3716, 0.0
    %3993 = vadd.xlane.f32.xlu0 %v3992
    %v3994 = vpop.xlane.xlu0 %3993
    %v3995 = vsel %vm2770, %v3717, 0.0
    %3996 = vadd.xlane.f32.xlu0 %v3995
    %v3997 = vpop.xlane.xlu0 %3996
    %v3998 = vsel %vm2770, %v3718, 0.0
    %3999 = vadd.xlane.f32.xlu0 %v3998
    %v4000 = vpop.xlane.xlu0 %3999
    %v4001 = vsel %vm2770, %v3719, 0.0
    %4002 = vadd.xlane.f32.xlu0 %v4001
    %v4003 = vpop.xlane.xlu0 %4002
    %v4004 = vsel %vm2770, %v3720, 0.0
    %4005 = vadd.xlane.f32.xlu0 %v4004
    %v4006 = vpop.xlane.xlu0 %4005
    %v4007 = vsel %vm2770, %v3721, 0.0
    %4008 = vadd.xlane.f32.xlu0 %v4007
    %v4009 = vpop.xlane.xlu0 %4008
    %v4010 = vsel %vm2770, %v3722, 0.0
    %4011 = vadd.xlane.f32.xlu0 %v4010
    %v4012 = vpop.xlane.xlu0 %4011
    %v4013 = vsel %vm2770, %v3723, 0.0
    %4014 = vadd.xlane.f32.xlu0 %v4013
    %v4015 = vpop.xlane.xlu0 %4014
    %v4016 = vsel %vm2770, %v3724, 0.0
    %4017 = vadd.xlane.f32.xlu0 %v4016
    %v4018 = vpop.xlane.xlu0 %4017
    %v4019 = vsel %vm2770, %v3725, 0.0
    %4020 = vadd.xlane.f32.xlu0 %v4019
    %v4021 = vpop.xlane.xlu0 %4020
    %v4022 = vsel %vm2770, %v3726, 0.0
    %4023 = vadd.xlane.f32.xlu0 %v4022
    %v4024 = vpop.xlane.xlu0 %4023
    %v4025 = vsel %vm2770, %v3727, 0.0
    %4026 = vadd.xlane.f32.xlu0 %v4025
    %v4027 = vpop.xlane.xlu0 %4026
    %v4028 = vsel %vm2770, %v3728, 0.0
    %4029 = vadd.xlane.f32.xlu0 %v4028
    %v4030 = vpop.xlane.xlu0 %4029
    %v4031 = vsel %vm2770, %v3729, 0.0
    %4032 = vadd.xlane.f32.xlu0 %v4031
    %v4033 = vpop.xlane.xlu0 %4032
    %v4034 = vsel %vm2770, %v3730, 0.0
    %4035 = vadd.xlane.f32.xlu0 %v4034
    %v4036 = vpop.xlane.xlu0 %4035
    %v4037 = vsel %vm2770, %v3731, 0.0
    %4038 = vadd.xlane.f32.xlu0 %v4037
    %v4039 = vpop.xlane.xlu0 %4038
    %v4040 = vsel %vm2770, %v3732, 0.0
    %4041 = vadd.xlane.f32.xlu0 %v4040
    %v4042 = vpop.xlane.xlu0 %4041
    %v4043 = vsel %vm2770, %v3733, 0.0
    %4044 = vadd.xlane.f32.xlu0 %v4043
    %v4045 = vpop.xlane.xlu0 %4044
    %v4046 = vsel %vm2770, %v3734, 0.0
    %4047 = vadd.xlane.f32.xlu0 %v4046
    %v4048 = vpop.xlane.xlu0 %4047
    %v4049 = vsel %vm2770, %v3735, 0.0
    %4050 = vadd.xlane.f32.xlu0 %v4049
    %v4051 = vpop.xlane.xlu0 %4050
    %v4052 = vsel %vm2770, %v3736, 0.0
    %4053 = vadd.xlane.f32.xlu0 %v4052
    %v4054 = vpop.xlane.xlu0 %4053
    %v4055 = vsel %vm2770, %v3737, 0.0
    %4056 = vadd.xlane.f32.xlu0 %v4055
    %v4057 = vpop.xlane.xlu0 %4056
    %v4058 = vsel %vm2770, %v3738, 0.0
    %4059 = vadd.xlane.f32.xlu0 %v4058
    %v4060 = vpop.xlane.xlu0 %4059
    %v4061 = vsel %vm2770, %v3739, 0.0
    %4062 = vadd.xlane.f32.xlu0 %v4061
    %v4063 = vpop.xlane.xlu0 %4062
    %v4064 = vsel %vm2770, %v3740, 0.0
    %4065 = vadd.xlane.f32.xlu0 %v4064
    %v4066 = vpop.xlane.xlu0 %4065
    %v4067 = vsel %vm2770, %v3741, 0.0
    %4068 = vadd.xlane.f32.xlu0 %v4067
    %v4069 = vpop.xlane.xlu0 %4068
    %v4070 = vsel %vm2770, %v3742, 0.0
    %4071 = vadd.xlane.f32.xlu0 %v4070
    %v4072 = vpop.xlane.xlu0 %4071
    %v4073 = vsel %vm2770, %v3743, 0.0
    %4074 = vadd.xlane.f32.xlu0 %v4073
    %v4075 = vpop.xlane.xlu0 %4074
    %v4076 = vsel %vm2770, %v3744, 0.0
    %4077 = vadd.xlane.f32.xlu0 %v4076
    %v4078 = vpop.xlane.xlu0 %4077
    %v4079 = vsel %vm2770, %v3745, 0.0
    %4080 = vadd.xlane.f32.xlu0 %v4079
    %v4081 = vpop.xlane.xlu0 %4080
    %v4082 = vsel %vm2770, %v3746, 0.0
    %4083 = vadd.xlane.f32.xlu0 %v4082
    %v4084 = vpop.xlane.xlu0 %4083
    %v4085 = vsel %vm2770, %v3747, 0.0
    %4086 = vadd.xlane.f32.xlu0 %v4085
    %v4087 = vpop.xlane.xlu0 %4086
    %v4088 = vsel %vm2770, %v3748, 0.0
    %4089 = vadd.xlane.f32.xlu0 %v4088
    %v4090 = vpop.xlane.xlu0 %4089
    %v4091 = vsel %vm2770, %v3749, 0.0
    %4092 = vadd.xlane.f32.xlu0 %v4091
    %v4093 = vpop.xlane.xlu0 %4092
    %v4094 = vsel %vm2770, %v3750, 0.0
    %4095 = vadd.xlane.f32.xlu0 %v4094
    %v4096 = vpop.xlane.xlu0 %4095
    %v4097 = vsel %vm2770, %v3751, 0.0
    %4098 = vadd.xlane.f32.xlu0 %v4097
    %v4099 = vpop.xlane.xlu0 %4098
    %v4100 = vsel %vm2770, %v3752, 0.0
    %4101 = vadd.xlane.f32.xlu0 %v4100
    %v4102 = vpop.xlane.xlu0 %4101
    %v4103 = vsel %vm2770, %v3753, 0.0
    %4104 = vadd.xlane.f32.xlu0 %v4103
    %v4105 = vpop.xlane.xlu0 %4104
    %v4106 = vsel %vm2770, %v3754, 0.0
    %4107 = vadd.xlane.f32.xlu0 %v4106
    %v4108 = vpop.xlane.xlu0 %4107
    %v4109 = vsel %vm2770, %v3755, 0.0
    %4110 = vadd.xlane.f32.xlu0 %v4109
    %v4111 = vpop.xlane.xlu0 %4110
    %v4112 = vsel %vm2770, %v3756, 0.0
    %4113 = vadd.xlane.f32.xlu0 %v4112
    %v4114 = vpop.xlane.xlu0 %4113
    %v4115 = vsel %vm2770, %v3757, 0.0
    %4116 = vadd.xlane.f32.xlu0 %v4115
    %v4117 = vpop.xlane.xlu0 %4116
    %v4118 = vsel %vm2770, %v3758, 0.0
    %4119 = vadd.xlane.f32.xlu0 %v4118
    %v4120 = vpop.xlane.xlu0 %4119
    %v4121 = vsel %vm2770, %v3759, 0.0
    %4122 = vadd.xlane.f32.xlu0 %v4121
    %v4123 = vpop.xlane.xlu0 %4122
    %v4124 = vsel %vm2770, %v3760, 0.0
    %4125 = vadd.xlane.f32.xlu0 %v4124
    %v4126 = vpop.xlane.xlu0 %4125
    %v4127 = vsel %vm2770, %v3761, 0.0
    %4128 = vadd.xlane.f32.xlu0 %v4127
    %v4129 = vpop.xlane.xlu0 %4128
    %v4130 = vsel %vm2770, %v3762, 0.0
    %4131 = vadd.xlane.f32.xlu0 %v4130
    %v4132 = vpop.xlane.xlu0 %4131
    %v4133 = vsel %vm2770, %v3763, 0.0
    %4134 = vadd.xlane.f32.xlu0 %v4133
    %v4135 = vpop.xlane.xlu0 %4134
    %v4136 = vsel %vm2770, %v3764, 0.0
    %4137 = vadd.xlane.f32.xlu0 %v4136
    %v4138 = vpop.xlane.xlu0 %4137
    %v4139 = vsel %vm2770, %v3765, 0.0
    %4140 = vadd.xlane.f32.xlu0 %v4139
    %v4141 = vpop.xlane.xlu0 %4140
    %v4142 = vsel %vm2770, %v3766, 0.0
    %4143 = vadd.xlane.f32.xlu0 %v4142
    %v4144 = vpop.xlane.xlu0 %4143
    %v4145 = vsel %vm2770, %v3767, 0.0
    %4146 = vadd.xlane.f32.xlu0 %v4145
    %v4147 = vpop.xlane.xlu0 %4146
    %v4148 = vsel %vm2770, %v3768, 0.0
    %4149 = vadd.xlane.f32.xlu0 %v4148
    %v4150 = vpop.xlane.xlu0 %4149
    %v4151 = vsel %vm2770, %v3769, 0.0
    %4152 = vadd.xlane.f32.xlu0 %v4151
    %v4153 = vpop.xlane.xlu0 %4152
    %v4154 = vld [vmem:[#allocation2] sm:$0x1]
    %s4155 = vtos %v4154
    %v4156 = vstv %s4155
    %v4157 = vadd.f32 %v3772, %v4156
    %v4158 = vadd.f32 %v3775, %v4156
    %v4159 = vadd.f32 %v3778, %v4156
    %v4160 = vadd.f32 %v3781, %v4156
    %v4161 = vadd.f32 %v3784, %v4156
    %v4162 = vadd.f32 %v3787, %v4156
    %v4163 = vadd.f32 %v3790, %v4156
    %v4164 = vadd.f32 %v3793, %v4156
    %v4165 = vadd.f32 %v3796, %v4156
    %v4166 = vadd.f32 %v3799, %v4156
    %v4167 = vadd.f32 %v3802, %v4156
    %v4168 = vadd.f32 %v3805, %v4156
    %v4169 = vadd.f32 %v3808, %v4156
    %v4170 = vadd.f32 %v3811, %v4156
    %v4171 = vadd.f32 %v3814, %v4156
    %v4172 = vadd.f32 %v3817, %v4156
    %v4173 = vadd.f32 %v3820, %v4156
    %v4174 = vadd.f32 %v3823, %v4156
    %v4175 = vadd.f32 %v3826, %v4156
    %v4176 = vadd.f32 %v3829, %v4156
    %v4177 = vadd.f32 %v3832, %v4156
    %v4178 = vadd.f32 %v3835, %v4156
    %v4179 = vadd.f32 %v3838, %v4156
    %v4180 = vadd.f32 %v3841, %v4156
    %v4181 = vadd.f32 %v3844, %v4156
    %v4182 = vadd.f32 %v3847, %v4156
    %v4183 = vadd.f32 %v3850, %v4156
    %v4184 = vadd.f32 %v3853, %v4156
    %v4185 = vadd.f32 %v3856, %v4156
    %v4186 = vadd.f32 %v3859, %v4156
    %v4187 = vadd.f32 %v3862, %v4156
    %v4188 = vadd.f32 %v3865, %v4156
    %v4189 = vadd.f32 %v3868, %v4156
    %v4190 = vadd.f32 %v3871, %v4156
    %v4191 = vadd.f32 %v3874, %v4156
    %v4192 = vadd.f32 %v3877, %v4156
    %v4193 = vadd.f32 %v3880, %v4156
    %v4194 = vadd.f32 %v3883, %v4156
    %v4195 = vadd.f32 %v3886, %v4156
    %v4196 = vadd.f32 %v3889, %v4156
    %v4197 = vadd.f32 %v3892, %v4156
    %v4198 = vadd.f32 %v3895, %v4156
    %v4199 = vadd.f32 %v3898, %v4156
    %v4200 = vadd.f32 %v3901, %v4156
    %v4201 = vadd.f32 %v3904, %v4156
    %v4202 = vadd.f32 %v3907, %v4156
    %v4203 = vadd.f32 %v3910, %v4156
    %v4204 = vadd.f32 %v3913, %v4156
    %v4205 = vadd.f32 %v3916, %v4156
    %v4206 = vadd.f32 %v3919, %v4156
    %v4207 = vadd.f32 %v3922, %v4156
    %v4208 = vadd.f32 %v3925, %v4156
    %v4209 = vadd.f32 %v3928, %v4156
    %v4210 = vadd.f32 %v3931, %v4156
    %v4211 = vadd.f32 %v3934, %v4156
    %v4212 = vadd.f32 %v3937, %v4156
    %v4213 = vadd.f32 %v3940, %v4156
    %v4214 = vadd.f32 %v3943, %v4156
    %v4215 = vadd.f32 %v3946, %v4156
    %v4216 = vadd.f32 %v3949, %v4156
    %v4217 = vadd.f32 %v3952, %v4156
    %v4218 = vadd.f32 %v3955, %v4156
    %v4219 = vadd.f32 %v3958, %v4156
    %v4220 = vadd.f32 %v3961, %v4156
    %v4221 = vadd.f32 %v3964, %v4156
    %v4222 = vadd.f32 %v3967, %v4156
    %v4223 = vadd.f32 %v3970, %v4156
    %v4224 = vadd.f32 %v3973, %v4156
    %v4225 = vadd.f32 %v3976, %v4156
    %v4226 = vadd.f32 %v3979, %v4156
    %v4227 = vadd.f32 %v3982, %v4156
    %v4228 = vadd.f32 %v3985, %v4156
    %v4229 = vadd.f32 %v3988, %v4156
    %v4230 = vadd.f32 %v3991, %v4156
    %v4231 = vadd.f32 %v3994, %v4156
    %v4232 = vadd.f32 %v3997, %v4156
    %v4233 = vadd.f32 %v4000, %v4156
    %v4234 = vadd.f32 %v4003, %v4156
    %v4235 = vadd.f32 %v4006, %v4156
    %v4236 = vadd.f32 %v4009, %v4156
    %v4237 = vadd.f32 %v4012, %v4156
    %v4238 = vadd.f32 %v4015, %v4156
    %v4239 = vadd.f32 %v4018, %v4156
    %v4240 = vadd.f32 %v4021, %v4156
    %v4241 = vadd.f32 %v4024, %v4156
    %v4242 = vadd.f32 %v4027, %v4156
    %v4243 = vadd.f32 %v4030, %v4156
    %v4244 = vadd.f32 %v4033, %v4156
    %v4245 = vadd.f32 %v4036, %v4156
    %v4246 = vadd.f32 %v4039, %v4156
    %v4247 = vadd.f32 %v4042, %v4156
    %v4248 = vadd.f32 %v4045, %v4156
    %v4249 = vadd.f32 %v4048, %v4156
    %v4250 = vadd.f32 %v4051, %v4156
    %v4251 = vadd.f32 %v4054, %v4156
    %v4252 = vadd.f32 %v4057, %v4156
    %v4253 = vadd.f32 %v4060, %v4156
    %v4254 = vadd.f32 %v4063, %v4156
    %v4255 = vadd.f32 %v4066, %v4156
    %v4256 = vadd.f32 %v4069, %v4156
    %v4257 = vadd.f32 %v4072, %v4156
    %v4258 = vadd.f32 %v4075, %v4156
    %v4259 = vadd.f32 %v4078, %v4156
    %v4260 = vadd.f32 %v4081, %v4156
    %v4261 = vadd.f32 %v4084, %v4156
    %v4262 = vadd.f32 %v4087, %v4156
    %v4263 = vadd.f32 %v4090, %v4156
    %v4264 = vadd.f32 %v4093, %v4156
    %v4265 = vadd.f32 %v4096, %v4156
    %v4266 = vadd.f32 %v4099, %v4156
    %v4267 = vadd.f32 %v4102, %v4156
    %v4268 = vadd.f32 %v4105, %v4156
    %v4269 = vadd.f32 %v4108, %v4156
    %v4270 = vadd.f32 %v4111, %v4156
    %v4271 = vadd.f32 %v4114, %v4156
    %v4272 = vadd.f32 %v4117, %v4156
    %v4273 = vadd.f32 %v4120, %v4156
    %v4274 = vadd.f32 %v4123, %v4156
    %v4275 = vadd.f32 %v4126, %v4156
    %v4276 = vadd.f32 %v4129, %v4156
    %v4277 = vadd.f32 %v4132, %v4156
    %v4278 = vadd.f32 %v4135, %v4156
    %v4279 = vadd.f32 %v4138, %v4156
    %v4280 = vadd.f32 %v4141, %v4156
    %v4281 = vadd.f32 %v4144, %v4156
    %v4282 = vadd.f32 %v4147, %v4156
    %v4283 = vadd.f32 %v4150, %v4156
    %v4284 = vadd.f32 %v4153, %v4156
    %v4413 = vlaneseq
    %v4414 = vand.u32 %v4413, 127
    %v4415 = vlaneseq
    %v4416 = vshrl.u32 %v4415, 7
    %v4417 = vsub.s32 %v4414, %v4416
    %v4418 = vrot.slane %v4157, %v4417
    %v4419 = vadd.s32 %v4414, 4294967288
    %v4420 = vlaneseq
    %v4421 = vshrl.u32 %v4420, 7
    %v4422 = vsub.s32 %v4419, %v4421
    %v4423 = vrot.slane %v4158, %v4422
    %vm4424 = vcmask 130112
    %v4425 = vsel %vm4424, %v4423, %v4418
    %v4426 = vadd.s32 %v4414, 4294967280
    %v4427 = vlaneseq
    %v4428 = vshrl.u32 %v4427, 7
    %v4429 = vsub.s32 %v4426, %v4428
    %v4430 = vrot.slane %v4159, %v4429
    %vm4431 = vcmask 195712
    %v4432 = vsel %vm4431, %v4430, %v4425
    %v4433 = vadd.s32 %v4414, 4294967272
    %v4434 = vlaneseq
    %v4435 = vshrl.u32 %v4434, 7
    %v4436 = vsub.s32 %v4433, %v4435
    %v4437 = vrot.slane %v4160, %v4436
    %vm4438 = vcmask 261312
    %v4439 = vsel %vm4438, %v4437, %v4432
    %v4440 = vadd.s32 %v4414, 4294967264
    %v4441 = vlaneseq
    %v4442 = vshrl.u32 %v4441, 7
    %v4443 = vsub.s32 %v4440, %v4442
    %v4444 = vrot.slane %v4161, %v4443
    %vm4445 = vcmask 326912
    %v4446 = vsel %vm4445, %v4444, %v4439
    %v4447 = vadd.s32 %v4414, 4294967256
    %v4448 = vlaneseq
    %v4449 = vshrl.u32 %v4448, 7
    %v4450 = vsub.s32 %v4447, %v4449
    %v4451 = vrot.slane %v4162, %v4450
    %vm4452 = vcmask 392512
    %v4453 = vsel %vm4452, %v4451, %v4446
    %v4454 = vadd.s32 %v4414, 4294967248
    %v4455 = vlaneseq
    %v4456 = vshrl.u32 %v4455, 7
    %v4457 = vsub.s32 %v4454, %v4456
    %v4458 = vrot.slane %v4163, %v4457
    %vm4459 = vcmask 458112
    %v4460 = vsel %vm4459, %v4458, %v4453
    %v4461 = vadd.s32 %v4414, 4294967240
    %v4462 = vlaneseq
    %v4463 = vshrl.u32 %v4462, 7
    %v4464 = vsub.s32 %v4461, %v4463
    %v4465 = vrot.slane %v4164, %v4464
    %vm4466 = vcmask 523712
    %v4467 = vsel %vm4466, %v4465, %v4460
    %v4468 = vadd.s32 %v4414, 4294967232
    %v4469 = vlaneseq
    %v4470 = vshrl.u32 %v4469, 7
    %v4471 = vsub.s32 %v4468, %v4470
    %v4472 = vrot.slane %v4165, %v4471
    %vm4473 = vcmask 589312
    %v4474 = vsel %vm4473, %v4472, %v4467
    %v4475 = vadd.s32 %v4414, 4294967224
    %v4476 = vlaneseq
    %v4477 = vshrl.u32 %v4476, 7
    %v4478 = vsub.s32 %v4475, %v4477
    %v4479 = vrot.slane %v4166, %v4478
    %vm4480 = vcmask 654912
    %v4481 = vsel %vm4480, %v4479, %v4474
    %v4482 = vadd.s32 %v4414, 4294967216
    %v4483 = vlaneseq
    %v4484 = vshrl.u32 %v4483, 7
    %v4485 = vsub.s32 %v4482, %v4484
    %v4486 = vrot.slane %v4167, %v4485
    %vm4487 = vcmask 720512
    %v4488 = vsel %vm4487, %v4486, %v4481
    %v4489 = vadd.s32 %v4414, 4294967208
    %v4490 = vlaneseq
    %v4491 = vshrl.u32 %v4490, 7
    %v4492 = vsub.s32 %v4489, %v4491
    %v4493 = vrot.slane %v4168, %v4492
    %vm4494 = vcmask 786112
    %v4495 = vsel %vm4494, %v4493, %v4488
    %v4496 = vadd.s32 %v4414, 4294967200
    %v4497 = vlaneseq
    %v4498 = vshrl.u32 %v4497, 7
    %v4499 = vsub.s32 %v4496, %v4498
    %v4500 = vrot.slane %v4169, %v4499
    %vm4501 = vcmask 851712
    %v4502 = vsel %vm4501, %v4500, %v4495
    %v4503 = vadd.s32 %v4414, 4294967192
    %v4504 = vlaneseq
    %v4505 = vshrl.u32 %v4504, 7
    %v4506 = vsub.s32 %v4503, %v4505
    %v4507 = vrot.slane %v4170, %v4506
    %vm4508 = vcmask 917312
    %v4509 = vsel %vm4508, %v4507, %v4502
    %v4510 = vadd.s32 %v4414, 4294967184
    %v4511 = vlaneseq
    %v4512 = vshrl.u32 %v4511, 7
    %v4513 = vsub.s32 %v4510, %v4512
    %v4514 = vrot.slane %v4171, %v4513
    %vm4515 = vcmask 982912
    %v4516 = vsel %vm4515, %v4514, %v4509
    %v4517 = vadd.s32 %v4414, 4294967176
    %v4518 = vlaneseq
    %v4519 = vshrl.u32 %v4518, 7
    %v4520 = vsub.s32 %v4517, %v4519
    %v4521 = vrot.slane %v4172, %v4520
    %vm4522 = vcmask 1048512
    %v4523 = vsel %vm4522, %v4521, %v4516
    %v4524 = vlaneseq
    %v4525 = vshrl.u32 %v4524, 7
    %v4526 = vsub.s32 %v4414, %v4525
    %v4527 = vrot.slane %v4173, %v4526
    %v4528 = vlaneseq
    %v4529 = vshrl.u32 %v4528, 7
    %v4530 = vsub.s32 %v4419, %v4529
    %v4531 = vrot.slane %v4174, %v4530
    %v4532 = vsel %vm4424, %v4531, %v4527
    %v4533 = vlaneseq
    %v4534 = vshrl.u32 %v4533, 7
    %v4535 = vsub.s32 %v4426, %v4534
    %v4536 = vrot.slane %v4175, %v4535
    %v4537 = vsel %vm4431, %v4536, %v4532
    %v4538 = vlaneseq
    %v4539 = vshrl.u32 %v4538, 7
    %v4540 = vsub.s32 %v4433, %v4539
    %v4541 = vrot.slane %v4176, %v4540
    %v4542 = vsel %vm4438, %v4541, %v4537
    %v4543 = vlaneseq
    %v4544 = vshrl.u32 %v4543, 7
    %v4545 = vsub.s32 %v4440, %v4544
    %v4546 = vrot.slane %v4177, %v4545
    %v4547 = vsel %vm4445, %v4546, %v4542
    %v4548 = vlaneseq
    %v4549 = vshrl.u32 %v4548, 7
    %v4550 = vsub.s32 %v4447, %v4549
    %v4551 = vrot.slane %v4178, %v4550
    %v4552 = vsel %vm4452, %v4551, %v4547
    %v4553 = vlaneseq
    %v4554 = vshrl.u32 %v4553, 7
    %v4555 = vsub.s32 %v4454, %v4554
    %v4556 = vrot.slane %v4179, %v4555
    %v4557 = vsel %vm4459, %v4556, %v4552
    %v4558 = vlaneseq
    %v4559 = vshrl.u32 %v4558, 7
    %v4560 = vsub.s32 %v4461, %v4559
    %v4561 = vrot.slane %v4180, %v4560
    %v4562 = vsel %vm4466, %v4561, %v4557
    %v4563 = vlaneseq
    %v4564 = vshrl.u32 %v4563, 7
    %v4565 = vsub.s32 %v4468, %v4564
    %v4566 = vrot.slane %v4181, %v4565
    %v4567 = vsel %vm4473, %v4566, %v4562
    %v4568 = vlaneseq
    %v4569 = vshrl.u32 %v4568, 7
    %v4570 = vsub.s32 %v4475, %v4569
    %v4571 = vrot.slane %v4182, %v4570
    %v4572 = vsel %vm4480, %v4571, %v4567
    %v4573 = vlaneseq
    %v4574 = vshrl.u32 %v4573, 7
    %v4575 = vsub.s32 %v4482, %v4574
    %v4576 = vrot.slane %v4183, %v4575
    %v4577 = vsel %vm4487, %v4576, %v4572
    %v4578 = vlaneseq
    %v4579 = vshrl.u32 %v4578, 7
    %v4580 = vsub.s32 %v4489, %v4579
    %v4581 = vrot.slane %v4184, %v4580
    %v4582 = vsel %vm4494, %v4581, %v4577
    %v4583 = vlaneseq
    %v4584 = vshrl.u32 %v4583, 7
    %v4585 = vsub.s32 %v4496, %v4584
    %v4586 = vrot.slane %v4185, %v4585
    %v4587 = vsel %vm4501, %v4586, %v4582
    %v4588 = vlaneseq
    %v4589 = vshrl.u32 %v4588, 7
    %v4590 = vsub.s32 %v4503, %v4589
    %v4591 = vrot.slane %v4186, %v4590
    %v4592 = vsel %vm4508, %v4591, %v4587
    %v4593 = vlaneseq
    %v4594 = vshrl.u32 %v4593, 7
    %v4595 = vsub.s32 %v4510, %v4594
    %v4596 = vrot.slane %v4187, %v4595
    %v4597 = vsel %vm4515, %v4596, %v4592
    %v4598 = vlaneseq
    %v4599 = vshrl.u32 %v4598, 7
    %v4600 = vsub.s32 %v4517, %v4599
    %v4601 = vrot.slane %v4188, %v4600
    %v4602 = vsel %vm4522, %v4601, %v4597
    %v4603 = vlaneseq
    %v4604 = vshrl.u32 %v4603, 7
    %v4605 = vsub.s32 %v4414, %v4604
    %v4606 = vrot.slane %v4189, %v4605
    %v4607 = vlaneseq
    %v4608 = vshrl.u32 %v4607, 7
    %v4609 = vsub.s32 %v4419, %v4608
    %v4610 = vrot.slane %v4190, %v4609
    %v4611 = vsel %vm4424, %v4610, %v4606
    %v4612 = vlaneseq
    %v4613 = vshrl.u32 %v4612, 7
    %v4614 = vsub.s32 %v4426, %v4613
    %v4615 = vrot.slane %v4191, %v4614
    %v4616 = vsel %vm4431, %v4615, %v4611
    %v4617 = vlaneseq
    %v4618 = vshrl.u32 %v4617, 7
    %v4619 = vsub.s32 %v4433, %v4618
    %v4620 = vrot.slane %v4192, %v4619
    %v4621 = vsel %vm4438, %v4620, %v4616
    %v4622 = vlaneseq
    %v4623 = vshrl.u32 %v4622, 7
    %v4624 = vsub.s32 %v4440, %v4623
    %v4625 = vrot.slane %v4193, %v4624
    %v4626 = vsel %vm4445, %v4625, %v4621
    %v4627 = vlaneseq
    %v4628 = vshrl.u32 %v4627, 7
    %v4629 = vsub.s32 %v4447, %v4628
    %v4630 = vrot.slane %v4194, %v4629
    %v4631 = vsel %vm4452, %v4630, %v4626
    %v4632 = vlaneseq
    %v4633 = vshrl.u32 %v4632, 7
    %v4634 = vsub.s32 %v4454, %v4633
    %v4635 = vrot.slane %v4195, %v4634
    %v4636 = vsel %vm4459, %v4635, %v4631
    %v4637 = vlaneseq
    %v4638 = vshrl.u32 %v4637, 7
    %v4639 = vsub.s32 %v4461, %v4638
    %v4640 = vrot.slane %v4196, %v4639
    %v4641 = vsel %vm4466, %v4640, %v4636
    %v4642 = vlaneseq
    %v4643 = vshrl.u32 %v4642, 7
    %v4644 = vsub.s32 %v4468, %v4643
    %v4645 = vrot.slane %v4197, %v4644
    %v4646 = vsel %vm4473, %v4645, %v4641
    %v4647 = vlaneseq
    %v4648 = vshrl.u32 %v4647, 7
    %v4649 = vsub.s32 %v4475, %v4648
    %v4650 = vrot.slane %v4198, %v4649
    %v4651 = vsel %vm4480, %v4650, %v4646
    %v4652 = vlaneseq
    %v4653 = vshrl.u32 %v4652, 7
    %v4654 = vsub.s32 %v4482, %v4653
    %v4655 = vrot.slane %v4199, %v4654
    %v4656 = vsel %vm4487, %v4655, %v4651
    %v4657 = vlaneseq
    %v4658 = vshrl.u32 %v4657, 7
    %v4659 = vsub.s32 %v4489, %v4658
    %v4660 = vrot.slane %v4200, %v4659
    %v4661 = vsel %vm4494, %v4660, %v4656
    %v4662 = vlaneseq
    %v4663 = vshrl.u32 %v4662, 7
    %v4664 = vsub.s32 %v4496, %v4663
    %v4665 = vrot.slane %v4201, %v4664
    %v4666 = vsel %vm4501, %v4665, %v4661
    %v4667 = vlaneseq
    %v4668 = vshrl.u32 %v4667, 7
    %v4669 = vsub.s32 %v4503, %v4668
    %v4670 = vrot.slane %v4202, %v4669
    %v4671 = vsel %vm4508, %v4670, %v4666
    %v4672 = vlaneseq
    %v4673 = vshrl.u32 %v4672, 7
    %v4674 = vsub.s32 %v4510, %v4673
    %v4675 = vrot.slane %v4203, %v4674
    %v4676 = vsel %vm4515, %v4675, %v4671
    %v4677 = vlaneseq
    %v4678 = vshrl.u32 %v4677, 7
    %v4679 = vsub.s32 %v4517, %v4678
    %v4680 = vrot.slane %v4204, %v4679
    %v4681 = vsel %vm4522, %v4680, %v4676
    %v4682 = vlaneseq
    %v4683 = vshrl.u32 %v4682, 7
    %v4684 = vsub.s32 %v4414, %v4683
    %v4685 = vrot.slane %v4205, %v4684
    %v4686 = vlaneseq
    %v4687 = vshrl.u32 %v4686, 7
    %v4688 = vsub.s32 %v4419, %v4687
    %v4689 = vrot.slane %v4206, %v4688
    %v4690 = vsel %vm4424, %v4689, %v4685
    %v4691 = vlaneseq
    %v4692 = vshrl.u32 %v4691, 7
    %v4693 = vsub.s32 %v4426, %v4692
    %v4694 = vrot.slane %v4207, %v4693
    %v4695 = vsel %vm4431, %v4694, %v4690
    %v4696 = vlaneseq
    %v4697 = vshrl.u32 %v4696, 7
    %v4698 = vsub.s32 %v4433, %v4697
    %v4699 = vrot.slane %v4208, %v4698
    %v4700 = vsel %vm4438, %v4699, %v4695
    %v4701 = vlaneseq
    %v4702 = vshrl.u32 %v4701, 7
    %v4703 = vsub.s32 %v4440, %v4702
    %v4704 = vrot.slane %v4209, %v4703
    %v4705 = vsel %vm4445, %v4704, %v4700
    %v4706 = vlaneseq
    %v4707 = vshrl.u32 %v4706, 7
    %v4708 = vsub.s32 %v4447, %v4707
    %v4709 = vrot.slane %v4210, %v4708
    %v4710 = vsel %vm4452, %v4709, %v4705
    %v4711 = vlaneseq
    %v4712 = vshrl.u32 %v4711, 7
    %v4713 = vsub.s32 %v4454, %v4712
    %v4714 = vrot.slane %v4211, %v4713
    %v4715 = vsel %vm4459, %v4714, %v4710
    %v4716 = vlaneseq
    %v4717 = vshrl.u32 %v4716, 7
    %v4718 = vsub.s32 %v4461, %v4717
    %v4719 = vrot.slane %v4212, %v4718
    %v4720 = vsel %vm4466, %v4719, %v4715
    %v4721 = vlaneseq
    %v4722 = vshrl.u32 %v4721, 7
    %v4723 = vsub.s32 %v4468, %v4722
    %v4724 = vrot.slane %v4213, %v4723
    %v4725 = vsel %vm4473, %v4724, %v4720
    %v4726 = vlaneseq
    %v4727 = vshrl.u32 %v4726, 7
    %v4728 = vsub.s32 %v4475, %v4727
    %v4729 = vrot.slane %v4214, %v4728
    %v4730 = vsel %vm4480, %v4729, %v4725
    %v4731 = vlaneseq
    %v4732 = vshrl.u32 %v4731, 7
    %v4733 = vsub.s32 %v4482, %v4732
    %v4734 = vrot.slane %v4215, %v4733
    %v4735 = vsel %vm4487, %v4734, %v4730
    %v4736 = vlaneseq
    %v4737 = vshrl.u32 %v4736, 7
    %v4738 = vsub.s32 %v4489, %v4737
    %v4739 = vrot.slane %v4216, %v4738
    %v4740 = vsel %vm4494, %v4739, %v4735
    %v4741 = vlaneseq
    %v4742 = vshrl.u32 %v4741, 7
    %v4743 = vsub.s32 %v4496, %v4742
    %v4744 = vrot.slane %v4217, %v4743
    %v4745 = vsel %vm4501, %v4744, %v4740
    %v4746 = vlaneseq
    %v4747 = vshrl.u32 %v4746, 7
    %v4748 = vsub.s32 %v4503, %v4747
    %v4749 = vrot.slane %v4218, %v4748
    %v4750 = vsel %vm4508, %v4749, %v4745
    %v4751 = vlaneseq
    %v4752 = vshrl.u32 %v4751, 7
    %v4753 = vsub.s32 %v4510, %v4752
    %v4754 = vrot.slane %v4219, %v4753
    %v4755 = vsel %vm4515, %v4754, %v4750
    %v4756 = vlaneseq
    %v4757 = vshrl.u32 %v4756, 7
    %v4758 = vsub.s32 %v4517, %v4757
    %v4759 = vrot.slane %v4220, %v4758
    %v4760 = vsel %vm4522, %v4759, %v4755
    %v4761 = vlaneseq
    %v4762 = vshrl.u32 %v4761, 7
    %v4763 = vsub.s32 %v4414, %v4762
    %v4764 = vrot.slane %v4221, %v4763
    %v4765 = vlaneseq
    %v4766 = vshrl.u32 %v4765, 7
    %v4767 = vsub.s32 %v4419, %v4766
    %v4768 = vrot.slane %v4222, %v4767
    %v4769 = vsel %vm4424, %v4768, %v4764
    %v4770 = vlaneseq
    %v4771 = vshrl.u32 %v4770, 7
    %v4772 = vsub.s32 %v4426, %v4771
    %v4773 = vrot.slane %v4223, %v4772
    %v4774 = vsel %vm4431, %v4773, %v4769
    %v4775 = vlaneseq
    %v4776 = vshrl.u32 %v4775, 7
    %v4777 = vsub.s32 %v4433, %v4776
    %v4778 = vrot.slane %v4224, %v4777
    %v4779 = vsel %vm4438, %v4778, %v4774
    %v4780 = vlaneseq
    %v4781 = vshrl.u32 %v4780, 7
    %v4782 = vsub.s32 %v4440, %v4781
    %v4783 = vrot.slane %v4225, %v4782
    %v4784 = vsel %vm4445, %v4783, %v4779
    %v4785 = vlaneseq
    %v4786 = vshrl.u32 %v4785, 7
    %v4787 = vsub.s32 %v4447, %v4786
    %v4788 = vrot.slane %v4226, %v4787
    %v4789 = vsel %vm4452, %v4788, %v4784
    %v4790 = vlaneseq
    %v4791 = vshrl.u32 %v4790, 7
    %v4792 = vsub.s32 %v4454, %v4791
    %v4793 = vrot.slane %v4227, %v4792
    %v4794 = vsel %vm4459, %v4793, %v4789
    %v4795 = vlaneseq
    %v4796 = vshrl.u32 %v4795, 7
    %v4797 = vsub.s32 %v4461, %v4796
    %v4798 = vrot.slane %v4228, %v4797
    %v4799 = vsel %vm4466, %v4798, %v4794
    %v4800 = vlaneseq
    %v4801 = vshrl.u32 %v4800, 7
    %v4802 = vsub.s32 %v4468, %v4801
    %v4803 = vrot.slane %v4229, %v4802
    %v4804 = vsel %vm4473, %v4803, %v4799
    %v4805 = vlaneseq
    %v4806 = vshrl.u32 %v4805, 7
    %v4807 = vsub.s32 %v4475, %v4806
    %v4808 = vrot.slane %v4230, %v4807
    %v4809 = vsel %vm4480, %v4808, %v4804
    %v4810 = vlaneseq
    %v4811 = vshrl.u32 %v4810, 7
    %v4812 = vsub.s32 %v4482, %v4811
    %v4813 = vrot.slane %v4231, %v4812
    %v4814 = vsel %vm4487, %v4813, %v4809
    %v4815 = vlaneseq
    %v4816 = vshrl.u32 %v4815, 7
    %v4817 = vsub.s32 %v4489, %v4816
    %v4818 = vrot.slane %v4232, %v4817
    %v4819 = vsel %vm4494, %v4818, %v4814
    %v4820 = vlaneseq
    %v4821 = vshrl.u32 %v4820, 7
    %v4822 = vsub.s32 %v4496, %v4821
    %v4823 = vrot.slane %v4233, %v4822
    %v4824 = vsel %vm4501, %v4823, %v4819
    %v4825 = vlaneseq
    %v4826 = vshrl.u32 %v4825, 7
    %v4827 = vsub.s32 %v4503, %v4826
    %v4828 = vrot.slane %v4234, %v4827
    %v4829 = vsel %vm4508, %v4828, %v4824
    %v4830 = vlaneseq
    %v4831 = vshrl.u32 %v4830, 7
    %v4832 = vsub.s32 %v4510, %v4831
    %v4833 = vrot.slane %v4235, %v4832
    %v4834 = vsel %vm4515, %v4833, %v4829
    %v4835 = vlaneseq
    %v4836 = vshrl.u32 %v4835, 7
    %v4837 = vsub.s32 %v4517, %v4836
    %v4838 = vrot.slane %v4236, %v4837
    %v4839 = vsel %vm4522, %v4838, %v4834
    %v4840 = vlaneseq
    %v4841 = vshrl.u32 %v4840, 7
    %v4842 = vsub.s32 %v4414, %v4841
    %v4843 = vrot.slane %v4237, %v4842
    %v4844 = vlaneseq
    %v4845 = vshrl.u32 %v4844, 7
    %v4846 = vsub.s32 %v4419, %v4845
    %v4847 = vrot.slane %v4238, %v4846
    %v4848 = vsel %vm4424, %v4847, %v4843
    %v4849 = vlaneseq
    %v4850 = vshrl.u32 %v4849, 7
    %v4851 = vsub.s32 %v4426, %v4850
    %v4852 = vrot.slane %v4239, %v4851
    %v4853 = vsel %vm4431, %v4852, %v4848
    %v4854 = vlaneseq
    %v4855 = vshrl.u32 %v4854, 7
    %v4856 = vsub.s32 %v4433, %v4855
    %v4857 = vrot.slane %v4240, %v4856
    %v4858 = vsel %vm4438, %v4857, %v4853
    %v4859 = vlaneseq
    %v4860 = vshrl.u32 %v4859, 7
    %v4861 = vsub.s32 %v4440, %v4860
    %v4862 = vrot.slane %v4241, %v4861
    %v4863 = vsel %vm4445, %v4862, %v4858
    %v4864 = vlaneseq
    %v4865 = vshrl.u32 %v4864, 7
    %v4866 = vsub.s32 %v4447, %v4865
    %v4867 = vrot.slane %v4242, %v4866
    %v4868 = vsel %vm4452, %v4867, %v4863
    %v4869 = vlaneseq
    %v4870 = vshrl.u32 %v4869, 7
    %v4871 = vsub.s32 %v4454, %v4870
    %v4872 = vrot.slane %v4243, %v4871
    %v4873 = vsel %vm4459, %v4872, %v4868
    %v4874 = vlaneseq
    %v4875 = vshrl.u32 %v4874, 7
    %v4876 = vsub.s32 %v4461, %v4875
    %v4877 = vrot.slane %v4244, %v4876
    %v4878 = vsel %vm4466, %v4877, %v4873
    %v4879 = vlaneseq
    %v4880 = vshrl.u32 %v4879, 7
    %v4881 = vsub.s32 %v4468, %v4880
    %v4882 = vrot.slane %v4245, %v4881
    %v4883 = vsel %vm4473, %v4882, %v4878
    %v4884 = vlaneseq
    %v4885 = vshrl.u32 %v4884, 7
    %v4886 = vsub.s32 %v4475, %v4885
    %v4887 = vrot.slane %v4246, %v4886
    %v4888 = vsel %vm4480, %v4887, %v4883
    %v4889 = vlaneseq
    %v4890 = vshrl.u32 %v4889, 7
    %v4891 = vsub.s32 %v4482, %v4890
    %v4892 = vrot.slane %v4247, %v4891
    %v4893 = vsel %vm4487, %v4892, %v4888
    %v4894 = vlaneseq
    %v4895 = vshrl.u32 %v4894, 7
    %v4896 = vsub.s32 %v4489, %v4895
    %v4897 = vrot.slane %v4248, %v4896
    %v4898 = vsel %vm4494, %v4897, %v4893
    %v4899 = vlaneseq
    %v4900 = vshrl.u32 %v4899, 7
    %v4901 = vsub.s32 %v4496, %v4900
    %v4902 = vrot.slane %v4249, %v4901
    %v4903 = vsel %vm4501, %v4902, %v4898
    %v4904 = vlaneseq
    %v4905 = vshrl.u32 %v4904, 7
    %v4906 = vsub.s32 %v4503, %v4905
    %v4907 = vrot.slane %v4250, %v4906
    %v4908 = vsel %vm4508, %v4907, %v4903
    %v4909 = vlaneseq
    %v4910 = vshrl.u32 %v4909, 7
    %v4911 = vsub.s32 %v4510, %v4910
    %v4912 = vrot.slane %v4251, %v4911
    %v4913 = vsel %vm4515, %v4912, %v4908
    %v4914 = vlaneseq
    %v4915 = vshrl.u32 %v4914, 7
    %v4916 = vsub.s32 %v4517, %v4915
    %v4917 = vrot.slane %v4252, %v4916
    %v4918 = vsel %vm4522, %v4917, %v4913
    %v4919 = vlaneseq
    %v4920 = vshrl.u32 %v4919, 7
    %v4921 = vsub.s32 %v4414, %v4920
    %v4922 = vrot.slane %v4253, %v4921
    %v4923 = vlaneseq
    %v4924 = vshrl.u32 %v4923, 7
    %v4925 = vsub.s32 %v4419, %v4924
    %v4926 = vrot.slane %v4254, %v4925
    %v4927 = vsel %vm4424, %v4926, %v4922
    %v4928 = vlaneseq
    %v4929 = vshrl.u32 %v4928, 7
    %v4930 = vsub.s32 %v4426, %v4929
    %v4931 = vrot.slane %v4255, %v4930
    %v4932 = vsel %vm4431, %v4931, %v4927
    %v4933 = vlaneseq
    %v4934 = vshrl.u32 %v4933, 7
    %v4935 = vsub.s32 %v4433, %v4934
    %v4936 = vrot.slane %v4256, %v4935
    %v4937 = vsel %vm4438, %v4936, %v4932
    %v4938 = vlaneseq
    %v4939 = vshrl.u32 %v4938, 7
    %v4940 = vsub.s32 %v4440, %v4939
    %v4941 = vrot.slane %v4257, %v4940
    %v4942 = vsel %vm4445, %v4941, %v4937
    %v4943 = vlaneseq
    %v4944 = vshrl.u32 %v4943, 7
    %v4945 = vsub.s32 %v4447, %v4944
    %v4946 = vrot.slane %v4258, %v4945
    %v4947 = vsel %vm4452, %v4946, %v4942
    %v4948 = vlaneseq
    %v4949 = vshrl.u32 %v4948, 7
    %v4950 = vsub.s32 %v4454, %v4949
    %v4951 = vrot.slane %v4259, %v4950
    %v4952 = vsel %vm4459, %v4951, %v4947
    %v4953 = vlaneseq
    %v4954 = vshrl.u32 %v4953, 7
    %v4955 = vsub.s32 %v4461, %v4954
    %v4956 = vrot.slane %v4260, %v4955
    %v4957 = vsel %vm4466, %v4956, %v4952
    %v4958 = vlaneseq
    %v4959 = vshrl.u32 %v4958, 7
    %v4960 = vsub.s32 %v4468, %v4959
    %v4961 = vrot.slane %v4261, %v4960
    %v4962 = vsel %vm4473, %v4961, %v4957
    %v4963 = vlaneseq
    %v4964 = vshrl.u32 %v4963, 7
    %v4965 = vsub.s32 %v4475, %v4964
    %v4966 = vrot.slane %v4262, %v4965
    %v4967 = vsel %vm4480, %v4966, %v4962
    %v4968 = vlaneseq
    %v4969 = vshrl.u32 %v4968, 7
    %v4970 = vsub.s32 %v4482, %v4969
    %v4971 = vrot.slane %v4263, %v4970
    %v4972 = vsel %vm4487, %v4971, %v4967
    %v4973 = vlaneseq
    %v4974 = vshrl.u32 %v4973, 7
    %v4975 = vsub.s32 %v4489, %v4974
    %v4976 = vrot.slane %v4264, %v4975
    %v4977 = vsel %vm4494, %v4976, %v4972
    %v4978 = vlaneseq
    %v4979 = vshrl.u32 %v4978, 7
    %v4980 = vsub.s32 %v4496, %v4979
    %v4981 = vrot.slane %v4265, %v4980
    %v4982 = vsel %vm4501, %v4981, %v4977
    %v4983 = vlaneseq
    %v4984 = vshrl.u32 %v4983, 7
    %v4985 = vsub.s32 %v4503, %v4984
    %v4986 = vrot.slane %v4266, %v4985
    %v4987 = vsel %vm4508, %v4986, %v4982
    %v4988 = vlaneseq
    %v4989 = vshrl.u32 %v4988, 7
    %v4990 = vsub.s32 %v4510, %v4989
    %v4991 = vrot.slane %v4267, %v4990
    %v4992 = vsel %vm4515, %v4991, %v4987
    %v4993 = vlaneseq
    %v4994 = vshrl.u32 %v4993, 7
    %v4995 = vsub.s32 %v4517, %v4994
    %v4996 = vrot.slane %v4268, %v4995
    %v4997 = vsel %vm4522, %v4996, %v4992
    %v4998 = vlaneseq
    %v4999 = vshrl.u32 %v4998, 7
    %v5000 = vsub.s32 %v4414, %v4999
    %v5001 = vrot.slane %v4269, %v5000
    %v5002 = vlaneseq
    %v5003 = vshrl.u32 %v5002, 7
    %v5004 = vsub.s32 %v4419, %v5003
    %v5005 = vrot.slane %v4270, %v5004
    %v5006 = vsel %vm4424, %v5005, %v5001
    %v5007 = vlaneseq
    %v5008 = vshrl.u32 %v5007, 7
    %v5009 = vsub.s32 %v4426, %v5008
    %v5010 = vrot.slane %v4271, %v5009
    %v5011 = vsel %vm4431, %v5010, %v5006
    %v5012 = vlaneseq
    %v5013 = vshrl.u32 %v5012, 7
    %v5014 = vsub.s32 %v4433, %v5013
    %v5015 = vrot.slane %v4272, %v5014
    %v5016 = vsel %vm4438, %v5015, %v5011
    %v5017 = vlaneseq
    %v5018 = vshrl.u32 %v5017, 7
    %v5019 = vsub.s32 %v4440, %v5018
    %v5020 = vrot.slane %v4273, %v5019
    %v5021 = vsel %vm4445, %v5020, %v5016
    %v5022 = vlaneseq
    %v5023 = vshrl.u32 %v5022, 7
    %v5024 = vsub.s32 %v4447, %v5023
    %v5025 = vrot.slane %v4274, %v5024
    %v5026 = vsel %vm4452, %v5025, %v5021
    %v5027 = vlaneseq
    %v5028 = vshrl.u32 %v5027, 7
    %v5029 = vsub.s32 %v4454, %v5028
    %v5030 = vrot.slane %v4275, %v5029
    %v5031 = vsel %vm4459, %v5030, %v5026
    %v5032 = vlaneseq
    %v5033 = vshrl.u32 %v5032, 7
    %v5034 = vsub.s32 %v4461, %v5033
    %v5035 = vrot.slane %v4276, %v5034
    %v5036 = vsel %vm4466, %v5035, %v5031
    %v5037 = vlaneseq
    %v5038 = vshrl.u32 %v5037, 7
    %v5039 = vsub.s32 %v4468, %v5038
    %v5040 = vrot.slane %v4277, %v5039
    %v5041 = vsel %vm4473, %v5040, %v5036
    %v5042 = vlaneseq
    %v5043 = vshrl.u32 %v5042, 7
    %v5044 = vsub.s32 %v4475, %v5043
    %v5045 = vrot.slane %v4278, %v5044
    %v5046 = vsel %vm4480, %v5045, %v5041
    %v5047 = vlaneseq
    %v5048 = vshrl.u32 %v5047, 7
    %v5049 = vsub.s32 %v4482, %v5048
    %v5050 = vrot.slane %v4279, %v5049
    %v5051 = vsel %vm4487, %v5050, %v5046
    %v5052 = vlaneseq
    %v5053 = vshrl.u32 %v5052, 7
    %v5054 = vsub.s32 %v4489, %v5053
    %v5055 = vrot.slane %v4280, %v5054
    %v5056 = vsel %vm4494, %v5055, %v5051
    %v5057 = vlaneseq
    %v5058 = vshrl.u32 %v5057, 7
    %v5059 = vsub.s32 %v4496, %v5058
    %v5060 = vrot.slane %v4281, %v5059
    %v5061 = vsel %vm4501, %v5060, %v5056
    %v5062 = vlaneseq
    %v5063 = vshrl.u32 %v5062, 7
    %v5064 = vsub.s32 %v4503, %v5063
    %v5065 = vrot.slane %v4282, %v5064
    %v5066 = vsel %vm4508, %v5065, %v5061
    %v5067 = vlaneseq
    %v5068 = vshrl.u32 %v5067, 7
    %v5069 = vsub.s32 %v4510, %v5068
    %v5070 = vrot.slane %v4283, %v5069
    %v5071 = vsel %vm4515, %v5070, %v5066
    %v5072 = vlaneseq
    %v5073 = vshrl.u32 %v5072, 7
    %v5074 = vsub.s32 %v4517, %v5073
    %v5075 = vrot.slane %v4284, %v5074
    %v5076 = vsel %vm4522, %v5075, %v5071
    %vm5077 = vcmask 1041409
    %v5078 = vsel %vm5077, %v4602, %v4523
    %vm5079 = vcmask 1042434
    %v5080 = vsel %vm5079, %v4681, %v5078
    %vm5081 = vcmask 1043459
    %v5082 = vsel %vm5081, %v4760, %v5080
    %vm5083 = vcmask 1044484
    %v5084 = vsel %vm5083, %v4839, %v5082
    %vm5085 = vcmask 1045509
    %v5086 = vsel %vm5085, %v4918, %v5084
    %vm5087 = vcmask 1046534
    %v5088 = vsel %vm5087, %v4997, %v5086
    %vm5089 = vcmask 1047559
    %v5090 = vsel %vm5089, %v5076, %v5088
    %5092 = vst [vmem:[#allocation3] sm:$0xff] %v5090
    // Predicated region
    $region38: #{tpu_custom_call.1} parent=1 // pred_check
      _
    $region39: #{tpu_custom_call.1} parent=1 // pred_check_branch
      %5094 = sbr.rel (0) target = $region41
    $region40: #{tpu_custom_call.1} parent=1 // pred_region
      %s5096 = ssub.s32 128, 128
      %5097 = vsyncadd [#allocation4], %s5096
      %s5099 = sshll.u32 [#allocation3], 4
      %s5100 = int_to_ptr.vmem [resolvable:$true] %s5099
      %5102 = dma.vmem_to_hbm [thread:$0]  %s5100, 128, %s9, [#allocation4]
    $region41: #{tpu_custom_call.1} parent=1 // pred_fallthru
      _
    // Predicated region
    $region42: #{tpu_custom_call.1} parent=1 // pred_check
      _
    $region43: #{tpu_custom_call.1} parent=1 // pred_check_branch
      %5104 = sbr.rel (0) target = $region45
    $region44: #{tpu_custom_call.1} parent=1 // pred_region
      %5105 = dma.done [#allocation4], 128
    $region45: #{tpu_custom_call.1} parent=1 // pred_fallthru
      _
    %5106 = vsyncpa [#allocation4], 1

</llo_original>
